<compile_context>
chip_gen: v6e
topology: v6e:2x2x1
jax: 0.10.0
libtpu: 0.0.40
codegen_flags: <defaults>
</compile_context>

<pallas_src>
import functools

import jax
import jax.numpy as jnp
from jax.experimental import pallas as pl
from jax.experimental.pallas import tpu as pltpu


def _round_up(a, m):
    return -(-a // m) * m


def _recon_kernel(lo_ref, x_ref,
                  w1_ref, b1_ref, w2_ref, b2_ref, w3_ref, b3_ref,
                  out_ref, *, n_dim):
    tb, feat = x_ref.shape                    # (TILE_B, n_classes * n_dim)

    x = x_ref[...]                            # (TB, F) f32
    lo = lo_ref[...]                          # (TB, 1) int32 = target * n_dim

    # one-hot-over-classes mask broadcast across n_dim, built with two
    # comparisons on the flat feature index (no vector integer division).
    f_idx = jax.lax.broadcasted_iota(jnp.int32, (tb, feat), dimension=1)
    keep = jnp.logical_and(f_idx >= lo, f_idx < lo + n_dim)
    h = jnp.where(keep, x, 0.0)

    # fc1 + ReLU   (bf16 operands, f32 accumulate, f32 bias)
    h = jnp.dot(h.astype(jnp.bfloat16), w1_ref[...],
                preferred_element_type=jnp.float32) + b1_ref[...]
    h = jnp.maximum(h, 0.0)
    # fc2 + ReLU
    h = jnp.dot(h.astype(jnp.bfloat16), w2_ref[...],
                preferred_element_type=jnp.float32) + b2_ref[...]
    h = jnp.maximum(h, 0.0)
    # fc3 + sigmoid
    h = jnp.dot(h.astype(jnp.bfloat16), w3_ref[...],
                preferred_element_type=jnp.float32) + b3_ref[...]
    out_ref[...] = jax.nn.sigmoid(h).astype(out_ref.dtype)


def reconstruction_net(x, target, params, *, n_dim, n_classes, tile_b=None):
    """x: (B, n_classes, n_dim) f32, target: (B,) int class indices."""
    B = x.shape[0]
    feat = n_dim * n_classes

    w1, b1, w2, b2, w3, b3 = params
    out_dim = w3.shape[1]
    hid1 = w1.shape[1]
    hid2 = w2.shape[1]

    # Batch tile: MXU-friendly 256 rows for large batches, otherwise round the
    # whole (small) batch up to a sublane multiple and do a single tile.
    if tile_b is None:
        tile_b = 256 if B >= 256 else max(8, _round_up(B, 8))
    b_pad = _round_up(B, tile_b)

    x_flat = x.reshape(B, feat)                       # same as torch .view
    tgt = target.reshape(B).astype(jnp.int32)
    if b_pad != B:
        x_flat = jnp.pad(x_flat, ((0, b_pad - B), (0, 0)))
        tgt = jnp.pad(tgt, (0, b_pad - B))
    lo = (tgt * n_dim).reshape(b_pad, 1)              # (B_pad, 1) int32

    # bf16 weights (halve HBM traffic / VMEM); biases stay f32.
    w1b = w1.astype(jnp.bfloat16)
    w2b = w2.astype(jnp.bfloat16)
    w3b = w3.astype(jnp.bfloat16)

    grid = (b_pad // tile_b,)
    batch_map = lambda i: (i, 0)
    const_map = lambda i: (0, 0)   # weights/biases stay resident in VMEM

    kernel = functools.partial(_recon_kernel, n_dim=n_dim)
    out = pl.pallas_call(
        kernel,
        out_shape=jax.ShapeDtypeStruct((b_pad, out_dim), jnp.float32),
        grid=grid,
        in_specs=[
            pl.BlockSpec((tile_b, 1), batch_map),        # lo (per-row start)
            pl.BlockSpec((tile_b, feat), batch_map),     # x tile
            pl.BlockSpec((feat, hid1), const_map),       # w1 (bf16)
            pl.BlockSpec((1, hid1), const_map),          # b1
            pl.BlockSpec((hid1, hid2), const_map),       # w2 (bf16)
            pl.BlockSpec((1, hid2), const_map),          # b2
            pl.BlockSpec((hid2, out_dim), const_map),    # w3 (bf16)
            pl.BlockSpec((1, out_dim), const_map),       # b3
        ],
        out_specs=pl.BlockSpec((tile_b, out_dim), batch_map),
        compiler_params=pltpu.CompilerParams(
            dimension_semantics=("parallel",),
            vmem_limit_bytes=32 * 1024 * 1024,
        ),
    )(lo, x_flat, w1b, b1, w2b, b2, w3b, b3)

    return out[:B]


def init_params(key, n_dim=16, n_classes=10, out_dim=784):
    """Deterministic init, PyTorch Linear-style uniform(-1/sqrt(in), 1/sqrt(in)).
    Weights stored as (in_features, out_features)."""
    sizes = [(n_dim * n_classes, 512), (512, 1024), (1024, out_dim)]
    params = []
    for (fin, fout) in sizes:
        key, kw, kb = jax.random.split(key, 3)
        bound = 1.0 / (fin ** 0.5)
        w = jax.random.uniform(kw, (fin, fout), jnp.float32, -bound, bound)
        b = jax.random.uniform(kb, (1, fout), jnp.float32, -bound, bound)
        params += [w, b]
    return tuple(params)


def reference(x, target, params, *, n_dim, n_classes):
    """Plain-JAX f32 reference mirroring the PyTorch module."""
    w1, b1, w2, b2, w3, b3 = params
    mask = jax.nn.one_hot(target, n_classes, dtype=x.dtype)[:, :, None]
    h = (x * mask).reshape(x.shape[0], n_dim * n_classes)
    h = jax.nn.relu(h @ w1 + b1)
    h = jax.nn.relu(h @ w2 + b2)
    return jax.nn.sigmoid(h @ w3 + b3)


if __name__ == "__main__":
    n_dim, n_classes, out_dim = 16, 10, 784
    B = 8

    key = jax.random.PRNGKey(0)
    kx, kt, kp = jax.random.split(key, 3)

    x = jax.random.normal(kx, (B, n_classes, n_dim), jnp.float32)
    target = jax.random.randint(kt, (B,), 0, n_classes, jnp.int32)
    params = init_params(kp, n_dim=n_dim, n_classes=n_classes, out_dim=out_dim)

    out = reconstruction_net(x, target, params, n_dim=n_dim, n_classes=n_classes)
    out = jax.block_until_ready(out)

    ref = reference(x, target, params, n_dim=n_dim, n_classes=n_classes)
    assert out.shape == (B, out_dim)
    # Tolerance loosened vs the pure-f32 reference because the kernel runs the
    # matmuls in bf16 (with f32 accumulation), as requested by the perf review.
    assert jnp.allclose(out, ref, atol=2e-2, rtol=2e-2), float(
        jnp.max(jnp.abs(out - ref)))

    print("KERNEL_OK")
</pallas_src>

<mosaic_0001>
module attributes {stable_mosaic.version = 11 : i64} {
  func.func @_recon_kernel(%arg0: i32, %arg1: memref<8x1xi32, #tpu.memory_space<vmem>>, %arg2: memref<8x160xf32, #tpu.memory_space<vmem>>, %arg3: memref<160x512xbf16, #tpu.memory_space<vmem>>, %arg4: memref<1x512xf32, #tpu.memory_space<vmem>>, %arg5: memref<512x1024xbf16, #tpu.memory_space<vmem>>, %arg6: memref<1x1024xf32, #tpu.memory_space<vmem>>, %arg7: memref<1024x784xbf16, #tpu.memory_space<vmem>>, %arg8: memref<1x784xf32, #tpu.memory_space<vmem>>, %arg9: memref<8x784xf32, #tpu.memory_space<vmem>>) attributes {dimension_semantics = [#tpu.dimension_semantics<parallel>], iteration_bounds = array<i64: 1>, scalar_prefetch = 0 : i64, scratch_operands = 0 : i64, tpu.core_type = #tpu.core_type<tc>, window_params = [{transform_indices = @transform_0, window_bounds = array<i64: 8, 1>}, {transform_indices = @transform_1, window_bounds = array<i64: 8, 160>}, {pipeline_mode = #tpu.pipeline_mode<synchronous>, transform_indices = @transform_2, window_bounds = array<i64: 160, 512>}, {pipeline_mode = #tpu.pipeline_mode<synchronous>, transform_indices = @transform_3, window_bounds = array<i64: 1, 512>}, {pipeline_mode = #tpu.pipeline_mode<synchronous>, transform_indices = @transform_4, window_bounds = array<i64: 512, 1024>}, {pipeline_mode = #tpu.pipeline_mode<synchronous>, transform_indices = @transform_5, window_bounds = array<i64: 1, 1024>}, {pipeline_mode = #tpu.pipeline_mode<synchronous>, transform_indices = @transform_6, window_bounds = array<i64: 1024, 784>}, {pipeline_mode = #tpu.pipeline_mode<synchronous>, transform_indices = @transform_7, window_bounds = array<i64: 1, 784>}, {transform_indices = @transform_8, window_bounds = array<i64: 8, 784>}]} {
    %c0 = arith.constant 0 : index
    %c0_0 = arith.constant 0 : index
    %0 = vector.load %arg2[%c0, %c0_0] : memref<8x160xf32, #tpu.memory_space<vmem>>, vector<8x160xf32>
    %c0_1 = arith.constant 0 : index
    %c0_2 = arith.constant 0 : index
    %1 = vector.load %arg1[%c0_1, %c0_2] : memref<8x1xi32, #tpu.memory_space<vmem>>, vector<8x1xi32>
    %2 = tpu.iota {dimensions = array<i32: 1>} : vector<8x160xi32>
    %3 = vector.broadcast %1 : vector<8x1xi32> to vector<8x160xi32>
    %4 = arith.cmpi sge, %2, %3 : vector<8x160xi32>
    %c16_i32 = arith.constant 16 : i32
    %5 = vector.broadcast %c16_i32 : i32 to vector<8x1xi32>
    %6 = arith.addi %1, %5 : vector<8x1xi32>
    %7 = vector.broadcast %6 : vector<8x1xi32> to vector<8x160xi32>
    %8 = arith.cmpi slt, %2, %7 : vector<8x160xi32>
    %9 = arith.andi %4, %8 : vector<8x160xi1>
    %cst = arith.constant 0.000000e+00 : f32
    %10 = vector.broadcast %cst : f32 to vector<8x160xf32>
    %11 = arith.select %9, %0, %10 : vector<8x160xi1>, vector<8x160xf32>
    %12 = arith.truncf %11 : vector<8x160xf32> to vector<8x160xbf16>
    %c0_3 = arith.constant 0 : index
    %c0_4 = arith.constant 0 : index
    %13 = vector.load %arg3[%c0_3, %c0_4] : memref<160x512xbf16, #tpu.memory_space<vmem>>, vector<160x512xbf16>
    %cst_5 = arith.constant dense<0.000000e+00> : vector<8x512xf32>
    %14 = tpu.matmul %12, %13, %cst_5 {dimension_numbers = #tpu.dot_dimension_numbers<[1], [0], [0], [1], [0, 0, 1, 1], [], []>} : vector<8x160xbf16>, vector<160x512xbf16>, vector<8x512xf32> -> vector<8x512xf32>
    %c0_6 = arith.constant 0 : index
    %c0_7 = arith.constant 0 : index
    %15 = vector.load %arg4[%c0_6, %c0_7] : memref<1x512xf32, #tpu.memory_space<vmem>>, vector<1x512xf32>
    %16 = vector.broadcast %15 : vector<1x512xf32> to vector<8x512xf32>
    %17 = arith.addf %14, %16 : vector<8x512xf32>
    %cst_8 = arith.constant 0.000000e+00 : f32
    %18 = vector.broadcast %cst_8 : f32 to vector<8x512xf32>
    %19 = arith.maximumf %17, %18 : vector<8x512xf32>
    %20 = arith.truncf %19 : vector<8x512xf32> to vector<8x512xbf16>
    %c0_9 = arith.constant 0 : index
    %c0_10 = arith.constant 0 : index
    %21 = vector.load %arg5[%c0_9, %c0_10] : memref<512x1024xbf16, #tpu.memory_space<vmem>>, vector<512x1024xbf16>
    %cst_11 = arith.constant dense<0.000000e+00> : vector<8x1024xf32>
    %22 = tpu.matmul %20, %21, %cst_11 {dimension_numbers = #tpu.dot_dimension_numbers<[1], [0], [0], [1], [0, 0, 1, 1], [], []>} : vector<8x512xbf16>, vector<512x1024xbf16>, vector<8x1024xf32> -> vector<8x1024xf32>
    %c0_12 = arith.constant 0 : index
    %c0_13 = arith.constant 0 : index
    %23 = vector.load %arg6[%c0_12, %c0_13] : memref<1x1024xf32, #tpu.memory_space<vmem>>, vector<1x1024xf32>
    %24 = vector.broadcast %23 : vector<1x1024xf32> to vector<8x1024xf32>
    %25 = arith.addf %22, %24 : vector<8x1024xf32>
    %cst_14 = arith.constant 0.000000e+00 : f32
    %26 = vector.broadcast %cst_14 : f32 to vector<8x1024xf32>
    %27 = arith.maximumf %25, %26 : vector<8x1024xf32>
    %28 = arith.truncf %27 : vector<8x1024xf32> to vector<8x1024xbf16>
    %c0_15 = arith.constant 0 : index
    %c0_16 = arith.constant 0 : index
    %29 = vector.load %arg7[%c0_15, %c0_16] : memref<1024x784xbf16, #tpu.memory_space<vmem>>, vector<1024x784xbf16>
    %cst_17 = arith.constant dense<0.000000e+00> : vector<8x784xf32>
    %30 = tpu.matmul %28, %29, %cst_17 {dimension_numbers = #tpu.dot_dimension_numbers<[1], [0], [0], [1], [0, 0, 1, 1], [], []>} : vector<8x1024xbf16>, vector<1024x784xbf16>, vector<8x784xf32> -> vector<8x784xf32>
    %c0_18 = arith.constant 0 : index
    %c0_19 = arith.constant 0 : index
    %31 = vector.load %arg8[%c0_18, %c0_19] : memref<1x784xf32, #tpu.memory_space<vmem>>, vector<1x784xf32>
    %32 = vector.broadcast %31 : vector<1x784xf32> to vector<8x784xf32>
    %33 = arith.addf %30, %32 : vector<8x784xf32>
    %34 = arith.negf %33 : vector<8x784xf32>
    %35 = math.exp %34 : vector<8x784xf32>
    %cst_20 = arith.constant 1.000000e+00 : f32
    %36 = vector.broadcast %cst_20 : f32 to vector<8x784xf32>
    %37 = arith.addf %36, %35 : vector<8x784xf32>
    %38 = arith.divf %36, %37 : vector<8x784xf32>
    %c0_21 = arith.constant 0 : index
    %c0_22 = arith.constant 0 : index
    %39 = vector.load %arg9[%c0_21, %c0_22] : memref<8x784xf32, #tpu.memory_space<vmem>>, vector<8x784xf32>
    tpu.vector_store %arg9[%c0_21, %c0_22], %38 {strides = array<i32>} : memref<8x784xf32, #tpu.memory_space<vmem>>, vector<8x784xf32>,
    return
  }
  func.func @transform_0(%arg0: i32) -> (i32, i32) {
    %c0_i32 = arith.constant 0 : i32
    %c0_i32_0 = arith.constant 0 : i32
    return %arg0, %c0_i32 : i32, i32
  }
  func.func @transform_1(%arg0: i32) -> (i32, i32) {
    %c0_i32 = arith.constant 0 : i32
    %c0_i32_0 = arith.constant 0 : i32
    return %arg0, %c0_i32 : i32, i32
  }
  func.func @transform_2(%arg0: i32) -> (i32, i32) {
    %c0_i32 = arith.constant 0 : i32
    %c0_i32_0 = arith.constant 0 : i32
    %c0_i32_1 = arith.constant 0 : i32
    return %c0_i32, %c0_i32_0 : i32, i32
  }
  func.func @transform_3(%arg0: i32) -> (i32, i32) {
    %c0_i32 = arith.constant 0 : i32
    %c0_i32_0 = arith.constant 0 : i32
    %c0_i32_1 = arith.constant 0 : i32
    return %c0_i32, %c0_i32_0 : i32, i32
  }
  func.func @transform_4(%arg0: i32) -> (i32, i32) {
    %c0_i32 = arith.constant 0 : i32
    %c0_i32_0 = arith.constant 0 : i32
    %c0_i32_1 = arith.constant 0 : i32
    return %c0_i32, %c0_i32_0 : i32, i32
  }
  func.func @transform_5(%arg0: i32) -> (i32, i32) {
    %c0_i32 = arith.constant 0 : i32
    %c0_i32_0 = arith.constant 0 : i32
    %c0_i32_1 = arith.constant 0 : i32
    return %c0_i32, %c0_i32_0 : i32, i32
  }
  func.func @transform_6(%arg0: i32) -> (i32, i32) {
    %c0_i32 = arith.constant 0 : i32
    %c0_i32_0 = arith.constant 0 : i32
    %c0_i32_1 = arith.constant 0 : i32
    return %c0_i32, %c0_i32_0 : i32, i32
  }
  func.func @transform_7(%arg0: i32) -> (i32, i32) {
    %c0_i32 = arith.constant 0 : i32
    %c0_i32_0 = arith.constant 0 : i32
    %c0_i32_1 = arith.constant 0 : i32
    return %c0_i32, %c0_i32_0 : i32, i32
  }
  func.func @transform_8(%arg0: i32) -> (i32, i32) {
    %c0_i32 = arith.constant 0 : i32
    %c0_i32_0 = arith.constant 0 : i32
    return %arg0, %c0_i32 : i32, i32
  }
}

</mosaic_0001>

<llo_original>
// kernel: tpu_custom_call.1
$region0: #{tpu_custom_call.1}
  #allocation0 [shape = 'u32[]', space=smem, size = 0x4, offset = 0x4, fixed_abs, tag = 'smem constant byte address 0x4 - core index']
  #allocation1 [shape = 'u32[144,128]{1,0:T(1,128)}', space=vmem, size = 0x12000, scoped, tag = 'internal scratch']
  %s0 = inlined_call_operand.vmem [shape: s32[8,1], index: 0, kind: input, shape index: {}]
  %s1 = inlined_call_operand.vmem [shape: f32[8,160], index: 1, kind: input, shape index: {}]
  %s2 = inlined_call_operand.vmem [shape: bf16[160,512], index: 2, kind: input, shape index: {}]
  %s3 = inlined_call_operand.vmem [shape: f32[1,512], index: 3, kind: input, shape index: {}]
  %s4 = inlined_call_operand.vmem [shape: bf16[512,1024], index: 4, kind: input, shape index: {}]
  %s5 = inlined_call_operand.vmem [shape: f32[1,1024], index: 5, kind: input, shape index: {}]
  %s6 = inlined_call_operand.vmem [shape: bf16[1024,784], index: 6, kind: input, shape index: {}]
  %s7 = inlined_call_operand.vmem [shape: f32[1,784], index: 7, kind: input, shape index: {}]
  %s8 = inlined_call_operand.hbm [shape: f32[8,784], index: 8, kind: output, shape index: {}]
  %s9 = sld [smem:[#allocation0]]
  $region42: #{tpu_custom_call.1} parent=0
    _
  %s11 = ssub.s32 1, %s9
  %s12 = scalar_select 0, %s11, %s9
  $region1: #{tpu_custom_call.1} parent=0
    #allocation2 [shape = 'u8[28672]{0}', space=vmem, size = 0x7000, scoped, tag = 'output window, operand 0, single buffered']
    #allocation3 [shape = 's32[1]{0}', space=sflag, size = 0x4, scoped, tag = 'scoped memory for tpu_custom_call.1']
    %13 = vsyncpa [#allocation3], 0
    // Predicated region
    $region2: #{tpu_custom_call.1} parent=1 // pred_check
      _
    $region3: #{tpu_custom_call.1} parent=1 // pred_check_branch
      %15 = sbr.rel (0) target = $region5
    $region4: #{tpu_custom_call.1} parent=1 // pred_region
      _
    $region5: #{tpu_custom_call.1} parent=1 // pred_fallthru
      _
    // Predicated region
    $region6: #{tpu_custom_call.1} parent=1 // pred_check
      _
    $region7: #{tpu_custom_call.1} parent=1 // pred_check_branch
      %17 = sbr.rel (0) target = $region9
    $region8: #{tpu_custom_call.1} parent=1 // pred_region
      _
    $region9: #{tpu_custom_call.1} parent=1 // pred_fallthru
      _
    // Predicated region
    $region10: #{tpu_custom_call.1} parent=1 // pred_check
      _
    $region11: #{tpu_custom_call.1} parent=1 // pred_check_branch
      %19 = sbr.rel (0) target = $region13
    $region12: #{tpu_custom_call.1} parent=1 // pred_region
      _
    $region13: #{tpu_custom_call.1} parent=1 // pred_fallthru
      _
    // Predicated region
    $region14: #{tpu_custom_call.1} parent=1 // pred_check
      _
    $region15: #{tpu_custom_call.1} parent=1 // pred_check_branch
      %21 = sbr.rel (0) target = $region17
    $region16: #{tpu_custom_call.1} parent=1 // pred_region
      _
    $region17: #{tpu_custom_call.1} parent=1 // pred_fallthru
      _
    // Predicated region
    $region18: #{tpu_custom_call.1} parent=1 // pred_check
      _
    $region19: #{tpu_custom_call.1} parent=1 // pred_check_branch
      %23 = sbr.rel (0) target = $region21
    $region20: #{tpu_custom_call.1} parent=1 // pred_region
      _
    $region21: #{tpu_custom_call.1} parent=1 // pred_fallthru
      _
    // Predicated region
    $region22: #{tpu_custom_call.1} parent=1 // pred_check
      _
    $region23: #{tpu_custom_call.1} parent=1 // pred_check_branch
      %25 = sbr.rel (0) target = $region25
    $region24: #{tpu_custom_call.1} parent=1 // pred_region
      _
    $region25: #{tpu_custom_call.1} parent=1 // pred_fallthru
      _
    // Predicated region
    $region26: #{tpu_custom_call.1} parent=1 // pred_check
      _
    $region27: #{tpu_custom_call.1} parent=1 // pred_check_branch
      %27 = sbr.rel (0) target = $region29
    $region28: #{tpu_custom_call.1} parent=1 // pred_region
      _
    $region29: #{tpu_custom_call.1} parent=1 // pred_fallthru
      _
    // Predicated region
    $region30: #{tpu_custom_call.1} parent=1 // pred_check
      _
    $region31: #{tpu_custom_call.1} parent=1 // pred_check_branch
      %29 = sbr.rel (0) target = $region33
    $region32: #{tpu_custom_call.1} parent=1 // pred_region
      _
    $region33: #{tpu_custom_call.1} parent=1 // pred_fallthru
      _
    %v31 = vld [vmem:[%s1] sm:$0xff]
    %v32 = vld [vmem:[%s1 + $0x8] sm:$0xff]
    %v33 = vld [vmem:[%s0] sm:$0xff]
    %v34 = vlaneseq
    %v35 = vand.u32 %v34, 127
    %v36 = vadd.s32 %v35, 128
    %37 = vset.pattern.permute.xlu0 0
    %38 = vperm.xlu0 %37, %v33
    %v39 = vpop.permute.xlu0 %38
    %vm40 = vcmp.ge.s32.totalorder %v35, %v39
    %vm41 = vcmp.ge.s32.totalorder %v36, %v39
    %v42 = vadd.s32 %v33, 16
    %43 = vset.pattern.permute.xlu0 0
    %44 = vperm.xlu0 %43, %v42
    %v45 = vpop.permute.xlu0 %44
    %vm46 = vcmp.lt.s32.totalorder %v35, %v45
    %vm47 = vcmp.lt.s32.totalorder %v36, %v45
    %vm48 = vmand %vm40, %vm46
    %vm49 = vmand %vm41, %vm47
    %v50 = vsel %vm48, %v31, 0.0
    %v51 = vsel %vm49, %v32, 0.0
    %v52 = vpack.c.bf16 %v50, %v50
    %v53 = vpack.c.bf16 %v51, %v51
    %v54 = vld [vmem:[%s2] sm:$0xff]
    %v55 = vld [vmem:[%s2 + $0x8] sm:$0xff]
    %v56 = vld [vmem:[%s2 + $0x10] sm:$0xff]
    %v57 = vld [vmem:[%s2 + $0x18] sm:$0xff]
    %v58 = vld [vmem:[%s2 + $0x20] sm:$0xff]
    %v59 = vld [vmem:[%s2 + $0x28] sm:$0xff]
    %v60 = vld [vmem:[%s2 + $0x30] sm:$0xff]
    %v61 = vld [vmem:[%s2 + $0x38] sm:$0xff]
    %v62 = vld [vmem:[%s2 + $0x40] sm:$0xff]
    %v63 = vld [vmem:[%s2 + $0x48] sm:$0xff]
    %v64 = vld [vmem:[%s2 + $0x50] sm:$0xff]
    %v65 = vld [vmem:[%s2 + $0x58] sm:$0xff]
    %v66 = vld [vmem:[%s2 + $0x60] sm:$0xff]
    %v67 = vld [vmem:[%s2 + $0x68] sm:$0xff]
    %v68 = vld [vmem:[%s2 + $0x70] sm:$0xff]
    %v69 = vld [vmem:[%s2 + $0x78] sm:$0xff]
    %v70 = vld [vmem:[%s2 + $0x80] sm:$0xff]
    %v71 = vld [vmem:[%s2 + $0x88] sm:$0xff]
    %v72 = vld [vmem:[%s2 + $0x90] sm:$0xff]
    %v73 = vld [vmem:[%s2 + $0x98] sm:$0xff]
    %v74 = vld [vmem:[%s2 + $0xa0] sm:$0xff]
    %v75 = vld [vmem:[%s2 + $0xa8] sm:$0xff]
    %v76 = vld [vmem:[%s2 + $0xb0] sm:$0xff]
    %v77 = vld [vmem:[%s2 + $0xb8] sm:$0xff]
    %v78 = vld [vmem:[%s2 + $0xc0] sm:$0xff]
    %v79 = vld [vmem:[%s2 + $0xc8] sm:$0xff]
    %v80 = vld [vmem:[%s2 + $0xd0] sm:$0xff]
    %v81 = vld [vmem:[%s2 + $0xd8] sm:$0xff]
    %v82 = vld [vmem:[%s2 + $0xe0] sm:$0xff]
    %v83 = vld [vmem:[%s2 + $0xe8] sm:$0xff]
    %v84 = vld [vmem:[%s2 + $0xf0] sm:$0xff]
    %v85 = vld [vmem:[%s2 + $0xf8] sm:$0xff]
    %v86 = vld [vmem:[%s2 + $0x100] sm:$0xff]
    %v87 = vld [vmem:[%s2 + $0x108] sm:$0xff]
    %v88 = vld [vmem:[%s2 + $0x110] sm:$0xff]
    %v89 = vld [vmem:[%s2 + $0x118] sm:$0xff]
    %v90 = vld [vmem:[%s2 + $0x120] sm:$0xff]
    %v91 = vld [vmem:[%s2 + $0x128] sm:$0xff]
    %v92 = vld [vmem:[%s2 + $0x130] sm:$0xff]
    %v93 = vld [vmem:[%s2 + $0x138] sm:$0xff]
    %v94 = vld [vmem:[%s3] sm:$0xf]
    %v96 = vlaneseq
    %v97 = vshrl.u32 %v96, 7
    %v98 = vsub.s32 0, %v97
    %v99 = vrot.slane %v94, %v98
    %v100 = vlaneseq
    %v101 = vshrl.u32 %v100, 7
    %v102 = vsub.s32 1, %v101
    %v103 = vrot.slane %v94, %v102
    %v104 = vlaneseq
    %v105 = vshrl.u32 %v104, 7
    %v106 = vsub.s32 2, %v105
    %v107 = vrot.slane %v94, %v106
    %v108 = vlaneseq
    %v109 = vshrl.u32 %v108, 7
    %v110 = vsub.s32 3, %v109
    %v111 = vrot.slane %v94, %v110
    %v156 = vunpack.c.l.b16 %v54
    %v157 = vunpack.c.h.b16 %v54
    %v158 = vunpack.c.l.b16 %v55
    %v159 = vunpack.c.h.b16 %v55
    %v160 = vunpack.c.l.b16 %v56
    %v161 = vunpack.c.h.b16 %v56
    %v162 = vunpack.c.l.b16 %v57
    %v163 = vunpack.c.h.b16 %v57
    %v164 = vunpack.c.l.b16 %v58
    %v165 = vunpack.c.h.b16 %v58
    %v166 = vunpack.c.l.b16 %v59
    %v167 = vunpack.c.h.b16 %v59
    %v168 = vunpack.c.l.b16 %v60
    %v169 = vunpack.c.h.b16 %v60
    %v170 = vunpack.c.l.b16 %v61
    %v171 = vunpack.c.h.b16 %v61
    %v172 = vunpack.c.l.b16 %v62
    %v173 = vunpack.c.h.b16 %v62
    %v174 = vunpack.c.l.b16 %v63
    %v175 = vunpack.c.h.b16 %v63
    %v176 = vunpack.c.l.b16 %v64
    %v177 = vunpack.c.h.b16 %v64
    %v178 = vunpack.c.l.b16 %v65
    %v179 = vunpack.c.h.b16 %v65
    %v180 = vunpack.c.l.b16 %v66
    %v181 = vunpack.c.h.b16 %v66
    %v182 = vunpack.c.l.b16 %v67
    %v183 = vunpack.c.h.b16 %v67
    %v184 = vunpack.c.l.b16 %v68
    %v185 = vunpack.c.h.b16 %v68
    %v186 = vunpack.c.l.b16 %v69
    %v187 = vunpack.c.h.b16 %v69
    %v188 = vunpack.c.l.b16 %v70
    %v189 = vunpack.c.h.b16 %v70
    %v190 = vunpack.c.l.b16 %v71
    %v191 = vunpack.c.h.b16 %v71
    %v192 = vunpack.c.l.b16 %v72
    %v193 = vunpack.c.h.b16 %v72
    %v194 = vunpack.c.l.b16 %v73
    %v195 = vunpack.c.h.b16 %v73
    %v196 = vunpack.c.l.b16 %v74
    %v197 = vunpack.c.h.b16 %v74
    %v198 = vunpack.c.l.b16 %v75
    %v199 = vunpack.c.h.b16 %v75
    %v200 = vunpack.c.l.b16 %v76
    %v201 = vunpack.c.h.b16 %v76
    %v202 = vunpack.c.l.b16 %v77
    %v203 = vunpack.c.h.b16 %v77
    %v204 = vunpack.c.l.b16 %v78
    %v205 = vunpack.c.h.b16 %v78
    %v206 = vunpack.c.l.b16 %v79
    %v207 = vunpack.c.h.b16 %v79
    %v208 = vunpack.c.l.b16 %v80
    %v209 = vunpack.c.h.b16 %v80
    %v210 = vunpack.c.l.b16 %v81
    %v211 = vunpack.c.h.b16 %v81
    %v212 = vunpack.c.l.b16 %v82
    %v213 = vunpack.c.h.b16 %v82
    %v214 = vunpack.c.l.b16 %v83
    %v215 = vunpack.c.h.b16 %v83
    %v216 = vunpack.c.l.b16 %v84
    %v217 = vunpack.c.h.b16 %v84
    %v218 = vunpack.c.l.b16 %v85
    %v219 = vunpack.c.h.b16 %v85
    %v220 = vunpack.c.l.b16 %v86
    %v221 = vunpack.c.h.b16 %v86
    %v222 = vunpack.c.l.b16 %v87
    %v223 = vunpack.c.h.b16 %v87
    %v224 = vunpack.c.l.b16 %v88
    %v225 = vunpack.c.h.b16 %v88
    %v226 = vunpack.c.l.b16 %v89
    %v227 = vunpack.c.h.b16 %v89
    %v228 = vunpack.c.l.b16 %v90
    %v229 = vunpack.c.h.b16 %v90
    %v230 = vunpack.c.l.b16 %v91
    %v231 = vunpack.c.h.b16 %v91
    %v232 = vunpack.c.l.b16 %v92
    %v233 = vunpack.c.h.b16 %v92
    %v234 = vunpack.c.l.b16 %v93
    %v235 = vunpack.c.h.b16 %v93
    %v236 = vpack.c.b16 %v160, %v156
    %v237 = vpack.c.b16 %v161, %v157
    %v238 = vpack.c.b16 %v162, %v158
    %v239 = vpack.c.b16 %v163, %v159
    %v240 = vpack.c.b16 %v168, %v164
    %v241 = vpack.c.b16 %v169, %v165
    %v242 = vpack.c.b16 %v170, %v166
    %v243 = vpack.c.b16 %v171, %v167
    %v244 = vpack.c.b16 %v176, %v172
    %v245 = vpack.c.b16 %v177, %v173
    %v246 = vpack.c.b16 %v178, %v174
    %v247 = vpack.c.b16 %v179, %v175
    %v248 = vpack.c.b16 %v184, %v180
    %v249 = vpack.c.b16 %v185, %v181
    %v250 = vpack.c.b16 %v186, %v182
    %v251 = vpack.c.b16 %v187, %v183
    %v252 = vpack.c.b16 %v192, %v188
    %v253 = vpack.c.b16 %v193, %v189
    %v254 = vpack.c.b16 %v194, %v190
    %v255 = vpack.c.b16 %v195, %v191
    %v256 = vpack.c.b16 %v200, %v196
    %v257 = vpack.c.b16 %v201, %v197
    %v258 = vpack.c.b16 %v202, %v198
    %v259 = vpack.c.b16 %v203, %v199
    %v260 = vpack.c.b16 %v208, %v204
    %v261 = vpack.c.b16 %v209, %v205
    %v262 = vpack.c.b16 %v210, %v206
    %v263 = vpack.c.b16 %v211, %v207
    %v264 = vpack.c.b16 %v216, %v212
    %v265 = vpack.c.b16 %v217, %v213
    %v266 = vpack.c.b16 %v218, %v214
    %v267 = vpack.c.b16 %v219, %v215
    %v268 = vpack.c.b16 %v224, %v220
    %v269 = vpack.c.b16 %v225, %v221
    %v270 = vpack.c.b16 %v226, %v222
    %v271 = vpack.c.b16 %v227, %v223
    %v272 = vpack.c.b16 %v232, %v228
    %v273 = vpack.c.b16 %v233, %v229
    %v274 = vpack.c.b16 %v234, %v230
    %v275 = vpack.c.b16 %v235, %v231
    %vm316 = vcmask 261120
    %v318 = vsel %vm316, %v53, 0
    %320 = vmatprep.subr.bf16.mxu0 %v265
    %321 = vmatpush1.bf16.msra.mxu0 %v264
    %322 = vmatprep.subr.bf16.mxu0 %v261
    %323 = vmatpush1.bf16.msra.mxu0 %v260
    %324 = vmatprep.subr.bf16.mxu0 %v257
    %325 = vmatpush1.bf16.msra.mxu0 %v256
    %326 = vmatprep.subr.bf16.mxu0 %v253
    %327 = vmatpush1.bf16.msra.mxu0 %v252
    %328 = vmatprep.subr.bf16.mxu0 %v249
    %329 = vmatpush1.bf16.msra.mxu0 %v248
    %330 = vmatprep.subr.bf16.mxu0 %v245
    %331 = vmatpush1.bf16.msra.mxu0 %v244
    %332 = vmatprep.subr.bf16.mxu0 %v241
    %333 = vmatpush1.bf16.msra.mxu0 %v240
    %334 = vmatprep.subr.bf16.mxu0 %v237
    %335 = vmatpush1.bf16.msra.mxu0 %v236
    %336 = vmatprep.subr.bf16.mxu0 0
    %337 = vmatpush2.bf16.msra.mxu0 0
    %338 = vmatprep.subr.bf16.mxu0 0
    %339 = vmatpush2.bf16.msra.mxu0 0
    %340 = vmatprep.subr.bf16.mxu0 0
    %341 = vmatpush2.bf16.msra.mxu0 0
    %342 = vmatprep.subr.bf16.mxu0 0
    %343 = vmatpush2.bf16.msra.mxu0 0
    %344 = vmatprep.subr.bf16.mxu0 0
    %345 = vmatpush2.bf16.msra.mxu0 0
    %346 = vmatprep.subr.bf16.mxu0 0
    %347 = vmatpush2.bf16.msra.mxu0 0
    %348 = vmatprep.subr.bf16.mxu0 %v273
    %349 = vmatpush2.bf16.msra.mxu0 %v272
    %350 = vmatprep.subr.bf16.mxu0 %v269
    %351 = vmatpush2.bf16.msra.mxu0 %v268
    %352 = vmatprep.mubr.bf16.mxu0 %v318
    %353 = vmatmul.mubr.bf16.gmra.mxu0 %v52
    %v354 = vpop.f32.mrf.mxu0
    %v355 = vadd.f32 %v99, %v354
    %v356 = vpop.f32.mrf.mxu0
    %v357 = vadd.f32 %v103, %v356
    %v358 = vpop.f32.mrf.mxu0
    %v359 = vpop.f32.mrf.mxu0
    %360 = vdwg.mxu0
    %361 = vmatprep.subr.bf16.mxu0 %v267
    %362 = vmatpush1.bf16.msra.mxu0 %v266
    %363 = vmatprep.subr.bf16.mxu0 %v263
    %364 = vmatpush1.bf16.msra.mxu0 %v262
    %365 = vmatprep.subr.bf16.mxu0 %v259
    %366 = vmatpush1.bf16.msra.mxu0 %v258
    %367 = vmatprep.subr.bf16.mxu0 %v255
    %368 = vmatpush1.bf16.msra.mxu0 %v254
    %369 = vmatprep.subr.bf16.mxu0 %v251
    %370 = vmatpush1.bf16.msra.mxu0 %v250
    %371 = vmatprep.subr.bf16.mxu0 %v247
    %372 = vmatpush1.bf16.msra.mxu0 %v246
    %373 = vmatprep.subr.bf16.mxu0 %v243
    %374 = vmatpush1.bf16.msra.mxu0 %v242
    %375 = vmatprep.subr.bf16.mxu0 %v239
    %376 = vmatpush1.bf16.msra.mxu0 %v238
    %377 = vmatprep.subr.bf16.mxu0 0
    %378 = vmatpush2.bf16.msra.mxu0 0
    %379 = vmatprep.subr.bf16.mxu0 0
    %380 = vmatpush2.bf16.msra.mxu0 0
    %381 = vmatprep.subr.bf16.mxu0 0
    %382 = vmatpush2.bf16.msra.mxu0 0
    %383 = vmatprep.subr.bf16.mxu0 0
    %384 = vmatpush2.bf16.msra.mxu0 0
    %385 = vmatprep.subr.bf16.mxu0 0
    %386 = vmatpush2.bf16.msra.mxu0 0
    %387 = vmatprep.subr.bf16.mxu0 0
    %388 = vmatpush2.bf16.msra.mxu0 0
    %389 = vmatprep.subr.bf16.mxu0 %v275
    %390 = vmatpush2.bf16.msra.mxu0 %v274
    %391 = vmatprep.subr.bf16.mxu0 %v271
    %392 = vmatpush2.bf16.msra.mxu0 %v270
    %393 = vmatprep.mubr.bf16.mxu0 %v318
    %394 = vmatmul.mubr.bf16.gmra.mxu0 %v52
    %v395 = vpop.f32.mrf.mxu0
    %v396 = vadd.f32 %v107, %v395
    %v397 = vpop.f32.mrf.mxu0
    %v398 = vadd.f32 %v111, %v397
    %v399 = vpop.f32.mrf.mxu0
    %v400 = vpop.f32.mrf.mxu0
    %401 = vdwg.mxu0
    %v402 = vmax.f32 %v355, 0.0
    %v403 = vmax.f32 %v357, 0.0
    %v404 = vmax.f32 %v396, 0.0
    %v405 = vmax.f32 %v398, 0.0
    %v406 = vpack.c.bf16 %v402, %v402
    %v407 = vpack.c.bf16 %v403, %v403
    %v408 = vpack.c.bf16 %v404, %v404
    %v409 = vpack.c.bf16 %v405, %v405
    %v410 = vld [vmem:[%s4] sm:$0xff]
    %v411 = vld [vmem:[%s4 + $0x8] sm:$0xff]
    %v412 = vld [vmem:[%s4 + $0x10] sm:$0xff]
    %v413 = vld [vmem:[%s4 + $0x18] sm:$0xff]
    %v414 = vld [vmem:[%s4 + $0x20] sm:$0xff]
    %v415 = vld [vmem:[%s4 + $0x28] sm:$0xff]
    %v416 = vld [vmem:[%s4 + $0x30] sm:$0xff]
    %v417 = vld [vmem:[%s4 + $0x38] sm:$0xff]
    %v418 = vld [vmem:[%s4 + $0x40] sm:$0xff]
    %v419 = vld [vmem:[%s4 + $0x48] sm:$0xff]
    %v420 = vld [vmem:[%s4 + $0x50] sm:$0xff]
    %v421 = vld [vmem:[%s4 + $0x58] sm:$0xff]
    %v422 = vld [vmem:[%s4 + $0x60] sm:$0xff]
    %v423 = vld [vmem:[%s4 + $0x68] sm:$0xff]
    %v424 = vld [vmem:[%s4 + $0x70] sm:$0xff]
    %v425 = vld [vmem:[%s4 + $0x78] sm:$0xff]
    %v426 = vld [vmem:[%s4 + $0x80] sm:$0xff]
    %v427 = vld [vmem:[%s4 + $0x88] sm:$0xff]
    %v428 = vld [vmem:[%s4 + $0x90] sm:$0xff]
    %v429 = vld [vmem:[%s4 + $0x98] sm:$0xff]
    %v430 = vld [vmem:[%s4 + $0xa0] sm:$0xff]
    %v431 = vld [vmem:[%s4 + $0xa8] sm:$0xff]
    %v432 = vld [vmem:[%s4 + $0xb0] sm:$0xff]
    %v433 = vld [vmem:[%s4 + $0xb8] sm:$0xff]
    %v434 = vld [vmem:[%s4 + $0xc0] sm:$0xff]
    %v435 = vld [vmem:[%s4 + $0xc8] sm:$0xff]
    %v436 = vld [vmem:[%s4 + $0xd0] sm:$0xff]
    %v437 = vld [vmem:[%s4 + $0xd8] sm:$0xff]
    %v438 = vld [vmem:[%s4 + $0xe0] sm:$0xff]
    %v439 = vld [vmem:[%s4 + $0xe8] sm:$0xff]
    %v440 = vld [vmem:[%s4 + $0xf0] sm:$0xff]
    %v441 = vld [vmem:[%s4 + $0xf8] sm:$0xff]
    %v442 = vld [vmem:[%s4 + $0x100] sm:$0xff]
    %v443 = vld [vmem:[%s4 + $0x108] sm:$0xff]
    %v444 = vld [vmem:[%s4 + $0x110] sm:$0xff]
    %v445 = vld [vmem:[%s4 + $0x118] sm:$0xff]
    %v446 = vld [vmem:[%s4 + $0x120] sm:$0xff]
    %v447 = vld [vmem:[%s4 + $0x128] sm:$0xff]
    %v448 = vld [vmem:[%s4 + $0x130] sm:$0xff]
    %v449 = vld [vmem:[%s4 + $0x138] sm:$0xff]
    %v450 = vld [vmem:[%s4 + $0x140] sm:$0xff]
    %v451 = vld [vmem:[%s4 + $0x148] sm:$0xff]
    %v452 = vld [vmem:[%s4 + $0x150] sm:$0xff]
    %v453 = vld [vmem:[%s4 + $0x158] sm:$0xff]
    %v454 = vld [vmem:[%s4 + $0x160] sm:$0xff]
    %v455 = vld [vmem:[%s4 + $0x168] sm:$0xff]
    %v456 = vld [vmem:[%s4 + $0x170] sm:$0xff]
    %v457 = vld [vmem:[%s4 + $0x178] sm:$0xff]
    %v458 = vld [vmem:[%s4 + $0x180] sm:$0xff]
    %v459 = vld [vmem:[%s4 + $0x188] sm:$0xff]
    %v460 = vld [vmem:[%s4 + $0x190] sm:$0xff]
    %v461 = vld [vmem:[%s4 + $0x198] sm:$0xff]
    %v462 = vld [vmem:[%s4 + $0x1a0] sm:$0xff]
    %v463 = vld [vmem:[%s4 + $0x1a8] sm:$0xff]
    %v464 = vld [vmem:[%s4 + $0x1b0] sm:$0xff]
    %v465 = vld [vmem:[%s4 + $0x1b8] sm:$0xff]
    %v466 = vld [vmem:[%s4 + $0x1c0] sm:$0xff]
    %v467 = vld [vmem:[%s4 + $0x1c8] sm:$0xff]
    %v468 = vld [vmem:[%s4 + $0x1d0] sm:$0xff]
    %v469 = vld [vmem:[%s4 + $0x1d8] sm:$0xff]
    %v470 = vld [vmem:[%s4 + $0x1e0] sm:$0xff]
    %v471 = vld [vmem:[%s4 + $0x1e8] sm:$0xff]
    %v472 = vld [vmem:[%s4 + $0x1f0] sm:$0xff]
    %v473 = vld [vmem:[%s4 + $0x1f8] sm:$0xff]
    %v474 = vld [vmem:[%s4 + $0x200] sm:$0xff]
    %v475 = vld [vmem:[%s4 + $0x208] sm:$0xff]
    %v476 = vld [vmem:[%s4 + $0x210] sm:$0xff]
    %v477 = vld [vmem:[%s4 + $0x218] sm:$0xff]
    %v478 = vld [vmem:[%s4 + $0x220] sm:$0xff]
    %v479 = vld [vmem:[%s4 + $0x228] sm:$0xff]
    %v480 = vld [vmem:[%s4 + $0x230] sm:$0xff]
    %v481 = vld [vmem:[%s4 + $0x238] sm:$0xff]
    %v482 = vld [vmem:[%s4 + $0x240] sm:$0xff]
    %v483 = vld [vmem:[%s4 + $0x248] sm:$0xff]
    %v484 = vld [vmem:[%s4 + $0x250] sm:$0xff]
    %v485 = vld [vmem:[%s4 + $0x258] sm:$0xff]
    %v486 = vld [vmem:[%s4 + $0x260] sm:$0xff]
    %v487 = vld [vmem:[%s4 + $0x268] sm:$0xff]
    %v488 = vld [vmem:[%s4 + $0x270] sm:$0xff]
    %v489 = vld [vmem:[%s4 + $0x278] sm:$0xff]
    %v490 = vld [vmem:[%s4 + $0x280] sm:$0xff]
    %v491 = vld [vmem:[%s4 + $0x288] sm:$0xff]
    %v492 = vld [vmem:[%s4 + $0x290] sm:$0xff]
    %v493 = vld [vmem:[%s4 + $0x298] sm:$0xff]
    %v494 = vld [vmem:[%s4 + $0x2a0] sm:$0xff]
    %v495 = vld [vmem:[%s4 + $0x2a8] sm:$0xff]
    %v496 = vld [vmem:[%s4 + $0x2b0] sm:$0xff]
    %v497 = vld [vmem:[%s4 + $0x2b8] sm:$0xff]
    %v498 = vld [vmem:[%s4 + $0x2c0] sm:$0xff]
    %v499 = vld [vmem:[%s4 + $0x2c8] sm:$0xff]
    %v500 = vld [vmem:[%s4 + $0x2d0] sm:$0xff]
    %v501 = vld [vmem:[%s4 + $0x2d8] sm:$0xff]
    %v502 = vld [vmem:[%s4 + $0x2e0] sm:$0xff]
    %v503 = vld [vmem:[%s4 + $0x2e8] sm:$0xff]
    %v504 = vld [vmem:[%s4 + $0x2f0] sm:$0xff]
    %v505 = vld [vmem:[%s4 + $0x2f8] sm:$0xff]
    %v506 = vld [vmem:[%s4 + $0x300] sm:$0xff]
    %v507 = vld [vmem:[%s4 + $0x308] sm:$0xff]
    %v508 = vld [vmem:[%s4 + $0x310] sm:$0xff]
    %v509 = vld [vmem:[%s4 + $0x318] sm:$0xff]
    %v510 = vld [vmem:[%s4 + $0x320] sm:$0xff]
    %v511 = vld [vmem:[%s4 + $0x328] sm:$0xff]
    %v512 = vld [vmem:[%s4 + $0x330] sm:$0xff]
    %v513 = vld [vmem:[%s4 + $0x338] sm:$0xff]
    %v514 = vld [vmem:[%s4 + $0x340] sm:$0xff]
    %v515 = vld [vmem:[%s4 + $0x348] sm:$0xff]
    %v516 = vld [vmem:[%s4 + $0x350] sm:$0xff]
    %v517 = vld [vmem:[%s4 + $0x358] sm:$0xff]
    %v518 = vld [vmem:[%s4 + $0x360] sm:$0xff]
    %v519 = vld [vmem:[%s4 + $0x368] sm:$0xff]
    %v520 = vld [vmem:[%s4 + $0x370] sm:$0xff]
    %v521 = vld [vmem:[%s4 + $0x378] sm:$0xff]
    %v522 = vld [vmem:[%s4 + $0x380] sm:$0xff]
    %v523 = vld [vmem:[%s4 + $0x388] sm:$0xff]
    %v524 = vld [vmem:[%s4 + $0x390] sm:$0xff]
    %v525 = vld [vmem:[%s4 + $0x398] sm:$0xff]
    %v526 = vld [vmem:[%s4 + $0x3a0] sm:$0xff]
    %v527 = vld [vmem:[%s4 + $0x3a8] sm:$0xff]
    %v528 = vld [vmem:[%s4 + $0x3b0] sm:$0xff]
    %v529 = vld [vmem:[%s4 + $0x3b8] sm:$0xff]
    %v530 = vld [vmem:[%s4 + $0x3c0] sm:$0xff]
    %v531 = vld [vmem:[%s4 + $0x3c8] sm:$0xff]
    %v532 = vld [vmem:[%s4 + $0x3d0] sm:$0xff]
    %v533 = vld [vmem:[%s4 + $0x3d8] sm:$0xff]
    %v534 = vld [vmem:[%s4 + $0x3e0] sm:$0xff]
    %v535 = vld [vmem:[%s4 + $0x3e8] sm:$0xff]
    %v536 = vld [vmem:[%s4 + $0x3f0] sm:$0xff]
    %v537 = vld [vmem:[%s4 + $0x3f8] sm:$0xff]
    %v538 = vld [vmem:[%s4 + $0x400] sm:$0xff]
    %v539 = vld [vmem:[%s4 + $0x408] sm:$0xff]
    %v540 = vld [vmem:[%s4 + $0x410] sm:$0xff]
    %v541 = vld [vmem:[%s4 + $0x418] sm:$0xff]
    %v542 = vld [vmem:[%s4 + $0x420] sm:$0xff]
    %v543 = vld [vmem:[%s4 + $0x428] sm:$0xff]
    %v544 = vld [vmem:[%s4 + $0x430] sm:$0xff]
    %v545 = vld [vmem:[%s4 + $0x438] sm:$0xff]
    %v546 = vld [vmem:[%s4 + $0x440] sm:$0xff]
    %v547 = vld [vmem:[%s4 + $0x448] sm:$0xff]
    %v548 = vld [vmem:[%s4 + $0x450] sm:$0xff]
    %v549 = vld [vmem:[%s4 + $0x458] sm:$0xff]
    %v550 = vld [vmem:[%s4 + $0x460] sm:$0xff]
    %v551 = vld [vmem:[%s4 + $0x468] sm:$0xff]
    %v552 = vld [vmem:[%s4 + $0x470] sm:$0xff]
    %v553 = vld [vmem:[%s4 + $0x478] sm:$0xff]
    %v554 = vld [vmem:[%s4 + $0x480] sm:$0xff]
    %v555 = vld [vmem:[%s4 + $0x488] sm:$0xff]
    %v556 = vld [vmem:[%s4 + $0x490] sm:$0xff]
    %v557 = vld [vmem:[%s4 + $0x498] sm:$0xff]
    %v558 = vld [vmem:[%s4 + $0x4a0] sm:$0xff]
    %v559 = vld [vmem:[%s4 + $0x4a8] sm:$0xff]
    %v560 = vld [vmem:[%s4 + $0x4b0] sm:$0xff]
    %v561 = vld [vmem:[%s4 + $0x4b8] sm:$0xff]
    %v562 = vld [vmem:[%s4 + $0x4c0] sm:$0xff]
    %v563 = vld [vmem:[%s4 + $0x4c8] sm:$0xff]
    %v564 = vld [vmem:[%s4 + $0x4d0] sm:$0xff]
    %v565 = vld [vmem:[%s4 + $0x4d8] sm:$0xff]
    %v566 = vld [vmem:[%s4 + $0x4e0] sm:$0xff]
    %v567 = vld [vmem:[%s4 + $0x4e8] sm:$0xff]
    %v568 = vld [vmem:[%s4 + $0x4f0] sm:$0xff]
    %v569 = vld [vmem:[%s4 + $0x4f8] sm:$0xff]
    %v570 = vld [vmem:[%s4 + $0x500] sm:$0xff]
    %v571 = vld [vmem:[%s4 + $0x508] sm:$0xff]
    %v572 = vld [vmem:[%s4 + $0x510] sm:$0xff]
    %v573 = vld [vmem:[%s4 + $0x518] sm:$0xff]
    %v574 = vld [vmem:[%s4 + $0x520] sm:$0xff]
    %v575 = vld [vmem:[%s4 + $0x528] sm:$0xff]
    %v576 = vld [vmem:[%s4 + $0x530] sm:$0xff]
    %v577 = vld [vmem:[%s4 + $0x538] sm:$0xff]
    %v578 = vld [vmem:[%s4 + $0x540] sm:$0xff]
    %v579 = vld [vmem:[%s4 + $0x548] sm:$0xff]
    %v580 = vld [vmem:[%s4 + $0x550] sm:$0xff]
    %v581 = vld [vmem:[%s4 + $0x558] sm:$0xff]
    %v582 = vld [vmem:[%s4 + $0x560] sm:$0xff]
    %v583 = vld [vmem:[%s4 + $0x568] sm:$0xff]
    %v584 = vld [vmem:[%s4 + $0x570] sm:$0xff]
    %v585 = vld [vmem:[%s4 + $0x578] sm:$0xff]
    %v586 = vld [vmem:[%s4 + $0x580] sm:$0xff]
    %v587 = vld [vmem:[%s4 + $0x588] sm:$0xff]
    %v588 = vld [vmem:[%s4 + $0x590] sm:$0xff]
    %v589 = vld [vmem:[%s4 + $0x598] sm:$0xff]
    %v590 = vld [vmem:[%s4 + $0x5a0] sm:$0xff]
    %v591 = vld [vmem:[%s4 + $0x5a8] sm:$0xff]
    %v592 = vld [vmem:[%s4 + $0x5b0] sm:$0xff]
    %v593 = vld [vmem:[%s4 + $0x5b8] sm:$0xff]
    %v594 = vld [vmem:[%s4 + $0x5c0] sm:$0xff]
    %v595 = vld [vmem:[%s4 + $0x5c8] sm:$0xff]
    %v596 = vld [vmem:[%s4 + $0x5d0] sm:$0xff]
    %v597 = vld [vmem:[%s4 + $0x5d8] sm:$0xff]
    %v598 = vld [vmem:[%s4 + $0x5e0] sm:$0xff]
    %v599 = vld [vmem:[%s4 + $0x5e8] sm:$0xff]
    %v600 = vld [vmem:[%s4 + $0x5f0] sm:$0xff]
    %v601 = vld [vmem:[%s4 + $0x5f8] sm:$0xff]
    %v602 = vld [vmem:[%s4 + $0x600] sm:$0xff]
    %v603 = vld [vmem:[%s4 + $0x608] sm:$0xff]
    %v604 = vld [vmem:[%s4 + $0x610] sm:$0xff]
    %v605 = vld [vmem:[%s4 + $0x618] sm:$0xff]
    %v606 = vld [vmem:[%s4 + $0x620] sm:$0xff]
    %v607 = vld [vmem:[%s4 + $0x628] sm:$0xff]
    %v608 = vld [vmem:[%s4 + $0x630] sm:$0xff]
    %v609 = vld [vmem:[%s4 + $0x638] sm:$0xff]
    %v610 = vld [vmem:[%s4 + $0x640] sm:$0xff]
    %v611 = vld [vmem:[%s4 + $0x648] sm:$0xff]
    %v612 = vld [vmem:[%s4 + $0x650] sm:$0xff]
    %v613 = vld [vmem:[%s4 + $0x658] sm:$0xff]
    %v614 = vld [vmem:[%s4 + $0x660] sm:$0xff]
    %v615 = vld [vmem:[%s4 + $0x668] sm:$0xff]
    %v616 = vld [vmem:[%s4 + $0x670] sm:$0xff]
    %v617 = vld [vmem:[%s4 + $0x678] sm:$0xff]
    %v618 = vld [vmem:[%s4 + $0x680] sm:$0xff]
    %v619 = vld [vmem:[%s4 + $0x688] sm:$0xff]
    %v620 = vld [vmem:[%s4 + $0x690] sm:$0xff]
    %v621 = vld [vmem:[%s4 + $0x698] sm:$0xff]
    %v622 = vld [vmem:[%s4 + $0x6a0] sm:$0xff]
    %v623 = vld [vmem:[%s4 + $0x6a8] sm:$0xff]
    %v624 = vld [vmem:[%s4 + $0x6b0] sm:$0xff]
    %v625 = vld [vmem:[%s4 + $0x6b8] sm:$0xff]
    %v626 = vld [vmem:[%s4 + $0x6c0] sm:$0xff]
    %v627 = vld [vmem:[%s4 + $0x6c8] sm:$0xff]
    %v628 = vld [vmem:[%s4 + $0x6d0] sm:$0xff]
    %v629 = vld [vmem:[%s4 + $0x6d8] sm:$0xff]
    %v630 = vld [vmem:[%s4 + $0x6e0] sm:$0xff]
    %v631 = vld [vmem:[%s4 + $0x6e8] sm:$0xff]
    %v632 = vld [vmem:[%s4 + $0x6f0] sm:$0xff]
    %v633 = vld [vmem:[%s4 + $0x6f8] sm:$0xff]
    %v634 = vld [vmem:[%s4 + $0x700] sm:$0xff]
    %v635 = vld [vmem:[%s4 + $0x708] sm:$0xff]
    %v636 = vld [vmem:[%s4 + $0x710] sm:$0xff]
    %v637 = vld [vmem:[%s4 + $0x718] sm:$0xff]
    %v638 = vld [vmem:[%s4 + $0x720] sm:$0xff]
    %v639 = vld [vmem:[%s4 + $0x728] sm:$0xff]
    %v640 = vld [vmem:[%s4 + $0x730] sm:$0xff]
    %v641 = vld [vmem:[%s4 + $0x738] sm:$0xff]
    %v642 = vld [vmem:[%s4 + $0x740] sm:$0xff]
    %v643 = vld [vmem:[%s4 + $0x748] sm:$0xff]
    %v644 = vld [vmem:[%s4 + $0x750] sm:$0xff]
    %v645 = vld [vmem:[%s4 + $0x758] sm:$0xff]
    %v646 = vld [vmem:[%s4 + $0x760] sm:$0xff]
    %v647 = vld [vmem:[%s4 + $0x768] sm:$0xff]
    %v648 = vld [vmem:[%s4 + $0x770] sm:$0xff]
    %v649 = vld [vmem:[%s4 + $0x778] sm:$0xff]
    %v650 = vld [vmem:[%s4 + $0x780] sm:$0xff]
    %v651 = vld [vmem:[%s4 + $0x788] sm:$0xff]
    %v652 = vld [vmem:[%s4 + $0x790] sm:$0xff]
    %v653 = vld [vmem:[%s4 + $0x798] sm:$0xff]
    %v654 = vld [vmem:[%s4 + $0x7a0] sm:$0xff]
    %v655 = vld [vmem:[%s4 + $0x7a8] sm:$0xff]
    %v656 = vld [vmem:[%s4 + $0x7b0] sm:$0xff]
    %v657 = vld [vmem:[%s4 + $0x7b8] sm:$0xff]
    %v658 = vld [vmem:[%s4 + $0x7c0] sm:$0xff]
    %v659 = vld [vmem:[%s4 + $0x7c8] sm:$0xff]
    %v660 = vld [vmem:[%s4 + $0x7d0] sm:$0xff]
    %v661 = vld [vmem:[%s4 + $0x7d8] sm:$0xff]
    %v662 = vld [vmem:[%s4 + $0x7e0] sm:$0xff]
    %v663 = vld [vmem:[%s4 + $0x7e8] sm:$0xff]
    %v664 = vld [vmem:[%s4 + $0x7f0] sm:$0xff]
    %v665 = vld [vmem:[%s4 + $0x7f8] sm:$0xff]
    %v666 = vld [vmem:[%s5] sm:$0xff]
    %v668 = vlaneseq
    %v669 = vshrl.u32 %v668, 7
    %v670 = vsub.s32 0, %v669
    %v671 = vrot.slane %v666, %v670
    %v672 = vlaneseq
    %v673 = vshrl.u32 %v672, 7
    %v674 = vsub.s32 1, %v673
    %v675 = vrot.slane %v666, %v674
    %v676 = vlaneseq
    %v677 = vshrl.u32 %v676, 7
    %v678 = vsub.s32 2, %v677
    %v679 = vrot.slane %v666, %v678
    %v680 = vlaneseq
    %v681 = vshrl.u32 %v680, 7
    %v682 = vsub.s32 3, %v681
    %v683 = vrot.slane %v666, %v682
    %v684 = vlaneseq
    %v685 = vshrl.u32 %v684, 7
    %v686 = vsub.s32 4, %v685
    %v687 = vrot.slane %v666, %v686
    %v688 = vlaneseq
    %v689 = vshrl.u32 %v688, 7
    %v690 = vsub.s32 5, %v689
    %v691 = vrot.slane %v666, %v690
    %v692 = vlaneseq
    %v693 = vshrl.u32 %v692, 7
    %v694 = vsub.s32 6, %v693
    %v695 = vrot.slane %v666, %v694
    %v696 = vlaneseq
    %v697 = vshrl.u32 %v696, 7
    %v698 = vsub.s32 7, %v697
    %v699 = vrot.slane %v666, %v698
    %v964 = vunpack.c.l.b16 %v410
    %v965 = vunpack.c.h.b16 %v410
    %v966 = vunpack.c.l.b16 %v411
    %v967 = vunpack.c.h.b16 %v411
    %v968 = vunpack.c.l.b16 %v412
    %v969 = vunpack.c.h.b16 %v412
    %v970 = vunpack.c.l.b16 %v413
    %v971 = vunpack.c.h.b16 %v413
    %v972 = vunpack.c.l.b16 %v414
    %v973 = vunpack.c.h.b16 %v414
    %v974 = vunpack.c.l.b16 %v415
    %v975 = vunpack.c.h.b16 %v415
    %v976 = vunpack.c.l.b16 %v416
    %v977 = vunpack.c.h.b16 %v416
    %v978 = vunpack.c.l.b16 %v417
    %v979 = vunpack.c.h.b16 %v417
    %v980 = vunpack.c.l.b16 %v418
    %v981 = vunpack.c.h.b16 %v418
    %v982 = vunpack.c.l.b16 %v419
    %v983 = vunpack.c.h.b16 %v419
    %v984 = vunpack.c.l.b16 %v420
    %v985 = vunpack.c.h.b16 %v420
    %v986 = vunpack.c.l.b16 %v421
    %v987 = vunpack.c.h.b16 %v421
    %v988 = vunpack.c.l.b16 %v422
    %v989 = vunpack.c.h.b16 %v422
    %v990 = vunpack.c.l.b16 %v423
    %v991 = vunpack.c.h.b16 %v423
    %v992 = vunpack.c.l.b16 %v424
    %v993 = vunpack.c.h.b16 %v424
    %v994 = vunpack.c.l.b16 %v425
    %v995 = vunpack.c.h.b16 %v425
    %v996 = vunpack.c.l.b16 %v426
    %v997 = vunpack.c.h.b16 %v426
    %v998 = vunpack.c.l.b16 %v427
    %v999 = vunpack.c.h.b16 %v427
    %v1000 = vunpack.c.l.b16 %v428
    %v1001 = vunpack.c.h.b16 %v428
    %v1002 = vunpack.c.l.b16 %v429
    %v1003 = vunpack.c.h.b16 %v429
    %v1004 = vunpack.c.l.b16 %v430
    %v1005 = vunpack.c.h.b16 %v430
    %v1006 = vunpack.c.l.b16 %v431
    %v1007 = vunpack.c.h.b16 %v431
    %v1008 = vunpack.c.l.b16 %v432
    %v1009 = vunpack.c.h.b16 %v432
    %v1010 = vunpack.c.l.b16 %v433
    %v1011 = vunpack.c.h.b16 %v433
    %v1012 = vunpack.c.l.b16 %v434
    %v1013 = vunpack.c.h.b16 %v434
    %v1014 = vunpack.c.l.b16 %v435
    %v1015 = vunpack.c.h.b16 %v435
    %v1016 = vunpack.c.l.b16 %v436
    %v1017 = vunpack.c.h.b16 %v436
    %v1018 = vunpack.c.l.b16 %v437
    %v1019 = vunpack.c.h.b16 %v437
    %v1020 = vunpack.c.l.b16 %v438
    %v1021 = vunpack.c.h.b16 %v438
    %v1022 = vunpack.c.l.b16 %v439
    %v1023 = vunpack.c.h.b16 %v439
    %v1024 = vunpack.c.l.b16 %v440
    %v1025 = vunpack.c.h.b16 %v440
    %v1026 = vunpack.c.l.b16 %v441
    %v1027 = vunpack.c.h.b16 %v441
    %v1028 = vunpack.c.l.b16 %v442
    %v1029 = vunpack.c.h.b16 %v442
    %v1030 = vunpack.c.l.b16 %v443
    %v1031 = vunpack.c.h.b16 %v443
    %v1032 = vunpack.c.l.b16 %v444
    %v1033 = vunpack.c.h.b16 %v444
    %v1034 = vunpack.c.l.b16 %v445
    %v1035 = vunpack.c.h.b16 %v445
    %v1036 = vunpack.c.l.b16 %v446
    %v1037 = vunpack.c.h.b16 %v446
    %v1038 = vunpack.c.l.b16 %v447
    %v1039 = vunpack.c.h.b16 %v447
    %v1040 = vunpack.c.l.b16 %v448
    %v1041 = vunpack.c.h.b16 %v448
    %v1042 = vunpack.c.l.b16 %v449
    %v1043 = vunpack.c.h.b16 %v449
    %v1044 = vunpack.c.l.b16 %v450
    %v1045 = vunpack.c.h.b16 %v450
    %v1046 = vunpack.c.l.b16 %v451
    %v1047 = vunpack.c.h.b16 %v451
    %v1048 = vunpack.c.l.b16 %v452
    %v1049 = vunpack.c.h.b16 %v452
    %v1050 = vunpack.c.l.b16 %v453
    %v1051 = vunpack.c.h.b16 %v453
    %v1052 = vunpack.c.l.b16 %v454
    %v1053 = vunpack.c.h.b16 %v454
    %v1054 = vunpack.c.l.b16 %v455
    %v1055 = vunpack.c.h.b16 %v455
    %v1056 = vunpack.c.l.b16 %v456
    %v1057 = vunpack.c.h.b16 %v456
    %v1058 = vunpack.c.l.b16 %v457
    %v1059 = vunpack.c.h.b16 %v457
    %v1060 = vunpack.c.l.b16 %v458
    %v1061 = vunpack.c.h.b16 %v458
    %v1062 = vunpack.c.l.b16 %v459
    %v1063 = vunpack.c.h.b16 %v459
    %v1064 = vunpack.c.l.b16 %v460
    %v1065 = vunpack.c.h.b16 %v460
    %v1066 = vunpack.c.l.b16 %v461
    %v1067 = vunpack.c.h.b16 %v461
    %v1068 = vunpack.c.l.b16 %v462
    %v1069 = vunpack.c.h.b16 %v462
    %v1070 = vunpack.c.l.b16 %v463
    %v1071 = vunpack.c.h.b16 %v463
    %v1072 = vunpack.c.l.b16 %v464
    %v1073 = vunpack.c.h.b16 %v464
    %v1074 = vunpack.c.l.b16 %v465
    %v1075 = vunpack.c.h.b16 %v465
    %v1076 = vunpack.c.l.b16 %v466
    %v1077 = vunpack.c.h.b16 %v466
    %v1078 = vunpack.c.l.b16 %v467
    %v1079 = vunpack.c.h.b16 %v467
    %v1080 = vunpack.c.l.b16 %v468
    %v1081 = vunpack.c.h.b16 %v468
    %v1082 = vunpack.c.l.b16 %v469
    %v1083 = vunpack.c.h.b16 %v469
    %v1084 = vunpack.c.l.b16 %v470
    %v1085 = vunpack.c.h.b16 %v470
    %v1086 = vunpack.c.l.b16 %v471
    %v1087 = vunpack.c.h.b16 %v471
    %v1088 = vunpack.c.l.b16 %v472
    %v1089 = vunpack.c.h.b16 %v472
    %v1090 = vunpack.c.l.b16 %v473
    %v1091 = vunpack.c.h.b16 %v473
    %v1092 = vunpack.c.l.b16 %v474
    %v1093 = vunpack.c.h.b16 %v474
    %v1094 = vunpack.c.l.b16 %v475
    %v1095 = vunpack.c.h.b16 %v475
    %v1096 = vunpack.c.l.b16 %v476
    %v1097 = vunpack.c.h.b16 %v476
    %v1098 = vunpack.c.l.b16 %v477
    %v1099 = vunpack.c.h.b16 %v477
    %v1100 = vunpack.c.l.b16 %v478
    %v1101 = vunpack.c.h.b16 %v478
    %v1102 = vunpack.c.l.b16 %v479
    %v1103 = vunpack.c.h.b16 %v479
    %v1104 = vunpack.c.l.b16 %v480
    %v1105 = vunpack.c.h.b16 %v480
    %v1106 = vunpack.c.l.b16 %v481
    %v1107 = vunpack.c.h.b16 %v481
    %v1108 = vunpack.c.l.b16 %v482
    %v1109 = vunpack.c.h.b16 %v482
    %v1110 = vunpack.c.l.b16 %v483
    %v1111 = vunpack.c.h.b16 %v483
    %v1112 = vunpack.c.l.b16 %v484
    %v1113 = vunpack.c.h.b16 %v484
    %v1114 = vunpack.c.l.b16 %v485
    %v1115 = vunpack.c.h.b16 %v485
    %v1116 = vunpack.c.l.b16 %v486
    %v1117 = vunpack.c.h.b16 %v486
    %v1118 = vunpack.c.l.b16 %v487
    %v1119 = vunpack.c.h.b16 %v487
    %v1120 = vunpack.c.l.b16 %v488
    %v1121 = vunpack.c.h.b16 %v488
    %v1122 = vunpack.c.l.b16 %v489
    %v1123 = vunpack.c.h.b16 %v489
    %v1124 = vunpack.c.l.b16 %v490
    %v1125 = vunpack.c.h.b16 %v490
    %v1126 = vunpack.c.l.b16 %v491
    %v1127 = vunpack.c.h.b16 %v491
    %v1128 = vunpack.c.l.b16 %v492
    %v1129 = vunpack.c.h.b16 %v492
    %v1130 = vunpack.c.l.b16 %v493
    %v1131 = vunpack.c.h.b16 %v493
    %v1132 = vunpack.c.l.b16 %v494
    %v1133 = vunpack.c.h.b16 %v494
    %v1134 = vunpack.c.l.b16 %v495
    %v1135 = vunpack.c.h.b16 %v495
    %v1136 = vunpack.c.l.b16 %v496
    %v1137 = vunpack.c.h.b16 %v496
    %v1138 = vunpack.c.l.b16 %v497
    %v1139 = vunpack.c.h.b16 %v497
    %v1140 = vunpack.c.l.b16 %v498
    %v1141 = vunpack.c.h.b16 %v498
    %v1142 = vunpack.c.l.b16 %v499
    %v1143 = vunpack.c.h.b16 %v499
    %v1144 = vunpack.c.l.b16 %v500
    %v1145 = vunpack.c.h.b16 %v500
    %v1146 = vunpack.c.l.b16 %v501
    %v1147 = vunpack.c.h.b16 %v501
    %v1148 = vunpack.c.l.b16 %v502
    %v1149 = vunpack.c.h.b16 %v502
    %v1150 = vunpack.c.l.b16 %v503
    %v1151 = vunpack.c.h.b16 %v503
    %v1152 = vunpack.c.l.b16 %v504
    %v1153 = vunpack.c.h.b16 %v504
    %v1154 = vunpack.c.l.b16 %v505
    %v1155 = vunpack.c.h.b16 %v505
    %v1156 = vunpack.c.l.b16 %v506
    %v1157 = vunpack.c.h.b16 %v506
    %v1158 = vunpack.c.l.b16 %v507
    %v1159 = vunpack.c.h.b16 %v507
    %v1160 = vunpack.c.l.b16 %v508
    %v1161 = vunpack.c.h.b16 %v508
    %v1162 = vunpack.c.l.b16 %v509
    %v1163 = vunpack.c.h.b16 %v509
    %v1164 = vunpack.c.l.b16 %v510
    %v1165 = vunpack.c.h.b16 %v510
    %v1166 = vunpack.c.l.b16 %v511
    %v1167 = vunpack.c.h.b16 %v511
    %v1168 = vunpack.c.l.b16 %v512
    %v1169 = vunpack.c.h.b16 %v512
    %v1170 = vunpack.c.l.b16 %v513
    %v1171 = vunpack.c.h.b16 %v513
    %v1172 = vunpack.c.l.b16 %v514
    %v1173 = vunpack.c.h.b16 %v514
    %v1174 = vunpack.c.l.b16 %v515
    %v1175 = vunpack.c.h.b16 %v515
    %v1176 = vunpack.c.l.b16 %v516
    %v1177 = vunpack.c.h.b16 %v516
    %v1178 = vunpack.c.l.b16 %v517
    %v1179 = vunpack.c.h.b16 %v517
    %v1180 = vunpack.c.l.b16 %v518
    %v1181 = vunpack.c.h.b16 %v518
    %v1182 = vunpack.c.l.b16 %v519
    %v1183 = vunpack.c.h.b16 %v519
    %v1184 = vunpack.c.l.b16 %v520
    %v1185 = vunpack.c.h.b16 %v520
    %v1186 = vunpack.c.l.b16 %v521
    %v1187 = vunpack.c.h.b16 %v521
    %v1188 = vunpack.c.l.b16 %v522
    %v1189 = vunpack.c.h.b16 %v522
    %v1190 = vunpack.c.l.b16 %v523
    %v1191 = vunpack.c.h.b16 %v523
    %v1192 = vunpack.c.l.b16 %v524
    %v1193 = vunpack.c.h.b16 %v524
    %v1194 = vunpack.c.l.b16 %v525
    %v1195 = vunpack.c.h.b16 %v525
    %v1196 = vunpack.c.l.b16 %v526
    %v1197 = vunpack.c.h.b16 %v526
    %v1198 = vunpack.c.l.b16 %v527
    %v1199 = vunpack.c.h.b16 %v527
    %v1200 = vunpack.c.l.b16 %v528
    %v1201 = vunpack.c.h.b16 %v528
    %v1202 = vunpack.c.l.b16 %v529
    %v1203 = vunpack.c.h.b16 %v529
    %v1204 = vunpack.c.l.b16 %v530
    %v1205 = vunpack.c.h.b16 %v530
    %v1206 = vunpack.c.l.b16 %v531
    %v1207 = vunpack.c.h.b16 %v531
    %v1208 = vunpack.c.l.b16 %v532
    %v1209 = vunpack.c.h.b16 %v532
    %v1210 = vunpack.c.l.b16 %v533
    %v1211 = vunpack.c.h.b16 %v533
    %v1212 = vunpack.c.l.b16 %v534
    %v1213 = vunpack.c.h.b16 %v534
    %v1214 = vunpack.c.l.b16 %v535
    %v1215 = vunpack.c.h.b16 %v535
    %v1216 = vunpack.c.l.b16 %v536
    %v1217 = vunpack.c.h.b16 %v536
    %v1218 = vunpack.c.l.b16 %v537
    %v1219 = vunpack.c.h.b16 %v537
    %v1220 = vunpack.c.l.b16 %v538
    %v1221 = vunpack.c.h.b16 %v538
    %v1222 = vunpack.c.l.b16 %v539
    %v1223 = vunpack.c.h.b16 %v539
    %v1224 = vunpack.c.l.b16 %v540
    %v1225 = vunpack.c.h.b16 %v540
    %v1226 = vunpack.c.l.b16 %v541
    %v1227 = vunpack.c.h.b16 %v541
    %v1228 = vunpack.c.l.b16 %v542
    %v1229 = vunpack.c.h.b16 %v542
    %v1230 = vunpack.c.l.b16 %v543
    %v1231 = vunpack.c.h.b16 %v543
    %v1232 = vunpack.c.l.b16 %v544
    %v1233 = vunpack.c.h.b16 %v544
    %v1234 = vunpack.c.l.b16 %v545
    %v1235 = vunpack.c.h.b16 %v545
    %v1236 = vunpack.c.l.b16 %v546
    %v1237 = vunpack.c.h.b16 %v546
    %v1238 = vunpack.c.l.b16 %v547
    %v1239 = vunpack.c.h.b16 %v547
    %v1240 = vunpack.c.l.b16 %v548
    %v1241 = vunpack.c.h.b16 %v548
    %v1242 = vunpack.c.l.b16 %v549
    %v1243 = vunpack.c.h.b16 %v549
    %v1244 = vunpack.c.l.b16 %v550
    %v1245 = vunpack.c.h.b16 %v550
    %v1246 = vunpack.c.l.b16 %v551
    %v1247 = vunpack.c.h.b16 %v551
    %v1248 = vunpack.c.l.b16 %v552
    %v1249 = vunpack.c.h.b16 %v552
    %v1250 = vunpack.c.l.b16 %v553
    %v1251 = vunpack.c.h.b16 %v553
    %v1252 = vunpack.c.l.b16 %v554
    %v1253 = vunpack.c.h.b16 %v554
    %v1254 = vunpack.c.l.b16 %v555
    %v1255 = vunpack.c.h.b16 %v555
    %v1256 = vunpack.c.l.b16 %v556
    %v1257 = vunpack.c.h.b16 %v556
    %v1258 = vunpack.c.l.b16 %v557
    %v1259 = vunpack.c.h.b16 %v557
    %v1260 = vunpack.c.l.b16 %v558
    %v1261 = vunpack.c.h.b16 %v558
    %v1262 = vunpack.c.l.b16 %v559
    %v1263 = vunpack.c.h.b16 %v559
    %v1264 = vunpack.c.l.b16 %v560
    %v1265 = vunpack.c.h.b16 %v560
    %v1266 = vunpack.c.l.b16 %v561
    %v1267 = vunpack.c.h.b16 %v561
    %v1268 = vunpack.c.l.b16 %v562
    %v1269 = vunpack.c.h.b16 %v562
    %v1270 = vunpack.c.l.b16 %v563
    %v1271 = vunpack.c.h.b16 %v563
    %v1272 = vunpack.c.l.b16 %v564
    %v1273 = vunpack.c.h.b16 %v564
    %v1274 = vunpack.c.l.b16 %v565
    %v1275 = vunpack.c.h.b16 %v565
    %v1276 = vunpack.c.l.b16 %v566
    %v1277 = vunpack.c.h.b16 %v566
    %v1278 = vunpack.c.l.b16 %v567
    %v1279 = vunpack.c.h.b16 %v567
    %v1280 = vunpack.c.l.b16 %v568
    %v1281 = vunpack.c.h.b16 %v568
    %v1282 = vunpack.c.l.b16 %v569
    %v1283 = vunpack.c.h.b16 %v569
    %v1284 = vunpack.c.l.b16 %v570
    %v1285 = vunpack.c.h.b16 %v570
    %v1286 = vunpack.c.l.b16 %v571
    %v1287 = vunpack.c.h.b16 %v571
    %v1288 = vunpack.c.l.b16 %v572
    %v1289 = vunpack.c.h.b16 %v572
    %v1290 = vunpack.c.l.b16 %v573
    %v1291 = vunpack.c.h.b16 %v573
    %v1292 = vunpack.c.l.b16 %v574
    %v1293 = vunpack.c.h.b16 %v574
    %v1294 = vunpack.c.l.b16 %v575
    %v1295 = vunpack.c.h.b16 %v575
    %v1296 = vunpack.c.l.b16 %v576
    %v1297 = vunpack.c.h.b16 %v576
    %v1298 = vunpack.c.l.b16 %v577
    %v1299 = vunpack.c.h.b16 %v577
    %v1300 = vunpack.c.l.b16 %v578
    %v1301 = vunpack.c.h.b16 %v578
    %v1302 = vunpack.c.l.b16 %v579
    %v1303 = vunpack.c.h.b16 %v579
    %v1304 = vunpack.c.l.b16 %v580
    %v1305 = vunpack.c.h.b16 %v580
    %v1306 = vunpack.c.l.b16 %v581
    %v1307 = vunpack.c.h.b16 %v581
    %v1308 = vunpack.c.l.b16 %v582
    %v1309 = vunpack.c.h.b16 %v582
    %v1310 = vunpack.c.l.b16 %v583
    %v1311 = vunpack.c.h.b16 %v583
    %v1312 = vunpack.c.l.b16 %v584
    %v1313 = vunpack.c.h.b16 %v584
    %v1314 = vunpack.c.l.b16 %v585
    %v1315 = vunpack.c.h.b16 %v585
    %v1316 = vunpack.c.l.b16 %v586
    %v1317 = vunpack.c.h.b16 %v586
    %v1318 = vunpack.c.l.b16 %v587
    %v1319 = vunpack.c.h.b16 %v587
    %v1320 = vunpack.c.l.b16 %v588
    %v1321 = vunpack.c.h.b16 %v588
    %v1322 = vunpack.c.l.b16 %v589
    %v1323 = vunpack.c.h.b16 %v589
    %v1324 = vunpack.c.l.b16 %v590
    %v1325 = vunpack.c.h.b16 %v590
    %v1326 = vunpack.c.l.b16 %v591
    %v1327 = vunpack.c.h.b16 %v591
    %v1328 = vunpack.c.l.b16 %v592
    %v1329 = vunpack.c.h.b16 %v592
    %v1330 = vunpack.c.l.b16 %v593
    %v1331 = vunpack.c.h.b16 %v593
    %v1332 = vunpack.c.l.b16 %v594
    %v1333 = vunpack.c.h.b16 %v594
    %v1334 = vunpack.c.l.b16 %v595
    %v1335 = vunpack.c.h.b16 %v595
    %v1336 = vunpack.c.l.b16 %v596
    %v1337 = vunpack.c.h.b16 %v596
    %v1338 = vunpack.c.l.b16 %v597
    %v1339 = vunpack.c.h.b16 %v597
    %v1340 = vunpack.c.l.b16 %v598
    %v1341 = vunpack.c.h.b16 %v598
    %v1342 = vunpack.c.l.b16 %v599
    %v1343 = vunpack.c.h.b16 %v599
    %v1344 = vunpack.c.l.b16 %v600
    %v1345 = vunpack.c.h.b16 %v600
    %v1346 = vunpack.c.l.b16 %v601
    %v1347 = vunpack.c.h.b16 %v601
    %v1348 = vunpack.c.l.b16 %v602
    %v1349 = vunpack.c.h.b16 %v602
    %v1350 = vunpack.c.l.b16 %v603
    %v1351 = vunpack.c.h.b16 %v603
    %v1352 = vunpack.c.l.b16 %v604
    %v1353 = vunpack.c.h.b16 %v604
    %v1354 = vunpack.c.l.b16 %v605
    %v1355 = vunpack.c.h.b16 %v605
    %v1356 = vunpack.c.l.b16 %v606
    %v1357 = vunpack.c.h.b16 %v606
    %v1358 = vunpack.c.l.b16 %v607
    %v1359 = vunpack.c.h.b16 %v607
    %v1360 = vunpack.c.l.b16 %v608
    %v1361 = vunpack.c.h.b16 %v608
    %v1362 = vunpack.c.l.b16 %v609
    %v1363 = vunpack.c.h.b16 %v609
    %v1364 = vunpack.c.l.b16 %v610
    %v1365 = vunpack.c.h.b16 %v610
    %v1366 = vunpack.c.l.b16 %v611
    %v1367 = vunpack.c.h.b16 %v611
    %v1368 = vunpack.c.l.b16 %v612
    %v1369 = vunpack.c.h.b16 %v612
    %v1370 = vunpack.c.l.b16 %v613
    %v1371 = vunpack.c.h.b16 %v613
    %v1372 = vunpack.c.l.b16 %v614
    %v1373 = vunpack.c.h.b16 %v614
    %v1374 = vunpack.c.l.b16 %v615
    %v1375 = vunpack.c.h.b16 %v615
    %v1376 = vunpack.c.l.b16 %v616
    %v1377 = vunpack.c.h.b16 %v616
    %v1378 = vunpack.c.l.b16 %v617
    %v1379 = vunpack.c.h.b16 %v617
    %v1380 = vunpack.c.l.b16 %v618
    %v1381 = vunpack.c.h.b16 %v618
    %v1382 = vunpack.c.l.b16 %v619
    %v1383 = vunpack.c.h.b16 %v619
    %v1384 = vunpack.c.l.b16 %v620
    %v1385 = vunpack.c.h.b16 %v620
    %v1386 = vunpack.c.l.b16 %v621
    %v1387 = vunpack.c.h.b16 %v621
    %v1388 = vunpack.c.l.b16 %v622
    %v1389 = vunpack.c.h.b16 %v622
    %v1390 = vunpack.c.l.b16 %v623
    %v1391 = vunpack.c.h.b16 %v623
    %v1392 = vunpack.c.l.b16 %v624
    %v1393 = vunpack.c.h.b16 %v624
    %v1394 = vunpack.c.l.b16 %v625
    %v1395 = vunpack.c.h.b16 %v625
    %v1396 = vunpack.c.l.b16 %v626
    %v1397 = vunpack.c.h.b16 %v626
    %v1398 = vunpack.c.l.b16 %v627
    %v1399 = vunpack.c.h.b16 %v627
    %v1400 = vunpack.c.l.b16 %v628
    %v1401 = vunpack.c.h.b16 %v628
    %v1402 = vunpack.c.l.b16 %v629
    %v1403 = vunpack.c.h.b16 %v629
    %v1404 = vunpack.c.l.b16 %v630
    %v1405 = vunpack.c.h.b16 %v630
    %v1406 = vunpack.c.l.b16 %v631
    %v1407 = vunpack.c.h.b16 %v631
    %v1408 = vunpack.c.l.b16 %v632
    %v1409 = vunpack.c.h.b16 %v632
    %v1410 = vunpack.c.l.b16 %v633
    %v1411 = vunpack.c.h.b16 %v633
    %v1412 = vunpack.c.l.b16 %v634
    %v1413 = vunpack.c.h.b16 %v634
    %v1414 = vunpack.c.l.b16 %v635
    %v1415 = vunpack.c.h.b16 %v635
    %v1416 = vunpack.c.l.b16 %v636
    %v1417 = vunpack.c.h.b16 %v636
    %v1418 = vunpack.c.l.b16 %v637
    %v1419 = vunpack.c.h.b16 %v637
    %v1420 = vunpack.c.l.b16 %v638
    %v1421 = vunpack.c.h.b16 %v638
    %v1422 = vunpack.c.l.b16 %v639
    %v1423 = vunpack.c.h.b16 %v639
    %v1424 = vunpack.c.l.b16 %v640
    %v1425 = vunpack.c.h.b16 %v640
    %v1426 = vunpack.c.l.b16 %v641
    %v1427 = vunpack.c.h.b16 %v641
    %v1428 = vunpack.c.l.b16 %v642
    %v1429 = vunpack.c.h.b16 %v642
    %v1430 = vunpack.c.l.b16 %v643
    %v1431 = vunpack.c.h.b16 %v643
    %v1432 = vunpack.c.l.b16 %v644
    %v1433 = vunpack.c.h.b16 %v644
    %v1434 = vunpack.c.l.b16 %v645
    %v1435 = vunpack.c.h.b16 %v645
    %v1436 = vunpack.c.l.b16 %v646
    %v1437 = vunpack.c.h.b16 %v646
    %v1438 = vunpack.c.l.b16 %v647
    %v1439 = vunpack.c.h.b16 %v647
    %v1440 = vunpack.c.l.b16 %v648
    %v1441 = vunpack.c.h.b16 %v648
    %v1442 = vunpack.c.l.b16 %v649
    %v1443 = vunpack.c.h.b16 %v649
    %v1444 = vunpack.c.l.b16 %v650
    %v1445 = vunpack.c.h.b16 %v650
    %v1446 = vunpack.c.l.b16 %v651
    %v1447 = vunpack.c.h.b16 %v651
    %v1448 = vunpack.c.l.b16 %v652
    %v1449 = vunpack.c.h.b16 %v652
    %v1450 = vunpack.c.l.b16 %v653
    %v1451 = vunpack.c.h.b16 %v653
    %v1452 = vunpack.c.l.b16 %v654
    %v1453 = vunpack.c.h.b16 %v654
    %v1454 = vunpack.c.l.b16 %v655
    %v1455 = vunpack.c.h.b16 %v655
    %v1456 = vunpack.c.l.b16 %v656
    %v1457 = vunpack.c.h.b16 %v656
    %v1458 = vunpack.c.l.b16 %v657
    %v1459 = vunpack.c.h.b16 %v657
    %v1460 = vunpack.c.l.b16 %v658
    %v1461 = vunpack.c.h.b16 %v658
    %v1462 = vunpack.c.l.b16 %v659
    %v1463 = vunpack.c.h.b16 %v659
    %v1464 = vunpack.c.l.b16 %v660
    %v1465 = vunpack.c.h.b16 %v660
    %v1466 = vunpack.c.l.b16 %v661
    %v1467 = vunpack.c.h.b16 %v661
    %v1468 = vunpack.c.l.b16 %v662
    %v1469 = vunpack.c.h.b16 %v662
    %v1470 = vunpack.c.l.b16 %v663
    %v1471 = vunpack.c.h.b16 %v663
    %v1472 = vunpack.c.l.b16 %v664
    %v1473 = vunpack.c.h.b16 %v664
    %v1474 = vunpack.c.l.b16 %v665
    %v1475 = vunpack.c.h.b16 %v665
    %v1476 = vpack.c.b16 %v972, %v964
    %v1477 = vpack.c.b16 %v973, %v965
    %v1478 = vpack.c.b16 %v974, %v966
    %v1479 = vpack.c.b16 %v975, %v967
    %v1480 = vpack.c.b16 %v976, %v968
    %v1481 = vpack.c.b16 %v977, %v969
    %v1482 = vpack.c.b16 %v978, %v970
    %v1483 = vpack.c.b16 %v979, %v971
    %v1484 = vpack.c.b16 %v988, %v980
    %v1485 = vpack.c.b16 %v989, %v981
    %v1486 = vpack.c.b16 %v990, %v982
    %v1487 = vpack.c.b16 %v991, %v983
    %v1488 = vpack.c.b16 %v992, %v984
    %v1489 = vpack.c.b16 %v993, %v985
    %v1490 = vpack.c.b16 %v994, %v986
    %v1491 = vpack.c.b16 %v995, %v987
    %v1492 = vpack.c.b16 %v1004, %v996
    %v1493 = vpack.c.b16 %v1005, %v997
    %v1494 = vpack.c.b16 %v1006, %v998
    %v1495 = vpack.c.b16 %v1007, %v999
    %v1496 = vpack.c.b16 %v1008, %v1000
    %v1497 = vpack.c.b16 %v1009, %v1001
    %v1498 = vpack.c.b16 %v1010, %v1002
    %v1499 = vpack.c.b16 %v1011, %v1003
    %v1500 = vpack.c.b16 %v1020, %v1012
    %v1501 = vpack.c.b16 %v1021, %v1013
    %v1502 = vpack.c.b16 %v1022, %v1014
    %v1503 = vpack.c.b16 %v1023, %v1015
    %v1504 = vpack.c.b16 %v1024, %v1016
    %v1505 = vpack.c.b16 %v1025, %v1017
    %v1506 = vpack.c.b16 %v1026, %v1018
    %v1507 = vpack.c.b16 %v1027, %v1019
    %v1508 = vpack.c.b16 %v1036, %v1028
    %v1509 = vpack.c.b16 %v1037, %v1029
    %v1510 = vpack.c.b16 %v1038, %v1030
    %v1511 = vpack.c.b16 %v1039, %v1031
    %v1512 = vpack.c.b16 %v1040, %v1032
    %v1513 = vpack.c.b16 %v1041, %v1033
    %v1514 = vpack.c.b16 %v1042, %v1034
    %v1515 = vpack.c.b16 %v1043, %v1035
    %v1516 = vpack.c.b16 %v1052, %v1044
    %v1517 = vpack.c.b16 %v1053, %v1045
    %v1518 = vpack.c.b16 %v1054, %v1046
    %v1519 = vpack.c.b16 %v1055, %v1047
    %v1520 = vpack.c.b16 %v1056, %v1048
    %v1521 = vpack.c.b16 %v1057, %v1049
    %v1522 = vpack.c.b16 %v1058, %v1050
    %v1523 = vpack.c.b16 %v1059, %v1051
    %v1524 = vpack.c.b16 %v1068, %v1060
    %v1525 = vpack.c.b16 %v1069, %v1061
    %v1526 = vpack.c.b16 %v1070, %v1062
    %v1527 = vpack.c.b16 %v1071, %v1063
    %v1528 = vpack.c.b16 %v1072, %v1064
    %v1529 = vpack.c.b16 %v1073, %v1065
    %v1530 = vpack.c.b16 %v1074, %v1066
    %v1531 = vpack.c.b16 %v1075, %v1067
    %v1532 = vpack.c.b16 %v1084, %v1076
    %v1533 = vpack.c.b16 %v1085, %v1077
    %v1534 = vpack.c.b16 %v1086, %v1078
    %v1535 = vpack.c.b16 %v1087, %v1079
    %v1536 = vpack.c.b16 %v1088, %v1080
    %v1537 = vpack.c.b16 %v1089, %v1081
    %v1538 = vpack.c.b16 %v1090, %v1082
    %v1539 = vpack.c.b16 %v1091, %v1083
    %v1540 = vpack.c.b16 %v1100, %v1092
    %v1541 = vpack.c.b16 %v1101, %v1093
    %v1542 = vpack.c.b16 %v1102, %v1094
    %v1543 = vpack.c.b16 %v1103, %v1095
    %v1544 = vpack.c.b16 %v1104, %v1096
    %v1545 = vpack.c.b16 %v1105, %v1097
    %v1546 = vpack.c.b16 %v1106, %v1098
    %v1547 = vpack.c.b16 %v1107, %v1099
    %v1548 = vpack.c.b16 %v1116, %v1108
    %v1549 = vpack.c.b16 %v1117, %v1109
    %v1550 = vpack.c.b16 %v1118, %v1110
    %v1551 = vpack.c.b16 %v1119, %v1111
    %v1552 = vpack.c.b16 %v1120, %v1112
    %v1553 = vpack.c.b16 %v1121, %v1113
    %v1554 = vpack.c.b16 %v1122, %v1114
    %v1555 = vpack.c.b16 %v1123, %v1115
    %v1556 = vpack.c.b16 %v1132, %v1124
    %v1557 = vpack.c.b16 %v1133, %v1125
    %v1558 = vpack.c.b16 %v1134, %v1126
    %v1559 = vpack.c.b16 %v1135, %v1127
    %v1560 = vpack.c.b16 %v1136, %v1128
    %v1561 = vpack.c.b16 %v1137, %v1129
    %v1562 = vpack.c.b16 %v1138, %v1130
    %v1563 = vpack.c.b16 %v1139, %v1131
    %v1564 = vpack.c.b16 %v1148, %v1140
    %v1565 = vpack.c.b16 %v1149, %v1141
    %v1566 = vpack.c.b16 %v1150, %v1142
    %v1567 = vpack.c.b16 %v1151, %v1143
    %v1568 = vpack.c.b16 %v1152, %v1144
    %v1569 = vpack.c.b16 %v1153, %v1145
    %v1570 = vpack.c.b16 %v1154, %v1146
    %v1571 = vpack.c.b16 %v1155, %v1147
    %v1572 = vpack.c.b16 %v1164, %v1156
    %v1573 = vpack.c.b16 %v1165, %v1157
    %v1574 = vpack.c.b16 %v1166, %v1158
    %v1575 = vpack.c.b16 %v1167, %v1159
    %v1576 = vpack.c.b16 %v1168, %v1160
    %v1577 = vpack.c.b16 %v1169, %v1161
    %v1578 = vpack.c.b16 %v1170, %v1162
    %v1579 = vpack.c.b16 %v1171, %v1163
    %v1580 = vpack.c.b16 %v1180, %v1172
    %v1581 = vpack.c.b16 %v1181, %v1173
    %v1582 = vpack.c.b16 %v1182, %v1174
    %v1583 = vpack.c.b16 %v1183, %v1175
    %v1584 = vpack.c.b16 %v1184, %v1176
    %v1585 = vpack.c.b16 %v1185, %v1177
    %v1586 = vpack.c.b16 %v1186, %v1178
    %v1587 = vpack.c.b16 %v1187, %v1179
    %v1588 = vpack.c.b16 %v1196, %v1188
    %v1589 = vpack.c.b16 %v1197, %v1189
    %v1590 = vpack.c.b16 %v1198, %v1190
    %v1591 = vpack.c.b16 %v1199, %v1191
    %v1592 = vpack.c.b16 %v1200, %v1192
    %v1593 = vpack.c.b16 %v1201, %v1193
    %v1594 = vpack.c.b16 %v1202, %v1194
    %v1595 = vpack.c.b16 %v1203, %v1195
    %v1596 = vpack.c.b16 %v1212, %v1204
    %v1597 = vpack.c.b16 %v1213, %v1205
    %v1598 = vpack.c.b16 %v1214, %v1206
    %v1599 = vpack.c.b16 %v1215, %v1207
    %v1600 = vpack.c.b16 %v1216, %v1208
    %v1601 = vpack.c.b16 %v1217, %v1209
    %v1602 = vpack.c.b16 %v1218, %v1210
    %v1603 = vpack.c.b16 %v1219, %v1211
    %v1604 = vpack.c.b16 %v1228, %v1220
    %v1605 = vpack.c.b16 %v1229, %v1221
    %v1606 = vpack.c.b16 %v1230, %v1222
    %v1607 = vpack.c.b16 %v1231, %v1223
    %v1608 = vpack.c.b16 %v1232, %v1224
    %v1609 = vpack.c.b16 %v1233, %v1225
    %v1610 = vpack.c.b16 %v1234, %v1226
    %v1611 = vpack.c.b16 %v1235, %v1227
    %v1612 = vpack.c.b16 %v1244, %v1236
    %v1613 = vpack.c.b16 %v1245, %v1237
    %v1614 = vpack.c.b16 %v1246, %v1238
    %v1615 = vpack.c.b16 %v1247, %v1239
    %v1616 = vpack.c.b16 %v1248, %v1240
    %v1617 = vpack.c.b16 %v1249, %v1241
    %v1618 = vpack.c.b16 %v1250, %v1242
    %v1619 = vpack.c.b16 %v1251, %v1243
    %v1620 = vpack.c.b16 %v1260, %v1252
    %v1621 = vpack.c.b16 %v1261, %v1253
    %v1622 = vpack.c.b16 %v1262, %v1254
    %v1623 = vpack.c.b16 %v1263, %v1255
    %v1624 = vpack.c.b16 %v1264, %v1256
    %v1625 = vpack.c.b16 %v1265, %v1257
    %v1626 = vpack.c.b16 %v1266, %v1258
    %v1627 = vpack.c.b16 %v1267, %v1259
    %v1628 = vpack.c.b16 %v1276, %v1268
    %v1629 = vpack.c.b16 %v1277, %v1269
    %v1630 = vpack.c.b16 %v1278, %v1270
    %v1631 = vpack.c.b16 %v1279, %v1271
    %v1632 = vpack.c.b16 %v1280, %v1272
    %v1633 = vpack.c.b16 %v1281, %v1273
    %v1634 = vpack.c.b16 %v1282, %v1274
    %v1635 = vpack.c.b16 %v1283, %v1275
    %v1636 = vpack.c.b16 %v1292, %v1284
    %v1637 = vpack.c.b16 %v1293, %v1285
    %v1638 = vpack.c.b16 %v1294, %v1286
    %v1639 = vpack.c.b16 %v1295, %v1287
    %v1640 = vpack.c.b16 %v1296, %v1288
    %v1641 = vpack.c.b16 %v1297, %v1289
    %v1642 = vpack.c.b16 %v1298, %v1290
    %v1643 = vpack.c.b16 %v1299, %v1291
    %v1644 = vpack.c.b16 %v1308, %v1300
    %v1645 = vpack.c.b16 %v1309, %v1301
    %v1646 = vpack.c.b16 %v1310, %v1302
    %v1647 = vpack.c.b16 %v1311, %v1303
    %v1648 = vpack.c.b16 %v1312, %v1304
    %v1649 = vpack.c.b16 %v1313, %v1305
    %v1650 = vpack.c.b16 %v1314, %v1306
    %v1651 = vpack.c.b16 %v1315, %v1307
    %v1652 = vpack.c.b16 %v1324, %v1316
    %v1653 = vpack.c.b16 %v1325, %v1317
    %v1654 = vpack.c.b16 %v1326, %v1318
    %v1655 = vpack.c.b16 %v1327, %v1319
    %v1656 = vpack.c.b16 %v1328, %v1320
    %v1657 = vpack.c.b16 %v1329, %v1321
    %v1658 = vpack.c.b16 %v1330, %v1322
    %v1659 = vpack.c.b16 %v1331, %v1323
    %v1660 = vpack.c.b16 %v1340, %v1332
    %v1661 = vpack.c.b16 %v1341, %v1333
    %v1662 = vpack.c.b16 %v1342, %v1334
    %v1663 = vpack.c.b16 %v1343, %v1335
    %v1664 = vpack.c.b16 %v1344, %v1336
    %v1665 = vpack.c.b16 %v1345, %v1337
    %v1666 = vpack.c.b16 %v1346, %v1338
    %v1667 = vpack.c.b16 %v1347, %v1339
    %v1668 = vpack.c.b16 %v1356, %v1348
    %v1669 = vpack.c.b16 %v1357, %v1349
    %v1670 = vpack.c.b16 %v1358, %v1350
    %v1671 = vpack.c.b16 %v1359, %v1351
    %v1672 = vpack.c.b16 %v1360, %v1352
    %v1673 = vpack.c.b16 %v1361, %v1353
    %v1674 = vpack.c.b16 %v1362, %v1354
    %v1675 = vpack.c.b16 %v1363, %v1355
    %v1676 = vpack.c.b16 %v1372, %v1364
    %v1677 = vpack.c.b16 %v1373, %v1365
    %v1678 = vpack.c.b16 %v1374, %v1366
    %v1679 = vpack.c.b16 %v1375, %v1367
    %v1680 = vpack.c.b16 %v1376, %v1368
    %v1681 = vpack.c.b16 %v1377, %v1369
    %v1682 = vpack.c.b16 %v1378, %v1370
    %v1683 = vpack.c.b16 %v1379, %v1371
    %v1684 = vpack.c.b16 %v1388, %v1380
    %v1685 = vpack.c.b16 %v1389, %v1381
    %v1686 = vpack.c.b16 %v1390, %v1382
    %v1687 = vpack.c.b16 %v1391, %v1383
    %v1688 = vpack.c.b16 %v1392, %v1384
    %v1689 = vpack.c.b16 %v1393, %v1385
    %v1690 = vpack.c.b16 %v1394, %v1386
    %v1691 = vpack.c.b16 %v1395, %v1387
    %v1692 = vpack.c.b16 %v1404, %v1396
    %v1693 = vpack.c.b16 %v1405, %v1397
    %v1694 = vpack.c.b16 %v1406, %v1398
    %v1695 = vpack.c.b16 %v1407, %v1399
    %v1696 = vpack.c.b16 %v1408, %v1400
    %v1697 = vpack.c.b16 %v1409, %v1401
    %v1698 = vpack.c.b16 %v1410, %v1402
    %v1699 = vpack.c.b16 %v1411, %v1403
    %v1700 = vpack.c.b16 %v1420, %v1412
    %v1701 = vpack.c.b16 %v1421, %v1413
    %v1702 = vpack.c.b16 %v1422, %v1414
    %v1703 = vpack.c.b16 %v1423, %v1415
    %v1704 = vpack.c.b16 %v1424, %v1416
    %v1705 = vpack.c.b16 %v1425, %v1417
    %v1706 = vpack.c.b16 %v1426, %v1418
    %v1707 = vpack.c.b16 %v1427, %v1419
    %v1708 = vpack.c.b16 %v1436, %v1428
    %v1709 = vpack.c.b16 %v1437, %v1429
    %v1710 = vpack.c.b16 %v1438, %v1430
    %v1711 = vpack.c.b16 %v1439, %v1431
    %v1712 = vpack.c.b16 %v1440, %v1432
    %v1713 = vpack.c.b16 %v1441, %v1433
    %v1714 = vpack.c.b16 %v1442, %v1434
    %v1715 = vpack.c.b16 %v1443, %v1435
    %v1716 = vpack.c.b16 %v1452, %v1444
    %v1717 = vpack.c.b16 %v1453, %v1445
    %v1718 = vpack.c.b16 %v1454, %v1446
    %v1719 = vpack.c.b16 %v1455, %v1447
    %v1720 = vpack.c.b16 %v1456, %v1448
    %v1721 = vpack.c.b16 %v1457, %v1449
    %v1722 = vpack.c.b16 %v1458, %v1450
    %v1723 = vpack.c.b16 %v1459, %v1451
    %v1724 = vpack.c.b16 %v1468, %v1460
    %v1725 = vpack.c.b16 %v1469, %v1461
    %v1726 = vpack.c.b16 %v1470, %v1462
    %v1727 = vpack.c.b16 %v1471, %v1463
    %v1728 = vpack.c.b16 %v1472, %v1464
    %v1729 = vpack.c.b16 %v1473, %v1465
    %v1730 = vpack.c.b16 %v1474, %v1466
    %v1731 = vpack.c.b16 %v1475, %v1467
    %1988 = vmatprep.subr.bf16.mxu0 %v1533
    %1989 = vmatpush1.bf16.msra.mxu0 %v1532
    %1990 = vmatprep.subr.bf16.mxu0 %v1525
    %1991 = vmatpush1.bf16.msra.mxu0 %v1524
    %1992 = vmatprep.subr.bf16.mxu0 %v1517
    %1993 = vmatpush1.bf16.msra.mxu0 %v1516
    %1994 = vmatprep.subr.bf16.mxu0 %v1509
    %1995 = vmatpush1.bf16.msra.mxu0 %v1508
    %1996 = vmatprep.subr.bf16.mxu0 %v1501
    %1997 = vmatpush1.bf16.msra.mxu0 %v1500
    %1998 = vmatprep.subr.bf16.mxu0 %v1493
    %1999 = vmatpush1.bf16.msra.mxu0 %v1492
    %2000 = vmatprep.subr.bf16.mxu0 %v1485
    %2001 = vmatpush1.bf16.msra.mxu0 %v1484
    %2002 = vmatprep.subr.bf16.mxu0 %v1477
    %2003 = vmatpush1.bf16.msra.mxu0 %v1476
    %2004 = vmatprep.subr.bf16.mxu0 %v1597
    %2005 = vmatpush2.bf16.msra.mxu0 %v1596
    %2006 = vmatprep.subr.bf16.mxu0 %v1589
    %2007 = vmatpush2.bf16.msra.mxu0 %v1588
    %2008 = vmatprep.subr.bf16.mxu0 %v1581
    %2009 = vmatpush2.bf16.msra.mxu0 %v1580
    %2010 = vmatprep.subr.bf16.mxu0 %v1573
    %2011 = vmatpush2.bf16.msra.mxu0 %v1572
    %2012 = vmatprep.subr.bf16.mxu0 %v1565
    %2013 = vmatpush2.bf16.msra.mxu0 %v1564
    %2014 = vmatprep.subr.bf16.mxu0 %v1557
    %2015 = vmatpush2.bf16.msra.mxu0 %v1556
    %2016 = vmatprep.subr.bf16.mxu0 %v1549
    %2017 = vmatpush2.bf16.msra.mxu0 %v1548
    %2018 = vmatprep.subr.bf16.mxu0 %v1541
    %2019 = vmatpush2.bf16.msra.mxu0 %v1540
    %2020 = vmatprep.mubr.bf16.mxu0 %v407
    %2021 = vmatmul.mubr.bf16.gmra.mxu0 %v406
    %v2022 = vpop.f32.mrf.mxu0
    %v2023 = vadd.f32 %v671, %v2022
    %v2024 = vpop.f32.mrf.mxu0
    %v2025 = vadd.f32 %v675, %v2024
    %v2026 = vpop.f32.mrf.mxu0
    %v2027 = vpop.f32.mrf.mxu0
    %2028 = vdwg.mxu0
    %2029 = vmatprep.subr.bf16.mxu0 %v1661
    %2030 = vmatpush1.bf16.msra.mxu0 %v1660
    %2031 = vmatprep.subr.bf16.mxu0 %v1653
    %2032 = vmatpush1.bf16.msra.mxu0 %v1652
    %2033 = vmatprep.subr.bf16.mxu0 %v1645
    %2034 = vmatpush1.bf16.msra.mxu0 %v1644
    %2035 = vmatprep.subr.bf16.mxu0 %v1637
    %2036 = vmatpush1.bf16.msra.mxu0 %v1636
    %2037 = vmatprep.subr.bf16.mxu0 %v1629
    %2038 = vmatpush1.bf16.msra.mxu0 %v1628
    %2039 = vmatprep.subr.bf16.mxu0 %v1621
    %2040 = vmatpush1.bf16.msra.mxu0 %v1620
    %2041 = vmatprep.subr.bf16.mxu0 %v1613
    %2042 = vmatpush1.bf16.msra.mxu0 %v1612
    %2043 = vmatprep.subr.bf16.mxu0 %v1605
    %2044 = vmatpush1.bf16.msra.mxu0 %v1604
    %2045 = vmatprep.subr.bf16.mxu0 %v1725
    %2046 = vmatpush2.bf16.msra.mxu0 %v1724
    %2047 = vmatprep.subr.bf16.mxu0 %v1717
    %2048 = vmatpush2.bf16.msra.mxu0 %v1716
    %2049 = vmatprep.subr.bf16.mxu0 %v1709
    %2050 = vmatpush2.bf16.msra.mxu0 %v1708
    %2051 = vmatprep.subr.bf16.mxu0 %v1701
    %2052 = vmatpush2.bf16.msra.mxu0 %v1700
    %2053 = vmatprep.subr.bf16.mxu0 %v1693
    %2054 = vmatpush2.bf16.msra.mxu0 %v1692
    %2055 = vmatprep.subr.bf16.mxu0 %v1685
    %2056 = vmatpush2.bf16.msra.mxu0 %v1684
    %2057 = vmatprep.subr.bf16.mxu0 %v1677
    %2058 = vmatpush2.bf16.msra.mxu0 %v1676
    %2059 = vmatprep.subr.bf16.mxu0 %v1669
    %2060 = vmatpush2.bf16.msra.mxu0 %v1668
    %2061 = vmatprep.mubr.bf16.mxu0 %v409
    %2062 = vmatmul.mubr.bf16.gmra.mxu0 %v408
    %v2063 = vpop.f32.mrf.mxu0
    %v2064 = vadd.f32 %v2023, %v2063
    %v2065 = vpop.f32.mrf.mxu0
    %v2066 = vadd.f32 %v2025, %v2065
    %v2067 = vpop.f32.mrf.mxu0
    %v2068 = vpop.f32.mrf.mxu0
    %2069 = vdwg.mxu0
    %2070 = vmatprep.subr.bf16.mxu0 %v1535
    %2071 = vmatpush1.bf16.msra.mxu0 %v1534
    %2072 = vmatprep.subr.bf16.mxu0 %v1527
    %2073 = vmatpush1.bf16.msra.mxu0 %v1526
    %2074 = vmatprep.subr.bf16.mxu0 %v1519
    %2075 = vmatpush1.bf16.msra.mxu0 %v1518
    %2076 = vmatprep.subr.bf16.mxu0 %v1511
    %2077 = vmatpush1.bf16.msra.mxu0 %v1510
    %2078 = vmatprep.subr.bf16.mxu0 %v1503
    %2079 = vmatpush1.bf16.msra.mxu0 %v1502
    %2080 = vmatprep.subr.bf16.mxu0 %v1495
    %2081 = vmatpush1.bf16.msra.mxu0 %v1494
    %2082 = vmatprep.subr.bf16.mxu0 %v1487
    %2083 = vmatpush1.bf16.msra.mxu0 %v1486
    %2084 = vmatprep.subr.bf16.mxu0 %v1479
    %2085 = vmatpush1.bf16.msra.mxu0 %v1478
    %2086 = vmatprep.subr.bf16.mxu0 %v1599
    %2087 = vmatpush2.bf16.msra.mxu0 %v1598
    %2088 = vmatprep.subr.bf16.mxu0 %v1591
    %2089 = vmatpush2.bf16.msra.mxu0 %v1590
    %2090 = vmatprep.subr.bf16.mxu0 %v1583
    %2091 = vmatpush2.bf16.msra.mxu0 %v1582
    %2092 = vmatprep.subr.bf16.mxu0 %v1575
    %2093 = vmatpush2.bf16.msra.mxu0 %v1574
    %2094 = vmatprep.subr.bf16.mxu0 %v1567
    %2095 = vmatpush2.bf16.msra.mxu0 %v1566
    %2096 = vmatprep.subr.bf16.mxu0 %v1559
    %2097 = vmatpush2.bf16.msra.mxu0 %v1558
    %2098 = vmatprep.subr.bf16.mxu0 %v1551
    %2099 = vmatpush2.bf16.msra.mxu0 %v1550
    %2100 = vmatprep.subr.bf16.mxu0 %v1543
    %2101 = vmatpush2.bf16.msra.mxu0 %v1542
    %2102 = vmatprep.mubr.bf16.mxu0 %v407
    %2103 = vmatmul.mubr.bf16.gmra.mxu0 %v406
    %v2104 = vpop.f32.mrf.mxu0
    %v2105 = vadd.f32 %v679, %v2104
    %v2106 = vpop.f32.mrf.mxu0
    %v2107 = vadd.f32 %v683, %v2106
    %v2108 = vpop.f32.mrf.mxu0
    %v2109 = vpop.f32.mrf.mxu0
    %2110 = vdwg.mxu0
    %2111 = vmatprep.subr.bf16.mxu0 %v1663
    %2112 = vmatpush1.bf16.msra.mxu0 %v1662
    %2113 = vmatprep.subr.bf16.mxu0 %v1655
    %2114 = vmatpush1.bf16.msra.mxu0 %v1654
    %2115 = vmatprep.subr.bf16.mxu0 %v1647
    %2116 = vmatpush1.bf16.msra.mxu0 %v1646
    %2117 = vmatprep.subr.bf16.mxu0 %v1639
    %2118 = vmatpush1.bf16.msra.mxu0 %v1638
    %2119 = vmatprep.subr.bf16.mxu0 %v1631
    %2120 = vmatpush1.bf16.msra.mxu0 %v1630
    %2121 = vmatprep.subr.bf16.mxu0 %v1623
    %2122 = vmatpush1.bf16.msra.mxu0 %v1622
    %2123 = vmatprep.subr.bf16.mxu0 %v1615
    %2124 = vmatpush1.bf16.msra.mxu0 %v1614
    %2125 = vmatprep.subr.bf16.mxu0 %v1607
    %2126 = vmatpush1.bf16.msra.mxu0 %v1606
    %2127 = vmatprep.subr.bf16.mxu0 %v1727
    %2128 = vmatpush2.bf16.msra.mxu0 %v1726
    %2129 = vmatprep.subr.bf16.mxu0 %v1719
    %2130 = vmatpush2.bf16.msra.mxu0 %v1718
    %2131 = vmatprep.subr.bf16.mxu0 %v1711
    %2132 = vmatpush2.bf16.msra.mxu0 %v1710
    %2133 = vmatprep.subr.bf16.mxu0 %v1703
    %2134 = vmatpush2.bf16.msra.mxu0 %v1702
    %2135 = vmatprep.subr.bf16.mxu0 %v1695
    %2136 = vmatpush2.bf16.msra.mxu0 %v1694
    %2137 = vmatprep.subr.bf16.mxu0 %v1687
    %2138 = vmatpush2.bf16.msra.mxu0 %v1686
    %2139 = vmatprep.subr.bf16.mxu0 %v1679
    %2140 = vmatpush2.bf16.msra.mxu0 %v1678
    %2141 = vmatprep.subr.bf16.mxu0 %v1671
    %2142 = vmatpush2.bf16.msra.mxu0 %v1670
    %2143 = vmatprep.mubr.bf16.mxu0 %v409
    %2144 = vmatmul.mubr.bf16.gmra.mxu0 %v408
    %v2145 = vpop.f32.mrf.mxu0
    %v2146 = vadd.f32 %v2105, %v2145
    %v2147 = vpop.f32.mrf.mxu0
    %v2148 = vadd.f32 %v2107, %v2147
    %v2149 = vpop.f32.mrf.mxu0
    %v2150 = vpop.f32.mrf.mxu0
    %2151 = vdwg.mxu0
    %2152 = vmatprep.subr.bf16.mxu0 %v1537
    %2153 = vmatpush1.bf16.msra.mxu0 %v1536
    %2154 = vmatprep.subr.bf16.mxu0 %v1529
    %2155 = vmatpush1.bf16.msra.mxu0 %v1528
    %2156 = vmatprep.subr.bf16.mxu0 %v1521
    %2157 = vmatpush1.bf16.msra.mxu0 %v1520
    %2158 = vmatprep.subr.bf16.mxu0 %v1513
    %2159 = vmatpush1.bf16.msra.mxu0 %v1512
    %2160 = vmatprep.subr.bf16.mxu0 %v1505
    %2161 = vmatpush1.bf16.msra.mxu0 %v1504
    %2162 = vmatprep.subr.bf16.mxu0 %v1497
    %2163 = vmatpush1.bf16.msra.mxu0 %v1496
    %2164 = vmatprep.subr.bf16.mxu0 %v1489
    %2165 = vmatpush1.bf16.msra.mxu0 %v1488
    %2166 = vmatprep.subr.bf16.mxu0 %v1481
    %2167 = vmatpush1.bf16.msra.mxu0 %v1480
    %2168 = vmatprep.subr.bf16.mxu0 %v1601
    %2169 = vmatpush2.bf16.msra.mxu0 %v1600
    %2170 = vmatprep.subr.bf16.mxu0 %v1593
    %2171 = vmatpush2.bf16.msra.mxu0 %v1592
    %2172 = vmatprep.subr.bf16.mxu0 %v1585
    %2173 = vmatpush2.bf16.msra.mxu0 %v1584
    %2174 = vmatprep.subr.bf16.mxu0 %v1577
    %2175 = vmatpush2.bf16.msra.mxu0 %v1576
    %2176 = vmatprep.subr.bf16.mxu0 %v1569
    %2177 = vmatpush2.bf16.msra.mxu0 %v1568
    %2178 = vmatprep.subr.bf16.mxu0 %v1561
    %2179 = vmatpush2.bf16.msra.mxu0 %v1560
    %2180 = vmatprep.subr.bf16.mxu0 %v1553
    %2181 = vmatpush2.bf16.msra.mxu0 %v1552
    %2182 = vmatprep.subr.bf16.mxu0 %v1545
    %2183 = vmatpush2.bf16.msra.mxu0 %v1544
    %2184 = vmatprep.mubr.bf16.mxu0 %v407
    %2185 = vmatmul.mubr.bf16.gmra.mxu0 %v406
    %v2186 = vpop.f32.mrf.mxu0
    %v2187 = vadd.f32 %v687, %v2186
    %v2188 = vpop.f32.mrf.mxu0
    %v2189 = vadd.f32 %v691, %v2188
    %v2190 = vpop.f32.mrf.mxu0
    %v2191 = vpop.f32.mrf.mxu0
    %2192 = vdwg.mxu0
    %2193 = vmatprep.subr.bf16.mxu0 %v1665
    %2194 = vmatpush1.bf16.msra.mxu0 %v1664
    %2195 = vmatprep.subr.bf16.mxu0 %v1657
    %2196 = vmatpush1.bf16.msra.mxu0 %v1656
    %2197 = vmatprep.subr.bf16.mxu0 %v1649
    %2198 = vmatpush1.bf16.msra.mxu0 %v1648
    %2199 = vmatprep.subr.bf16.mxu0 %v1641
    %2200 = vmatpush1.bf16.msra.mxu0 %v1640
    %2201 = vmatprep.subr.bf16.mxu0 %v1633
    %2202 = vmatpush1.bf16.msra.mxu0 %v1632
    %2203 = vmatprep.subr.bf16.mxu0 %v1625
    %2204 = vmatpush1.bf16.msra.mxu0 %v1624
    %2205 = vmatprep.subr.bf16.mxu0 %v1617
    %2206 = vmatpush1.bf16.msra.mxu0 %v1616
    %2207 = vmatprep.subr.bf16.mxu0 %v1609
    %2208 = vmatpush1.bf16.msra.mxu0 %v1608
    %2209 = vmatprep.subr.bf16.mxu0 %v1729
    %2210 = vmatpush2.bf16.msra.mxu0 %v1728
    %2211 = vmatprep.subr.bf16.mxu0 %v1721
    %2212 = vmatpush2.bf16.msra.mxu0 %v1720
    %2213 = vmatprep.subr.bf16.mxu0 %v1713
    %2214 = vmatpush2.bf16.msra.mxu0 %v1712
    %2215 = vmatprep.subr.bf16.mxu0 %v1705
    %2216 = vmatpush2.bf16.msra.mxu0 %v1704
    %2217 = vmatprep.subr.bf16.mxu0 %v1697
    %2218 = vmatpush2.bf16.msra.mxu0 %v1696
    %2219 = vmatprep.subr.bf16.mxu0 %v1689
    %2220 = vmatpush2.bf16.msra.mxu0 %v1688
    %2221 = vmatprep.subr.bf16.mxu0 %v1681
    %2222 = vmatpush2.bf16.msra.mxu0 %v1680
    %2223 = vmatprep.subr.bf16.mxu0 %v1673
    %2224 = vmatpush2.bf16.msra.mxu0 %v1672
    %2225 = vmatprep.mubr.bf16.mxu0 %v409
    %2226 = vmatmul.mubr.bf16.gmra.mxu0 %v408
    %v2227 = vpop.f32.mrf.mxu0
    %v2228 = vadd.f32 %v2187, %v2227
    %v2229 = vpop.f32.mrf.mxu0
    %v2230 = vadd.f32 %v2189, %v2229
    %v2231 = vpop.f32.mrf.mxu0
    %v2232 = vpop.f32.mrf.mxu0
    %2233 = vdwg.mxu0
    %2234 = vmatprep.subr.bf16.mxu0 %v1539
    %2235 = vmatpush1.bf16.msra.mxu0 %v1538
    %2236 = vmatprep.subr.bf16.mxu0 %v1531
    %2237 = vmatpush1.bf16.msra.mxu0 %v1530
    %2238 = vmatprep.subr.bf16.mxu0 %v1523
    %2239 = vmatpush1.bf16.msra.mxu0 %v1522
    %2240 = vmatprep.subr.bf16.mxu0 %v1515
    %2241 = vmatpush1.bf16.msra.mxu0 %v1514
    %2242 = vmatprep.subr.bf16.mxu0 %v1507
    %2243 = vmatpush1.bf16.msra.mxu0 %v1506
    %2244 = vmatprep.subr.bf16.mxu0 %v1499
    %2245 = vmatpush1.bf16.msra.mxu0 %v1498
    %2246 = vmatprep.subr.bf16.mxu0 %v1491
    %2247 = vmatpush1.bf16.msra.mxu0 %v1490
    %2248 = vmatprep.subr.bf16.mxu0 %v1483
    %2249 = vmatpush1.bf16.msra.mxu0 %v1482
    %2250 = vmatprep.subr.bf16.mxu0 %v1603
    %2251 = vmatpush2.bf16.msra.mxu0 %v1602
    %2252 = vmatprep.subr.bf16.mxu0 %v1595
    %2253 = vmatpush2.bf16.msra.mxu0 %v1594
    %2254 = vmatprep.subr.bf16.mxu0 %v1587
    %2255 = vmatpush2.bf16.msra.mxu0 %v1586
    %2256 = vmatprep.subr.bf16.mxu0 %v1579
    %2257 = vmatpush2.bf16.msra.mxu0 %v1578
    %2258 = vmatprep.subr.bf16.mxu0 %v1571
    %2259 = vmatpush2.bf16.msra.mxu0 %v1570
    %2260 = vmatprep.subr.bf16.mxu0 %v1563
    %2261 = vmatpush2.bf16.msra.mxu0 %v1562
    %2262 = vmatprep.subr.bf16.mxu0 %v1555
    %2263 = vmatpush2.bf16.msra.mxu0 %v1554
    %2264 = vmatprep.subr.bf16.mxu0 %v1547
    %2265 = vmatpush2.bf16.msra.mxu0 %v1546
    %2266 = vmatprep.mubr.bf16.mxu0 %v407
    %2267 = vmatmul.mubr.bf16.gmra.mxu0 %v406
    %v2268 = vpop.f32.mrf.mxu0
    %v2269 = vadd.f32 %v695, %v2268
    %v2270 = vpop.f32.mrf.mxu0
    %v2271 = vadd.f32 %v699, %v2270
    %v2272 = vpop.f32.mrf.mxu0
    %v2273 = vpop.f32.mrf.mxu0
    %2274 = vdwg.mxu0
    %2275 = vmatprep.subr.bf16.mxu0 %v1667
    %2276 = vmatpush1.bf16.msra.mxu0 %v1666
    %2277 = vmatprep.subr.bf16.mxu0 %v1659
    %2278 = vmatpush1.bf16.msra.mxu0 %v1658
    %2279 = vmatprep.subr.bf16.mxu0 %v1651
    %2280 = vmatpush1.bf16.msra.mxu0 %v1650
    %2281 = vmatprep.subr.bf16.mxu0 %v1643
    %2282 = vmatpush1.bf16.msra.mxu0 %v1642
    %2283 = vmatprep.subr.bf16.mxu0 %v1635
    %2284 = vmatpush1.bf16.msra.mxu0 %v1634
    %2285 = vmatprep.subr.bf16.mxu0 %v1627
    %2286 = vmatpush1.bf16.msra.mxu0 %v1626
    %2287 = vmatprep.subr.bf16.mxu0 %v1619
    %2288 = vmatpush1.bf16.msra.mxu0 %v1618
    %2289 = vmatprep.subr.bf16.mxu0 %v1611
    %2290 = vmatpush1.bf16.msra.mxu0 %v1610
    %2291 = vmatprep.subr.bf16.mxu0 %v1731
    %2292 = vmatpush2.bf16.msra.mxu0 %v1730
    %2293 = vmatprep.subr.bf16.mxu0 %v1723
    %2294 = vmatpush2.bf16.msra.mxu0 %v1722
    %2295 = vmatprep.subr.bf16.mxu0 %v1715
    %2296 = vmatpush2.bf16.msra.mxu0 %v1714
    %2297 = vmatprep.subr.bf16.mxu0 %v1707
    %2298 = vmatpush2.bf16.msra.mxu0 %v1706
    %2299 = vmatprep.subr.bf16.mxu0 %v1699
    %2300 = vmatpush2.bf16.msra.mxu0 %v1698
    %2301 = vmatprep.subr.bf16.mxu0 %v1691
    %2302 = vmatpush2.bf16.msra.mxu0 %v1690
    %2303 = vmatprep.subr.bf16.mxu0 %v1683
    %2304 = vmatpush2.bf16.msra.mxu0 %v1682
    %2305 = vmatprep.subr.bf16.mxu0 %v1675
    %2306 = vmatpush2.bf16.msra.mxu0 %v1674
    %2307 = vmatprep.mubr.bf16.mxu0 %v409
    %2308 = vmatmul.mubr.bf16.gmra.mxu0 %v408
    %v2309 = vpop.f32.mrf.mxu0
    %v2310 = vadd.f32 %v2269, %v2309
    %v2311 = vpop.f32.mrf.mxu0
    %v2312 = vadd.f32 %v2271, %v2311
    %v2313 = vpop.f32.mrf.mxu0
    %v2314 = vpop.f32.mrf.mxu0
    %2315 = vdwg.mxu0
    %v2316 = vmax.f32 %v2064, 0.0
    %v2317 = vmax.f32 %v2066, 0.0
    %v2318 = vmax.f32 %v2146, 0.0
    %v2319 = vmax.f32 %v2148, 0.0
    %v2320 = vmax.f32 %v2228, 0.0
    %v2321 = vmax.f32 %v2230, 0.0
    %v2322 = vmax.f32 %v2310, 0.0
    %v2323 = vmax.f32 %v2312, 0.0
    %v2324 = vpack.c.bf16 %v2316, %v2316
    %v2325 = vpack.c.bf16 %v2317, %v2317
    %v2326 = vpack.c.bf16 %v2318, %v2318
    %v2327 = vpack.c.bf16 %v2319, %v2319
    %v2328 = vpack.c.bf16 %v2320, %v2320
    %v2329 = vpack.c.bf16 %v2321, %v2321
    %v2330 = vpack.c.bf16 %v2322, %v2322
    %v2331 = vpack.c.bf16 %v2323, %v2323
    %v2332 = vld [vmem:[%s6] sm:$0xff]
    %v2333 = vld [vmem:[%s6 + $0x8] sm:$0xff]
    %v2334 = vld [vmem:[%s6 + $0x10] sm:$0xff]
    %v2335 = vld [vmem:[%s6 + $0x18] sm:$0xf]
    %v2336 = vld [vmem:[%s6 + $0x1c] sm:$0xff]
    %v2337 = vld [vmem:[%s6 + $0x24] sm:$0xff]
    %v2338 = vld [vmem:[%s6 + $0x2c] sm:$0xff]
    %v2339 = vld [vmem:[%s6 + $0x34] sm:$0xf]
    %v2340 = vld [vmem:[%s6 + $0x38] sm:$0xff]
    %v2341 = vld [vmem:[%s6 + $0x40] sm:$0xff]
    %v2342 = vld [vmem:[%s6 + $0x48] sm:$0xff]
    %v2343 = vld [vmem:[%s6 + $0x50] sm:$0xf]
    %v2344 = vld [vmem:[%s6 + $0x54] sm:$0xff]
    %v2345 = vld [vmem:[%s6 + $0x5c] sm:$0xff]
    %v2346 = vld [vmem:[%s6 + $0x64] sm:$0xff]
    %v2347 = vld [vmem:[%s6 + $0x6c] sm:$0xf]
    %v2348 = vld [vmem:[%s6 + $0x70] sm:$0xff]
    %v2349 = vld [vmem:[%s6 + $0x78] sm:$0xff]
    %v2350 = vld [vmem:[%s6 + $0x80] sm:$0xff]
    %v2351 = vld [vmem:[%s6 + $0x88] sm:$0xf]
    %v2352 = vld [vmem:[%s6 + $0x8c] sm:$0xff]
    %v2353 = vld [vmem:[%s6 + $0x94] sm:$0xff]
    %v2354 = vld [vmem:[%s6 + $0x9c] sm:$0xff]
    %v2355 = vld [vmem:[%s6 + $0xa4] sm:$0xf]
    %v2356 = vld [vmem:[%s6 + $0xa8] sm:$0xff]
    %v2357 = vld [vmem:[%s6 + $0xb0] sm:$0xff]
    %v2358 = vld [vmem:[%s6 + $0xb8] sm:$0xff]
    %v2359 = vld [vmem:[%s6 + $0xc0] sm:$0xf]
    %v2360 = vld [vmem:[%s6 + $0xc4] sm:$0xff]
    %v2361 = vld [vmem:[%s6 + $0xcc] sm:$0xff]
    %v2362 = vld [vmem:[%s6 + $0xd4] sm:$0xff]
    %v2363 = vld [vmem:[%s6 + $0xdc] sm:$0xf]
    %v2364 = vld [vmem:[%s6 + $0xe0] sm:$0xff]
    %v2365 = vld [vmem:[%s6 + $0xe8] sm:$0xff]
    %v2366 = vld [vmem:[%s6 + $0xf0] sm:$0xff]
    %v2367 = vld [vmem:[%s6 + $0xf8] sm:$0xf]
    %v2368 = vld [vmem:[%s6 + $0xfc] sm:$0xff]
    %v2369 = vld [vmem:[%s6 + $0x104] sm:$0xff]
    %v2370 = vld [vmem:[%s6 + $0x10c] sm:$0xff]
    %v2371 = vld [vmem:[%s6 + $0x114] sm:$0xf]
    %v2372 = vld [vmem:[%s6 + $0x118] sm:$0xff]
    %v2373 = vld [vmem:[%s6 + $0x120] sm:$0xff]
    %v2374 = vld [vmem:[%s6 + $0x128] sm:$0xff]
    %v2375 = vld [vmem:[%s6 + $0x130] sm:$0xf]
    %v2376 = vld [vmem:[%s6 + $0x134] sm:$0xff]
    %v2377 = vld [vmem:[%s6 + $0x13c] sm:$0xff]
    %v2378 = vld [vmem:[%s6 + $0x144] sm:$0xff]
    %v2379 = vld [vmem:[%s6 + $0x14c] sm:$0xf]
    %v2380 = vld [vmem:[%s6 + $0x150] sm:$0xff]
    %v2381 = vld [vmem:[%s6 + $0x158] sm:$0xff]
    %v2382 = vld [vmem:[%s6 + $0x160] sm:$0xff]
    %v2383 = vld [vmem:[%s6 + $0x168] sm:$0xf]
    %v2384 = vld [vmem:[%s6 + $0x16c] sm:$0xff]
    %v2385 = vld [vmem:[%s6 + $0x174] sm:$0xff]
    %v2386 = vld [vmem:[%s6 + $0x17c] sm:$0xff]
    %v2387 = vld [vmem:[%s6 + $0x184] sm:$0xf]
    %v2388 = vld [vmem:[%s6 + $0x188] sm:$0xff]
    %v2389 = vld [vmem:[%s6 + $0x190] sm:$0xff]
    %v2390 = vld [vmem:[%s6 + $0x198] sm:$0xff]
    %v2391 = vld [vmem:[%s6 + $0x1a0] sm:$0xf]
    %v2392 = vld [vmem:[%s6 + $0x1a4] sm:$0xff]
    %v2393 = vld [vmem:[%s6 + $0x1ac] sm:$0xff]
    %v2394 = vld [vmem:[%s6 + $0x1b4] sm:$0xff]
    %v2395 = vld [vmem:[%s6 + $0x1bc] sm:$0xf]
    %v2396 = vld [vmem:[%s6 + $0x1c0] sm:$0xff]
    %v2397 = vld [vmem:[%s6 + $0x1c8] sm:$0xff]
    %v2398 = vld [vmem:[%s6 + $0x1d0] sm:$0xff]
    %v2399 = vld [vmem:[%s6 + $0x1d8] sm:$0xf]
    %v2400 = vld [vmem:[%s6 + $0x1dc] sm:$0xff]
    %v2401 = vld [vmem:[%s6 + $0x1e4] sm:$0xff]
    %v2402 = vld [vmem:[%s6 + $0x1ec] sm:$0xff]
    %v2403 = vld [vmem:[%s6 + $0x1f4] sm:$0xf]
    %v2404 = vld [vmem:[%s6 + $0x1f8] sm:$0xff]
    %v2405 = vld [vmem:[%s6 + $0x200] sm:$0xff]
    %v2406 = vld [vmem:[%s6 + $0x208] sm:$0xff]
    %v2407 = vld [vmem:[%s6 + $0x210] sm:$0xf]
    %v2408 = vld [vmem:[%s6 + $0x214] sm:$0xff]
    %v2409 = vld [vmem:[%s6 + $0x21c] sm:$0xff]
    %v2410 = vld [vmem:[%s6 + $0x224] sm:$0xff]
    %v2411 = vld [vmem:[%s6 + $0x22c] sm:$0xf]
    %v2412 = vld [vmem:[%s6 + $0x230] sm:$0xff]
    %v2413 = vld [vmem:[%s6 + $0x238] sm:$0xff]
    %v2414 = vld [vmem:[%s6 + $0x240] sm:$0xff]
    %v2415 = vld [vmem:[%s6 + $0x248] sm:$0xf]
    %v2416 = vld [vmem:[%s6 + $0x24c] sm:$0xff]
    %v2417 = vld [vmem:[%s6 + $0x254] sm:$0xff]
    %v2418 = vld [vmem:[%s6 + $0x25c] sm:$0xff]
    %v2419 = vld [vmem:[%s6 + $0x264] sm:$0xf]
    %v2420 = vld [vmem:[%s6 + $0x268] sm:$0xff]
    %v2421 = vld [vmem:[%s6 + $0x270] sm:$0xff]
    %v2422 = vld [vmem:[%s6 + $0x278] sm:$0xff]
    %v2423 = vld [vmem:[%s6 + $0x280] sm:$0xf]
    %v2424 = vld [vmem:[%s6 + $0x284] sm:$0xff]
    %v2425 = vld [vmem:[%s6 + $0x28c] sm:$0xff]
    %v2426 = vld [vmem:[%s6 + $0x294] sm:$0xff]
    %v2427 = vld [vmem:[%s6 + $0x29c] sm:$0xf]
    %v2428 = vld [vmem:[%s6 + $0x2a0] sm:$0xff]
    %v2429 = vld [vmem:[%s6 + $0x2a8] sm:$0xff]
    %v2430 = vld [vmem:[%s6 + $0x2b0] sm:$0xff]
    %v2431 = vld [vmem:[%s6 + $0x2b8] sm:$0xf]
    %v2432 = vld [vmem:[%s6 + $0x2bc] sm:$0xff]
    %v2433 = vld [vmem:[%s6 + $0x2c4] sm:$0xff]
    %v2434 = vld [vmem:[%s6 + $0x2cc] sm:$0xff]
    %v2435 = vld [vmem:[%s6 + $0x2d4] sm:$0xf]
    %v2436 = vld [vmem:[%s6 + $0x2d8] sm:$0xff]
    %v2437 = vld [vmem:[%s6 + $0x2e0] sm:$0xff]
    %v2438 = vld [vmem:[%s6 + $0x2e8] sm:$0xff]
    %v2439 = vld [vmem:[%s6 + $0x2f0] sm:$0xf]
    %v2440 = vld [vmem:[%s6 + $0x2f4] sm:$0xff]
    %v2441 = vld [vmem:[%s6 + $0x2fc] sm:$0xff]
    %v2442 = vld [vmem:[%s6 + $0x304] sm:$0xff]
    %v2443 = vld [vmem:[%s6 + $0x30c] sm:$0xf]
    %v2444 = vld [vmem:[%s6 + $0x310] sm:$0xff]
    %v2445 = vld [vmem:[%s6 + $0x318] sm:$0xff]
    %v2446 = vld [vmem:[%s6 + $0x320] sm:$0xff]
    %v2447 = vld [vmem:[%s6 + $0x328] sm:$0xf]
    %v2448 = vld [vmem:[%s6 + $0x32c] sm:$0xff]
    %v2449 = vld [vmem:[%s6 + $0x334] sm:$0xff]
    %v2450 = vld [vmem:[%s6 + $0x33c] sm:$0xff]
    %v2451 = vld [vmem:[%s6 + $0x344] sm:$0xf]
    %v2452 = vld [vmem:[%s6 + $0x348] sm:$0xff]
    %v2453 = vld [vmem:[%s6 + $0x350] sm:$0xff]
    %v2454 = vld [vmem:[%s6 + $0x358] sm:$0xff]
    %v2455 = vld [vmem:[%s6 + $0x360] sm:$0xf]
    %v2456 = vld [vmem:[%s6 + $0x364] sm:$0xff]
    %v2457 = vld [vmem:[%s6 + $0x36c] sm:$0xff]
    %v2458 = vld [vmem:[%s6 + $0x374] sm:$0xff]
    %v2459 = vld [vmem:[%s6 + $0x37c] sm:$0xf]
    %v2460 = vld [vmem:[%s6 + $0x380] sm:$0xff]
    %v2461 = vld [vmem:[%s6 + $0x388] sm:$0xff]
    %v2462 = vld [vmem:[%s6 + $0x390] sm:$0xff]
    %v2463 = vld [vmem:[%s6 + $0x398] sm:$0xf]
    %v2464 = vld [vmem:[%s6 + $0x39c] sm:$0xff]
    %v2465 = vld [vmem:[%s6 + $0x3a4] sm:$0xff]
    %v2466 = vld [vmem:[%s6 + $0x3ac] sm:$0xff]
    %v2467 = vld [vmem:[%s6 + $0x3b4] sm:$0xf]
    %v2468 = vld [vmem:[%s6 + $0x3b8] sm:$0xff]
    %v2469 = vld [vmem:[%s6 + $0x3c0] sm:$0xff]
    %v2470 = vld [vmem:[%s6 + $0x3c8] sm:$0xff]
    %v2471 = vld [vmem:[%s6 + $0x3d0] sm:$0xf]
    %v2472 = vld [vmem:[%s6 + $0x3d4] sm:$0xff]
    %v2473 = vld [vmem:[%s6 + $0x3dc] sm:$0xff]
    %v2474 = vld [vmem:[%s6 + $0x3e4] sm:$0xff]
    %v2475 = vld [vmem:[%s6 + $0x3ec] sm:$0xf]
    %v2476 = vld [vmem:[%s6 + $0x3f0] sm:$0xff]
    %v2477 = vld [vmem:[%s6 + $0x3f8] sm:$0xff]
    %v2478 = vld [vmem:[%s6 + $0x400] sm:$0xff]
    %v2479 = vld [vmem:[%s6 + $0x408] sm:$0xf]
    %v2480 = vld [vmem:[%s6 + $0x40c] sm:$0xff]
    %v2481 = vld [vmem:[%s6 + $0x414] sm:$0xff]
    %v2482 = vld [vmem:[%s6 + $0x41c] sm:$0xff]
    %v2483 = vld [vmem:[%s6 + $0x424] sm:$0xf]
    %v2484 = vld [vmem:[%s6 + $0x428] sm:$0xff]
    %v2485 = vld [vmem:[%s6 + $0x430] sm:$0xff]
    %v2486 = vld [vmem:[%s6 + $0x438] sm:$0xff]
    %v2487 = vld [vmem:[%s6 + $0x440] sm:$0xf]
    %v2488 = vld [vmem:[%s6 + $0x444] sm:$0xff]
    %v2489 = vld [vmem:[%s6 + $0x44c] sm:$0xff]
    %v2490 = vld [vmem:[%s6 + $0x454] sm:$0xff]
    %v2491 = vld [vmem:[%s6 + $0x45c] sm:$0xf]
    %v2492 = vld [vmem:[%s6 + $0x460] sm:$0xff]
    %v2493 = vld [vmem:[%s6 + $0x468] sm:$0xff]
    %v2494 = vld [vmem:[%s6 + $0x470] sm:$0xff]
    %v2495 = vld [vmem:[%s6 + $0x478] sm:$0xf]
    %v2496 = vld [vmem:[%s6 + $0x47c] sm:$0xff]
    %v2497 = vld [vmem:[%s6 + $0x484] sm:$0xff]
    %v2498 = vld [vmem:[%s6 + $0x48c] sm:$0xff]
    %v2499 = vld [vmem:[%s6 + $0x494] sm:$0xf]
    %v2500 = vld [vmem:[%s6 + $0x498] sm:$0xff]
    %v2501 = vld [vmem:[%s6 + $0x4a0] sm:$0xff]
    %v2502 = vld [vmem:[%s6 + $0x4a8] sm:$0xff]
    %v2503 = vld [vmem:[%s6 + $0x4b0] sm:$0xf]
    %v2504 = vld [vmem:[%s6 + $0x4b4] sm:$0xff]
    %v2505 = vld [vmem:[%s6 + $0x4bc] sm:$0xff]
    %v2506 = vld [vmem:[%s6 + $0x4c4] sm:$0xff]
    %v2507 = vld [vmem:[%s6 + $0x4cc] sm:$0xf]
    %v2508 = vld [vmem:[%s6 + $0x4d0] sm:$0xff]
    %v2509 = vld [vmem:[%s6 + $0x4d8] sm:$0xff]
    %v2510 = vld [vmem:[%s6 + $0x4e0] sm:$0xff]
    %v2511 = vld [vmem:[%s6 + $0x4e8] sm:$0xf]
    %v2512 = vld [vmem:[%s6 + $0x4ec] sm:$0xff]
    %v2513 = vld [vmem:[%s6 + $0x4f4] sm:$0xff]
    %v2514 = vld [vmem:[%s6 + $0x4fc] sm:$0xff]
    %v2515 = vld [vmem:[%s6 + $0x504] sm:$0xf]
    %v2516 = vld [vmem:[%s6 + $0x508] sm:$0xff]
    %v2517 = vld [vmem:[%s6 + $0x510] sm:$0xff]
    %v2518 = vld [vmem:[%s6 + $0x518] sm:$0xff]
    %v2519 = vld [vmem:[%s6 + $0x520] sm:$0xf]
    %v2520 = vld [vmem:[%s6 + $0x524] sm:$0xff]
    %v2521 = vld [vmem:[%s6 + $0x52c] sm:$0xff]
    %v2522 = vld [vmem:[%s6 + $0x534] sm:$0xff]
    %v2523 = vld [vmem:[%s6 + $0x53c] sm:$0xf]
    %v2524 = vld [vmem:[%s6 + $0x540] sm:$0xff]
    %v2525 = vld [vmem:[%s6 + $0x548] sm:$0xff]
    %v2526 = vld [vmem:[%s6 + $0x550] sm:$0xff]
    %v2527 = vld [vmem:[%s6 + $0x558] sm:$0xf]
    %v2528 = vld [vmem:[%s6 + $0x55c] sm:$0xff]
    %v2529 = vld [vmem:[%s6 + $0x564] sm:$0xff]
    %v2530 = vld [vmem:[%s6 + $0x56c] sm:$0xff]
    %v2531 = vld [vmem:[%s6 + $0x574] sm:$0xf]
    %v2532 = vld [vmem:[%s6 + $0x578] sm:$0xff]
    %v2533 = vld [vmem:[%s6 + $0x580] sm:$0xff]
    %v2534 = vld [vmem:[%s6 + $0x588] sm:$0xff]
    %v2535 = vld [vmem:[%s6 + $0x590] sm:$0xf]
    %v2536 = vld [vmem:[%s6 + $0x594] sm:$0xff]
    %v2537 = vld [vmem:[%s6 + $0x59c] sm:$0xff]
    %v2538 = vld [vmem:[%s6 + $0x5a4] sm:$0xff]
    %v2539 = vld [vmem:[%s6 + $0x5ac] sm:$0xf]
    %v2540 = vld [vmem:[%s6 + $0x5b0] sm:$0xff]
    %v2541 = vld [vmem:[%s6 + $0x5b8] sm:$0xff]
    %v2542 = vld [vmem:[%s6 + $0x5c0] sm:$0xff]
    %v2543 = vld [vmem:[%s6 + $0x5c8] sm:$0xf]
    %v2544 = vld [vmem:[%s6 + $0x5cc] sm:$0xff]
    %v2545 = vld [vmem:[%s6 + $0x5d4] sm:$0xff]
    %v2546 = vld [vmem:[%s6 + $0x5dc] sm:$0xff]
    %v2547 = vld [vmem:[%s6 + $0x5e4] sm:$0xf]
    %v2548 = vld [vmem:[%s6 + $0x5e8] sm:$0xff]
    %v2549 = vld [vmem:[%s6 + $0x5f0] sm:$0xff]
    %v2550 = vld [vmem:[%s6 + $0x5f8] sm:$0xff]
    %v2551 = vld [vmem:[%s6 + $0x600] sm:$0xf]
    %v2552 = vld [vmem:[%s6 + $0x604] sm:$0xff]
    %v2553 = vld [vmem:[%s6 + $0x60c] sm:$0xff]
    %v2554 = vld [vmem:[%s6 + $0x614] sm:$0xff]
    %v2555 = vld [vmem:[%s6 + $0x61c] sm:$0xf]
    %v2556 = vld [vmem:[%s6 + $0x620] sm:$0xff]
    %v2557 = vld [vmem:[%s6 + $0x628] sm:$0xff]
    %v2558 = vld [vmem:[%s6 + $0x630] sm:$0xff]
    %v2559 = vld [vmem:[%s6 + $0x638] sm:$0xf]
    %v2560 = vld [vmem:[%s6 + $0x63c] sm:$0xff]
    %v2561 = vld [vmem:[%s6 + $0x644] sm:$0xff]
    %v2562 = vld [vmem:[%s6 + $0x64c] sm:$0xff]
    %v2563 = vld [vmem:[%s6 + $0x654] sm:$0xf]
    %v2564 = vld [vmem:[%s6 + $0x658] sm:$0xff]
    %v2565 = vld [vmem:[%s6 + $0x660] sm:$0xff]
    %v2566 = vld [vmem:[%s6 + $0x668] sm:$0xff]
    %v2567 = vld [vmem:[%s6 + $0x670] sm:$0xf]
    %v2568 = vld [vmem:[%s6 + $0x674] sm:$0xff]
    %v2569 = vld [vmem:[%s6 + $0x67c] sm:$0xff]
    %v2570 = vld [vmem:[%s6 + $0x684] sm:$0xff]
    %v2571 = vld [vmem:[%s6 + $0x68c] sm:$0xf]
    %v2572 = vld [vmem:[%s6 + $0x690] sm:$0xff]
    %v2573 = vld [vmem:[%s6 + $0x698] sm:$0xff]
    %v2574 = vld [vmem:[%s6 + $0x6a0] sm:$0xff]
    %v2575 = vld [vmem:[%s6 + $0x6a8] sm:$0xf]
    %v2576 = vld [vmem:[%s6 + $0x6ac] sm:$0xff]
    %v2577 = vld [vmem:[%s6 + $0x6b4] sm:$0xff]
    %v2578 = vld [vmem:[%s6 + $0x6bc] sm:$0xff]
    %v2579 = vld [vmem:[%s6 + $0x6c4] sm:$0xf]
    %v2580 = vld [vmem:[%s6 + $0x6c8] sm:$0xff]
    %v2581 = vld [vmem:[%s6 + $0x6d0] sm:$0xff]
    %v2582 = vld [vmem:[%s6 + $0x6d8] sm:$0xff]
    %v2583 = vld [vmem:[%s6 + $0x6e0] sm:$0xf]
    %v2584 = vld [vmem:[%s6 + $0x6e4] sm:$0xff]
    %v2585 = vld [vmem:[%s6 + $0x6ec] sm:$0xff]
    %v2586 = vld [vmem:[%s6 + $0x6f4] sm:$0xff]
    %v2587 = vld [vmem:[%s6 + $0x6fc] sm:$0xf]
    %v2588 = vld [vmem:[%s6 + $0x700] sm:$0xff]
    %v2589 = vld [vmem:[%s6 + $0x708] sm:$0xff]
    %v2590 = vld [vmem:[%s6 + $0x710] sm:$0xff]
    %v2591 = vld [vmem:[%s6 + $0x718] sm:$0xf]
    %v2592 = vld [vmem:[%s6 + $0x71c] sm:$0xff]
    %v2593 = vld [vmem:[%s6 + $0x724] sm:$0xff]
    %v2594 = vld [vmem:[%s6 + $0x72c] sm:$0xff]
    %v2595 = vld [vmem:[%s6 + $0x734] sm:$0xf]
    %v2596 = vld [vmem:[%s6 + $0x738] sm:$0xff]
    %v2597 = vld [vmem:[%s6 + $0x740] sm:$0xff]
    %v2598 = vld [vmem:[%s6 + $0x748] sm:$0xff]
    %v2599 = vld [vmem:[%s6 + $0x750] sm:$0xf]
    %v2600 = vld [vmem:[%s6 + $0x754] sm:$0xff]
    %v2601 = vld [vmem:[%s6 + $0x75c] sm:$0xff]
    %v2602 = vld [vmem:[%s6 + $0x764] sm:$0xff]
    %v2603 = vld [vmem:[%s6 + $0x76c] sm:$0xf]
    %v2604 = vld [vmem:[%s6 + $0x770] sm:$0xff]
    %v2605 = vld [vmem:[%s6 + $0x778] sm:$0xff]
    %v2606 = vld [vmem:[%s6 + $0x780] sm:$0xff]
    %v2607 = vld [vmem:[%s6 + $0x788] sm:$0xf]
    %v2608 = vld [vmem:[%s6 + $0x78c] sm:$0xff]
    %v2609 = vld [vmem:[%s6 + $0x794] sm:$0xff]
    %v2610 = vld [vmem:[%s6 + $0x79c] sm:$0xff]
    %v2611 = vld [vmem:[%s6 + $0x7a4] sm:$0xf]
    %v2612 = vld [vmem:[%s6 + $0x7a8] sm:$0xff]
    %v2613 = vld [vmem:[%s6 + $0x7b0] sm:$0xff]
    %v2614 = vld [vmem:[%s6 + $0x7b8] sm:$0xff]
    %v2615 = vld [vmem:[%s6 + $0x7c0] sm:$0xf]
    %v2616 = vld [vmem:[%s6 + $0x7c4] sm:$0xff]
    %v2617 = vld [vmem:[%s6 + $0x7cc] sm:$0xff]
    %v2618 = vld [vmem:[%s6 + $0x7d4] sm:$0xff]
    %v2619 = vld [vmem:[%s6 + $0x7dc] sm:$0xf]
    %v2620 = vld [vmem:[%s6 + $0x7e0] sm:$0xff]
    %v2621 = vld [vmem:[%s6 + $0x7e8] sm:$0xff]
    %v2622 = vld [vmem:[%s6 + $0x7f0] sm:$0xff]
    %v2623 = vld [vmem:[%s6 + $0x7f8] sm:$0xf]
    %v2624 = vld [vmem:[%s6 + $0x7fc] sm:$0xff]
    %v2625 = vld [vmem:[%s6 + $0x804] sm:$0xff]
    %v2626 = vld [vmem:[%s6 + $0x80c] sm:$0xff]
    %v2627 = vld [vmem:[%s6 + $0x814] sm:$0xf]
    %v2628 = vld [vmem:[%s6 + $0x818] sm:$0xff]
    %v2629 = vld [vmem:[%s6 + $0x820] sm:$0xff]
    %v2630 = vld [vmem:[%s6 + $0x828] sm:$0xff]
    %v2631 = vld [vmem:[%s6 + $0x830] sm:$0xf]
    %v2632 = vld [vmem:[%s6 + $0x834] sm:$0xff]
    %v2633 = vld [vmem:[%s6 + $0x83c] sm:$0xff]
    %v2634 = vld [vmem:[%s6 + $0x844] sm:$0xff]
    %v2635 = vld [vmem:[%s6 + $0x84c] sm:$0xf]
    %v2636 = vld [vmem:[%s6 + $0x850] sm:$0xff]
    %v2637 = vld [vmem:[%s6 + $0x858] sm:$0xff]
    %v2638 = vld [vmem:[%s6 + $0x860] sm:$0xff]
    %v2639 = vld [vmem:[%s6 + $0x868] sm:$0xf]
    %v2640 = vld [vmem:[%s6 + $0x86c] sm:$0xff]
    %v2641 = vld [vmem:[%s6 + $0x874] sm:$0xff]
    %v2642 = vld [vmem:[%s6 + $0x87c] sm:$0xff]
    %v2643 = vld [vmem:[%s6 + $0x884] sm:$0xf]
    %v2644 = vld [vmem:[%s6 + $0x888] sm:$0xff]
    %v2645 = vld [vmem:[%s6 + $0x890] sm:$0xff]
    %v2646 = vld [vmem:[%s6 + $0x898] sm:$0xff]
    %v2647 = vld [vmem:[%s6 + $0x8a0] sm:$0xf]
    %v2648 = vld [vmem:[%s6 + $0x8a4] sm:$0xff]
    %v2649 = vld [vmem:[%s6 + $0x8ac] sm:$0xff]
    %v2650 = vld [vmem:[%s6 + $0x8b4] sm:$0xff]
    %v2651 = vld [vmem:[%s6 + $0x8bc] sm:$0xf]
    %v2652 = vld [vmem:[%s6 + $0x8c0] sm:$0xff]
    %v2653 = vld [vmem:[%s6 + $0x8c8] sm:$0xff]
    %v2654 = vld [vmem:[%s6 + $0x8d0] sm:$0xff]
    %v2655 = vld [vmem:[%s6 + $0x8d8] sm:$0xf]
    %v2656 = vld [vmem:[%s6 + $0x8dc] sm:$0xff]
    %v2657 = vld [vmem:[%s6 + $0x8e4] sm:$0xff]
    %v2658 = vld [vmem:[%s6 + $0x8ec] sm:$0xff]
    %v2659 = vld [vmem:[%s6 + $0x8f4] sm:$0xf]
    %v2660 = vld [vmem:[%s6 + $0x8f8] sm:$0xff]
    %v2661 = vld [vmem:[%s6 + $0x900] sm:$0xff]
    %v2662 = vld [vmem:[%s6 + $0x908] sm:$0xff]
    %v2663 = vld [vmem:[%s6 + $0x910] sm:$0xf]
    %v2664 = vld [vmem:[%s6 + $0x914] sm:$0xff]
    %v2665 = vld [vmem:[%s6 + $0x91c] sm:$0xff]
    %v2666 = vld [vmem:[%s6 + $0x924] sm:$0xff]
    %v2667 = vld [vmem:[%s6 + $0x92c] sm:$0xf]
    %v2668 = vld [vmem:[%s6 + $0x930] sm:$0xff]
    %v2669 = vld [vmem:[%s6 + $0x938] sm:$0xff]
    %v2670 = vld [vmem:[%s6 + $0x940] sm:$0xff]
    %v2671 = vld [vmem:[%s6 + $0x948] sm:$0xf]
    %v2672 = vld [vmem:[%s6 + $0x94c] sm:$0xff]
    %v2673 = vld [vmem:[%s6 + $0x954] sm:$0xff]
    %v2674 = vld [vmem:[%s6 + $0x95c] sm:$0xff]
    %v2675 = vld [vmem:[%s6 + $0x964] sm:$0xf]
    %v2676 = vld [vmem:[%s6 + $0x968] sm:$0xff]
    %v2677 = vld [vmem:[%s6 + $0x970] sm:$0xff]
    %v2678 = vld [vmem:[%s6 + $0x978] sm:$0xff]
    %v2679 = vld [vmem:[%s6 + $0x980] sm:$0xf]
    %v2680 = vld [vmem:[%s6 + $0x984] sm:$0xff]
    %v2681 = vld [vmem:[%s6 + $0x98c] sm:$0xff]
    %v2682 = vld [vmem:[%s6 + $0x994] sm:$0xff]
    %v2683 = vld [vmem:[%s6 + $0x99c] sm:$0xf]
    %v2684 = vld [vmem:[%s6 + $0x9a0] sm:$0xff]
    %v2685 = vld [vmem:[%s6 + $0x9a8] sm:$0xff]
    %v2686 = vld [vmem:[%s6 + $0x9b0] sm:$0xff]
    %v2687 = vld [vmem:[%s6 + $0x9b8] sm:$0xf]
    %v2688 = vld [vmem:[%s6 + $0x9bc] sm:$0xff]
    %v2689 = vld [vmem:[%s6 + $0x9c4] sm:$0xff]
    %v2690 = vld [vmem:[%s6 + $0x9cc] sm:$0xff]
    %v2691 = vld [vmem:[%s6 + $0x9d4] sm:$0xf]
    %v2692 = vld [vmem:[%s6 + $0x9d8] sm:$0xff]
    %v2693 = vld [vmem:[%s6 + $0x9e0] sm:$0xff]
    %v2694 = vld [vmem:[%s6 + $0x9e8] sm:$0xff]
    %v2695 = vld [vmem:[%s6 + $0x9f0] sm:$0xf]
    %v2696 = vld [vmem:[%s6 + $0x9f4] sm:$0xff]
    %v2697 = vld [vmem:[%s6 + $0x9fc] sm:$0xff]
    %v2698 = vld [vmem:[%s6 + $0xa04] sm:$0xff]
    %v2699 = vld [vmem:[%s6 + $0xa0c] sm:$0xf]
    %v2700 = vld [vmem:[%s6 + $0xa10] sm:$0xff]
    %v2701 = vld [vmem:[%s6 + $0xa18] sm:$0xff]
    %v2702 = vld [vmem:[%s6 + $0xa20] sm:$0xff]
    %v2703 = vld [vmem:[%s6 + $0xa28] sm:$0xf]
    %v2704 = vld [vmem:[%s6 + $0xa2c] sm:$0xff]
    %v2705 = vld [vmem:[%s6 + $0xa34] sm:$0xff]
    %v2706 = vld [vmem:[%s6 + $0xa3c] sm:$0xff]
    %v2707 = vld [vmem:[%s6 + $0xa44] sm:$0xf]
    %v2708 = vld [vmem:[%s6 + $0xa48] sm:$0xff]
    %v2709 = vld [vmem:[%s6 + $0xa50] sm:$0xff]
    %v2710 = vld [vmem:[%s6 + $0xa58] sm:$0xff]
    %v2711 = vld [vmem:[%s6 + $0xa60] sm:$0xf]
    %v2712 = vld [vmem:[%s6 + $0xa64] sm:$0xff]
    %v2713 = vld [vmem:[%s6 + $0xa6c] sm:$0xff]
    %v2714 = vld [vmem:[%s6 + $0xa74] sm:$0xff]
    %v2715 = vld [vmem:[%s6 + $0xa7c] sm:$0xf]
    %v2716 = vld [vmem:[%s6 + $0xa80] sm:$0xff]
    %v2717 = vld [vmem:[%s6 + $0xa88] sm:$0xff]
    %v2718 = vld [vmem:[%s6 + $0xa90] sm:$0xff]
    %v2719 = vld [vmem:[%s6 + $0xa98] sm:$0xf]
    %v2720 = vld [vmem:[%s6 + $0xa9c] sm:$0xff]
    %v2721 = vld [vmem:[%s6 + $0xaa4] sm:$0xff]
    %v2722 = vld [vmem:[%s6 + $0xaac] sm:$0xff]
    %v2723 = vld [vmem:[%s6 + $0xab4] sm:$0xf]
    %v2724 = vld [vmem:[%s6 + $0xab8] sm:$0xff]
    %v2725 = vld [vmem:[%s6 + $0xac0] sm:$0xff]
    %v2726 = vld [vmem:[%s6 + $0xac8] sm:$0xff]
    %v2727 = vld [vmem:[%s6 + $0xad0] sm:$0xf]
    %v2728 = vld [vmem:[%s6 + $0xad4] sm:$0xff]
    %v2729 = vld [vmem:[%s6 + $0xadc] sm:$0xff]
    %v2730 = vld [vmem:[%s6 + $0xae4] sm:$0xff]
    %v2731 = vld [vmem:[%s6 + $0xaec] sm:$0xf]
    %v2732 = vld [vmem:[%s6 + $0xaf0] sm:$0xff]
    %v2733 = vld [vmem:[%s6 + $0xaf8] sm:$0xff]
    %v2734 = vld [vmem:[%s6 + $0xb00] sm:$0xff]
    %v2735 = vld [vmem:[%s6 + $0xb08] sm:$0xf]
    %v2736 = vld [vmem:[%s6 + $0xb0c] sm:$0xff]
    %v2737 = vld [vmem:[%s6 + $0xb14] sm:$0xff]
    %v2738 = vld [vmem:[%s6 + $0xb1c] sm:$0xff]
    %v2739 = vld [vmem:[%s6 + $0xb24] sm:$0xf]
    %v2740 = vld [vmem:[%s6 + $0xb28] sm:$0xff]
    %v2741 = vld [vmem:[%s6 + $0xb30] sm:$0xff]
    %v2742 = vld [vmem:[%s6 + $0xb38] sm:$0xff]
    %v2743 = vld [vmem:[%s6 + $0xb40] sm:$0xf]
    %v2744 = vld [vmem:[%s6 + $0xb44] sm:$0xff]
    %v2745 = vld [vmem:[%s6 + $0xb4c] sm:$0xff]
    %v2746 = vld [vmem:[%s6 + $0xb54] sm:$0xff]
    %v2747 = vld [vmem:[%s6 + $0xb5c] sm:$0xf]
    %v2748 = vld [vmem:[%s6 + $0xb60] sm:$0xff]
    %v2749 = vld [vmem:[%s6 + $0xb68] sm:$0xff]
    %v2750 = vld [vmem:[%s6 + $0xb70] sm:$0xff]
    %v2751 = vld [vmem:[%s6 + $0xb78] sm:$0xf]
    %v2752 = vld [vmem:[%s6 + $0xb7c] sm:$0xff]
    %v2753 = vld [vmem:[%s6 + $0xb84] sm:$0xff]
    %v2754 = vld [vmem:[%s6 + $0xb8c] sm:$0xff]
    %v2755 = vld [vmem:[%s6 + $0xb94] sm:$0xf]
    %v2756 = vld [vmem:[%s6 + $0xb98] sm:$0xff]
    %v2757 = vld [vmem:[%s6 + $0xba0] sm:$0xff]
    %v2758 = vld [vmem:[%s6 + $0xba8] sm:$0xff]
    %v2759 = vld [vmem:[%s6 + $0xbb0] sm:$0xf]
    %v2760 = vld [vmem:[%s6 + $0xbb4] sm:$0xff]
    %v2761 = vld [vmem:[%s6 + $0xbbc] sm:$0xff]
    %v2762 = vld [vmem:[%s6 + $0xbc4] sm:$0xff]
    %v2763 = vld [vmem:[%s6 + $0xbcc] sm:$0xf]
    %v2764 = vld [vmem:[%s6 + $0xbd0] sm:$0xff]
    %v2765 = vld [vmem:[%s6 + $0xbd8] sm:$0xff]
    %v2766 = vld [vmem:[%s6 + $0xbe0] sm:$0xff]
    %v2767 = vld [vmem:[%s6 + $0xbe8] sm:$0xf]
    %v2768 = vld [vmem:[%s6 + $0xbec] sm:$0xff]
    %v2769 = vld [vmem:[%s6 + $0xbf4] sm:$0xff]
    %v2770 = vld [vmem:[%s6 + $0xbfc] sm:$0xff]
    %v2771 = vld [vmem:[%s6 + $0xc04] sm:$0xf]
    %v2772 = vld [vmem:[%s6 + $0xc08] sm:$0xff]
    %v2773 = vld [vmem:[%s6 + $0xc10] sm:$0xff]
    %v2774 = vld [vmem:[%s6 + $0xc18] sm:$0xff]
    %v2775 = vld [vmem:[%s6 + $0xc20] sm:$0xf]
    %v2776 = vld [vmem:[%s6 + $0xc24] sm:$0xff]
    %v2777 = vld [vmem:[%s6 + $0xc2c] sm:$0xff]
    %v2778 = vld [vmem:[%s6 + $0xc34] sm:$0xff]
    %v2779 = vld [vmem:[%s6 + $0xc3c] sm:$0xf]
    %v2780 = vld [vmem:[%s6 + $0xc40] sm:$0xff]
    %v2781 = vld [vmem:[%s6 + $0xc48] sm:$0xff]
    %v2782 = vld [vmem:[%s6 + $0xc50] sm:$0xff]
    %v2783 = vld [vmem:[%s6 + $0xc58] sm:$0xf]
    %v2784 = vld [vmem:[%s6 + $0xc5c] sm:$0xff]
    %v2785 = vld [vmem:[%s6 + $0xc64] sm:$0xff]
    %v2786 = vld [vmem:[%s6 + $0xc6c] sm:$0xff]
    %v2787 = vld [vmem:[%s6 + $0xc74] sm:$0xf]
    %v2788 = vld [vmem:[%s6 + $0xc78] sm:$0xff]
    %v2789 = vld [vmem:[%s6 + $0xc80] sm:$0xff]
    %v2790 = vld [vmem:[%s6 + $0xc88] sm:$0xff]
    %v2791 = vld [vmem:[%s6 + $0xc90] sm:$0xf]
    %v2792 = vld [vmem:[%s6 + $0xc94] sm:$0xff]
    %v2793 = vld [vmem:[%s6 + $0xc9c] sm:$0xff]
    %v2794 = vld [vmem:[%s6 + $0xca4] sm:$0xff]
    %v2795 = vld [vmem:[%s6 + $0xcac] sm:$0xf]
    %v2796 = vld [vmem:[%s6 + $0xcb0] sm:$0xff]
    %v2797 = vld [vmem:[%s6 + $0xcb8] sm:$0xff]
    %v2798 = vld [vmem:[%s6 + $0xcc0] sm:$0xff]
    %v2799 = vld [vmem:[%s6 + $0xcc8] sm:$0xf]
    %v2800 = vld [vmem:[%s6 + $0xccc] sm:$0xff]
    %v2801 = vld [vmem:[%s6 + $0xcd4] sm:$0xff]
    %v2802 = vld [vmem:[%s6 + $0xcdc] sm:$0xff]
    %v2803 = vld [vmem:[%s6 + $0xce4] sm:$0xf]
    %v2804 = vld [vmem:[%s6 + $0xce8] sm:$0xff]
    %v2805 = vld [vmem:[%s6 + $0xcf0] sm:$0xff]
    %v2806 = vld [vmem:[%s6 + $0xcf8] sm:$0xff]
    %v2807 = vld [vmem:[%s6 + $0xd00] sm:$0xf]
    %v2808 = vld [vmem:[%s6 + $0xd04] sm:$0xff]
    %v2809 = vld [vmem:[%s6 + $0xd0c] sm:$0xff]
    %v2810 = vld [vmem:[%s6 + $0xd14] sm:$0xff]
    %v2811 = vld [vmem:[%s6 + $0xd1c] sm:$0xf]
    %v2812 = vld [vmem:[%s6 + $0xd20] sm:$0xff]
    %v2813 = vld [vmem:[%s6 + $0xd28] sm:$0xff]
    %v2814 = vld [vmem:[%s6 + $0xd30] sm:$0xff]
    %v2815 = vld [vmem:[%s6 + $0xd38] sm:$0xf]
    %v2816 = vld [vmem:[%s6 + $0xd3c] sm:$0xff]
    %v2817 = vld [vmem:[%s6 + $0xd44] sm:$0xff]
    %v2818 = vld [vmem:[%s6 + $0xd4c] sm:$0xff]
    %v2819 = vld [vmem:[%s6 + $0xd54] sm:$0xf]
    %v2820 = vld [vmem:[%s6 + $0xd58] sm:$0xff]
    %v2821 = vld [vmem:[%s6 + $0xd60] sm:$0xff]
    %v2822 = vld [vmem:[%s6 + $0xd68] sm:$0xff]
    %v2823 = vld [vmem:[%s6 + $0xd70] sm:$0xf]
    %v2824 = vld [vmem:[%s6 + $0xd74] sm:$0xff]
    %v2825 = vld [vmem:[%s6 + $0xd7c] sm:$0xff]
    %v2826 = vld [vmem:[%s6 + $0xd84] sm:$0xff]
    %v2827 = vld [vmem:[%s6 + $0xd8c] sm:$0xf]
    %v2828 = vld [vmem:[%s6 + $0xd90] sm:$0xff]
    %v2829 = vld [vmem:[%s6 + $0xd98] sm:$0xff]
    %v2830 = vld [vmem:[%s6 + $0xda0] sm:$0xff]
    %v2831 = vld [vmem:[%s6 + $0xda8] sm:$0xf]
    %v2832 = vld [vmem:[%s6 + $0xdac] sm:$0xff]
    %v2833 = vld [vmem:[%s6 + $0xdb4] sm:$0xff]
    %v2834 = vld [vmem:[%s6 + $0xdbc] sm:$0xff]
    %v2835 = vld [vmem:[%s6 + $0xdc4] sm:$0xf]
    %v2836 = vld [vmem:[%s6 + $0xdc8] sm:$0xff]
    %v2837 = vld [vmem:[%s6 + $0xdd0] sm:$0xff]
    %v2838 = vld [vmem:[%s6 + $0xdd8] sm:$0xff]
    %v2839 = vld [vmem:[%s6 + $0xde0] sm:$0xf]
    %v2840 = vld [vmem:[%s6 + $0xde4] sm:$0xff]
    %v2841 = vld [vmem:[%s6 + $0xdec] sm:$0xff]
    %v2842 = vld [vmem:[%s6 + $0xdf4] sm:$0xff]
    %v2843 = vld [vmem:[%s6 + $0xdfc] sm:$0xf]
    %v2844 = vld [vmem:[%s7] sm:$0x7f]
    %v2846 = vlaneseq
    %v2847 = vshrl.u32 %v2846, 7
    %v2848 = vsub.s32 0, %v2847
    %v2849 = vrot.slane %v2844, %v2848
    %v2850 = vlaneseq
    %v2851 = vshrl.u32 %v2850, 7
    %v2852 = vsub.s32 1, %v2851
    %v2853 = vrot.slane %v2844, %v2852
    %v2854 = vlaneseq
    %v2855 = vshrl.u32 %v2854, 7
    %v2856 = vsub.s32 2, %v2855
    %v2857 = vrot.slane %v2844, %v2856
    %v2858 = vlaneseq
    %v2859 = vshrl.u32 %v2858, 7
    %v2860 = vsub.s32 3, %v2859
    %v2861 = vrot.slane %v2844, %v2860
    %v2862 = vlaneseq
    %v2863 = vshrl.u32 %v2862, 7
    %v2864 = vsub.s32 4, %v2863
    %v2865 = vrot.slane %v2844, %v2864
    %v2866 = vlaneseq
    %v2867 = vshrl.u32 %v2866, 7
    %v2868 = vsub.s32 5, %v2867
    %v2869 = vrot.slane %v2844, %v2868
    %v2870 = vlaneseq
    %v2871 = vshrl.u32 %v2870, 7
    %v2872 = vsub.s32 6, %v2871
    %v2873 = vrot.slane %v2844, %v2872
    %v3393 = vunpack.c.l.b16 %v2332
    %v3394 = vunpack.c.h.b16 %v2332
    %v3395 = vunpack.c.l.b16 %v2333
    %v3396 = vunpack.c.h.b16 %v2333
    %v3397 = vunpack.c.l.b16 %v2334
    %v3398 = vunpack.c.h.b16 %v2334
    %v3399 = vunpack.c.l.b16 %v2335
    %v3400 = vunpack.c.l.b16 %v2336
    %v3401 = vunpack.c.h.b16 %v2336
    %v3402 = vunpack.c.l.b16 %v2337
    %v3403 = vunpack.c.h.b16 %v2337
    %v3404 = vunpack.c.l.b16 %v2338
    %v3405 = vunpack.c.h.b16 %v2338
    %v3406 = vunpack.c.l.b16 %v2339
    %v3407 = vunpack.c.l.b16 %v2340
    %v3408 = vunpack.c.h.b16 %v2340
    %v3409 = vunpack.c.l.b16 %v2341
    %v3410 = vunpack.c.h.b16 %v2341
    %v3411 = vunpack.c.l.b16 %v2342
    %v3412 = vunpack.c.h.b16 %v2342
    %v3413 = vunpack.c.l.b16 %v2343
    %v3414 = vunpack.c.l.b16 %v2344
    %v3415 = vunpack.c.h.b16 %v2344
    %v3416 = vunpack.c.l.b16 %v2345
    %v3417 = vunpack.c.h.b16 %v2345
    %v3418 = vunpack.c.l.b16 %v2346
    %v3419 = vunpack.c.h.b16 %v2346
    %v3420 = vunpack.c.l.b16 %v2347
    %v3421 = vunpack.c.l.b16 %v2348
    %v3422 = vunpack.c.h.b16 %v2348
    %v3423 = vunpack.c.l.b16 %v2349
    %v3424 = vunpack.c.h.b16 %v2349
    %v3425 = vunpack.c.l.b16 %v2350
    %v3426 = vunpack.c.h.b16 %v2350
    %v3427 = vunpack.c.l.b16 %v2351
    %v3428 = vunpack.c.l.b16 %v2352
    %v3429 = vunpack.c.h.b16 %v2352
    %v3430 = vunpack.c.l.b16 %v2353
    %v3431 = vunpack.c.h.b16 %v2353
    %v3432 = vunpack.c.l.b16 %v2354
    %v3433 = vunpack.c.h.b16 %v2354
    %v3434 = vunpack.c.l.b16 %v2355
    %v3435 = vunpack.c.l.b16 %v2356
    %v3436 = vunpack.c.h.b16 %v2356
    %v3437 = vunpack.c.l.b16 %v2357
    %v3438 = vunpack.c.h.b16 %v2357
    %v3439 = vunpack.c.l.b16 %v2358
    %v3440 = vunpack.c.h.b16 %v2358
    %v3441 = vunpack.c.l.b16 %v2359
    %v3442 = vunpack.c.l.b16 %v2360
    %v3443 = vunpack.c.h.b16 %v2360
    %v3444 = vunpack.c.l.b16 %v2361
    %v3445 = vunpack.c.h.b16 %v2361
    %v3446 = vunpack.c.l.b16 %v2362
    %v3447 = vunpack.c.h.b16 %v2362
    %v3448 = vunpack.c.l.b16 %v2363
    %v3449 = vunpack.c.l.b16 %v2364
    %v3450 = vunpack.c.h.b16 %v2364
    %v3451 = vunpack.c.l.b16 %v2365
    %v3452 = vunpack.c.h.b16 %v2365
    %v3453 = vunpack.c.l.b16 %v2366
    %v3454 = vunpack.c.h.b16 %v2366
    %v3455 = vunpack.c.l.b16 %v2367
    %v3456 = vunpack.c.l.b16 %v2368
    %v3457 = vunpack.c.h.b16 %v2368
    %v3458 = vunpack.c.l.b16 %v2369
    %v3459 = vunpack.c.h.b16 %v2369
    %v3460 = vunpack.c.l.b16 %v2370
    %v3461 = vunpack.c.h.b16 %v2370
    %v3462 = vunpack.c.l.b16 %v2371
    %v3463 = vunpack.c.l.b16 %v2372
    %v3464 = vunpack.c.h.b16 %v2372
    %v3465 = vunpack.c.l.b16 %v2373
    %v3466 = vunpack.c.h.b16 %v2373
    %v3467 = vunpack.c.l.b16 %v2374
    %v3468 = vunpack.c.h.b16 %v2374
    %v3469 = vunpack.c.l.b16 %v2375
    %v3470 = vunpack.c.l.b16 %v2376
    %v3471 = vunpack.c.h.b16 %v2376
    %v3472 = vunpack.c.l.b16 %v2377
    %v3473 = vunpack.c.h.b16 %v2377
    %v3474 = vunpack.c.l.b16 %v2378
    %v3475 = vunpack.c.h.b16 %v2378
    %v3476 = vunpack.c.l.b16 %v2379
    %v3477 = vunpack.c.l.b16 %v2380
    %v3478 = vunpack.c.h.b16 %v2380
    %v3479 = vunpack.c.l.b16 %v2381
    %v3480 = vunpack.c.h.b16 %v2381
    %v3481 = vunpack.c.l.b16 %v2382
    %v3482 = vunpack.c.h.b16 %v2382
    %v3483 = vunpack.c.l.b16 %v2383
    %v3484 = vunpack.c.l.b16 %v2384
    %v3485 = vunpack.c.h.b16 %v2384
    %v3486 = vunpack.c.l.b16 %v2385
    %v3487 = vunpack.c.h.b16 %v2385
    %v3488 = vunpack.c.l.b16 %v2386
    %v3489 = vunpack.c.h.b16 %v2386
    %v3490 = vunpack.c.l.b16 %v2387
    %v3491 = vunpack.c.l.b16 %v2388
    %v3492 = vunpack.c.h.b16 %v2388
    %v3493 = vunpack.c.l.b16 %v2389
    %v3494 = vunpack.c.h.b16 %v2389
    %v3495 = vunpack.c.l.b16 %v2390
    %v3496 = vunpack.c.h.b16 %v2390
    %v3497 = vunpack.c.l.b16 %v2391
    %v3498 = vunpack.c.l.b16 %v2392
    %v3499 = vunpack.c.h.b16 %v2392
    %v3500 = vunpack.c.l.b16 %v2393
    %v3501 = vunpack.c.h.b16 %v2393
    %v3502 = vunpack.c.l.b16 %v2394
    %v3503 = vunpack.c.h.b16 %v2394
    %v3504 = vunpack.c.l.b16 %v2395
    %v3505 = vunpack.c.l.b16 %v2396
    %v3506 = vunpack.c.h.b16 %v2396
    %v3507 = vunpack.c.l.b16 %v2397
    %v3508 = vunpack.c.h.b16 %v2397
    %v3509 = vunpack.c.l.b16 %v2398
    %v3510 = vunpack.c.h.b16 %v2398
    %v3511 = vunpack.c.l.b16 %v2399
    %v3512 = vunpack.c.l.b16 %v2400
    %v3513 = vunpack.c.h.b16 %v2400
    %v3514 = vunpack.c.l.b16 %v2401
    %v3515 = vunpack.c.h.b16 %v2401
    %v3516 = vunpack.c.l.b16 %v2402
    %v3517 = vunpack.c.h.b16 %v2402
    %v3518 = vunpack.c.l.b16 %v2403
    %v3519 = vunpack.c.l.b16 %v2404
    %v3520 = vunpack.c.h.b16 %v2404
    %v3521 = vunpack.c.l.b16 %v2405
    %v3522 = vunpack.c.h.b16 %v2405
    %v3523 = vunpack.c.l.b16 %v2406
    %v3524 = vunpack.c.h.b16 %v2406
    %v3525 = vunpack.c.l.b16 %v2407
    %v3526 = vunpack.c.l.b16 %v2408
    %v3527 = vunpack.c.h.b16 %v2408
    %v3528 = vunpack.c.l.b16 %v2409
    %v3529 = vunpack.c.h.b16 %v2409
    %v3530 = vunpack.c.l.b16 %v2410
    %v3531 = vunpack.c.h.b16 %v2410
    %v3532 = vunpack.c.l.b16 %v2411
    %v3533 = vunpack.c.l.b16 %v2412
    %v3534 = vunpack.c.h.b16 %v2412
    %v3535 = vunpack.c.l.b16 %v2413
    %v3536 = vunpack.c.h.b16 %v2413
    %v3537 = vunpack.c.l.b16 %v2414
    %v3538 = vunpack.c.h.b16 %v2414
    %v3539 = vunpack.c.l.b16 %v2415
    %v3540 = vunpack.c.l.b16 %v2416
    %v3541 = vunpack.c.h.b16 %v2416
    %v3542 = vunpack.c.l.b16 %v2417
    %v3543 = vunpack.c.h.b16 %v2417
    %v3544 = vunpack.c.l.b16 %v2418
    %v3545 = vunpack.c.h.b16 %v2418
    %v3546 = vunpack.c.l.b16 %v2419
    %v3547 = vunpack.c.l.b16 %v2420
    %v3548 = vunpack.c.h.b16 %v2420
    %v3549 = vunpack.c.l.b16 %v2421
    %v3550 = vunpack.c.h.b16 %v2421
    %v3551 = vunpack.c.l.b16 %v2422
    %v3552 = vunpack.c.h.b16 %v2422
    %v3553 = vunpack.c.l.b16 %v2423
    %v3554 = vunpack.c.l.b16 %v2424
    %v3555 = vunpack.c.h.b16 %v2424
    %v3556 = vunpack.c.l.b16 %v2425
    %v3557 = vunpack.c.h.b16 %v2425
    %v3558 = vunpack.c.l.b16 %v2426
    %v3559 = vunpack.c.h.b16 %v2426
    %v3560 = vunpack.c.l.b16 %v2427
    %v3561 = vunpack.c.l.b16 %v2428
    %v3562 = vunpack.c.h.b16 %v2428
    %v3563 = vunpack.c.l.b16 %v2429
    %v3564 = vunpack.c.h.b16 %v2429
    %v3565 = vunpack.c.l.b16 %v2430
    %v3566 = vunpack.c.h.b16 %v2430
    %v3567 = vunpack.c.l.b16 %v2431
    %v3568 = vunpack.c.l.b16 %v2432
    %v3569 = vunpack.c.h.b16 %v2432
    %v3570 = vunpack.c.l.b16 %v2433
    %v3571 = vunpack.c.h.b16 %v2433
    %v3572 = vunpack.c.l.b16 %v2434
    %v3573 = vunpack.c.h.b16 %v2434
    %v3574 = vunpack.c.l.b16 %v2435
    %v3575 = vunpack.c.l.b16 %v2436
    %v3576 = vunpack.c.h.b16 %v2436
    %v3577 = vunpack.c.l.b16 %v2437
    %v3578 = vunpack.c.h.b16 %v2437
    %v3579 = vunpack.c.l.b16 %v2438
    %v3580 = vunpack.c.h.b16 %v2438
    %v3581 = vunpack.c.l.b16 %v2439
    %v3582 = vunpack.c.l.b16 %v2440
    %v3583 = vunpack.c.h.b16 %v2440
    %v3584 = vunpack.c.l.b16 %v2441
    %v3585 = vunpack.c.h.b16 %v2441
    %v3586 = vunpack.c.l.b16 %v2442
    %v3587 = vunpack.c.h.b16 %v2442
    %v3588 = vunpack.c.l.b16 %v2443
    %v3589 = vunpack.c.l.b16 %v2444
    %v3590 = vunpack.c.h.b16 %v2444
    %v3591 = vunpack.c.l.b16 %v2445
    %v3592 = vunpack.c.h.b16 %v2445
    %v3593 = vunpack.c.l.b16 %v2446
    %v3594 = vunpack.c.h.b16 %v2446
    %v3595 = vunpack.c.l.b16 %v2447
    %v3596 = vunpack.c.l.b16 %v2448
    %v3597 = vunpack.c.h.b16 %v2448
    %v3598 = vunpack.c.l.b16 %v2449
    %v3599 = vunpack.c.h.b16 %v2449
    %v3600 = vunpack.c.l.b16 %v2450
    %v3601 = vunpack.c.h.b16 %v2450
    %v3602 = vunpack.c.l.b16 %v2451
    %v3603 = vunpack.c.l.b16 %v2452
    %v3604 = vunpack.c.h.b16 %v2452
    %v3605 = vunpack.c.l.b16 %v2453
    %v3606 = vunpack.c.h.b16 %v2453
    %v3607 = vunpack.c.l.b16 %v2454
    %v3608 = vunpack.c.h.b16 %v2454
    %v3609 = vunpack.c.l.b16 %v2455
    %v3610 = vunpack.c.l.b16 %v2456
    %v3611 = vunpack.c.h.b16 %v2456
    %v3612 = vunpack.c.l.b16 %v2457
    %v3613 = vunpack.c.h.b16 %v2457
    %v3614 = vunpack.c.l.b16 %v2458
    %v3615 = vunpack.c.h.b16 %v2458
    %v3616 = vunpack.c.l.b16 %v2459
    %v3617 = vunpack.c.l.b16 %v2460
    %v3618 = vunpack.c.h.b16 %v2460
    %v3619 = vunpack.c.l.b16 %v2461
    %v3620 = vunpack.c.h.b16 %v2461
    %v3621 = vunpack.c.l.b16 %v2462
    %v3622 = vunpack.c.h.b16 %v2462
    %v3623 = vunpack.c.l.b16 %v2463
    %v3624 = vunpack.c.l.b16 %v2464
    %v3625 = vunpack.c.h.b16 %v2464
    %v3626 = vunpack.c.l.b16 %v2465
    %v3627 = vunpack.c.h.b16 %v2465
    %v3628 = vunpack.c.l.b16 %v2466
    %v3629 = vunpack.c.h.b16 %v2466
    %v3630 = vunpack.c.l.b16 %v2467
    %v3631 = vunpack.c.l.b16 %v2468
    %v3632 = vunpack.c.h.b16 %v2468
    %v3633 = vunpack.c.l.b16 %v2469
    %v3634 = vunpack.c.h.b16 %v2469
    %v3635 = vunpack.c.l.b16 %v2470
    %v3636 = vunpack.c.h.b16 %v2470
    %v3637 = vunpack.c.l.b16 %v2471
    %v3638 = vunpack.c.l.b16 %v2472
    %v3639 = vunpack.c.h.b16 %v2472
    %v3640 = vunpack.c.l.b16 %v2473
    %v3641 = vunpack.c.h.b16 %v2473
    %v3642 = vunpack.c.l.b16 %v2474
    %v3643 = vunpack.c.h.b16 %v2474
    %v3644 = vunpack.c.l.b16 %v2475
    %v3645 = vunpack.c.l.b16 %v2476
    %v3646 = vunpack.c.h.b16 %v2476
    %v3647 = vunpack.c.l.b16 %v2477
    %v3648 = vunpack.c.h.b16 %v2477
    %v3649 = vunpack.c.l.b16 %v2478
    %v3650 = vunpack.c.h.b16 %v2478
    %v3651 = vunpack.c.l.b16 %v2479
    %v3652 = vunpack.c.l.b16 %v2480
    %v3653 = vunpack.c.h.b16 %v2480
    %v3654 = vunpack.c.l.b16 %v2481
    %v3655 = vunpack.c.h.b16 %v2481
    %v3656 = vunpack.c.l.b16 %v2482
    %v3657 = vunpack.c.h.b16 %v2482
    %v3658 = vunpack.c.l.b16 %v2483
    %v3659 = vunpack.c.l.b16 %v2484
    %v3660 = vunpack.c.h.b16 %v2484
    %v3661 = vunpack.c.l.b16 %v2485
    %v3662 = vunpack.c.h.b16 %v2485
    %v3663 = vunpack.c.l.b16 %v2486
    %v3664 = vunpack.c.h.b16 %v2486
    %v3665 = vunpack.c.l.b16 %v2487
    %v3666 = vunpack.c.l.b16 %v2488
    %v3667 = vunpack.c.h.b16 %v2488
    %v3668 = vunpack.c.l.b16 %v2489
    %v3669 = vunpack.c.h.b16 %v2489
    %v3670 = vunpack.c.l.b16 %v2490
    %v3671 = vunpack.c.h.b16 %v2490
    %v3672 = vunpack.c.l.b16 %v2491
    %v3673 = vunpack.c.l.b16 %v2492
    %v3674 = vunpack.c.h.b16 %v2492
    %v3675 = vunpack.c.l.b16 %v2493
    %v3676 = vunpack.c.h.b16 %v2493
    %v3677 = vunpack.c.l.b16 %v2494
    %v3678 = vunpack.c.h.b16 %v2494
    %v3679 = vunpack.c.l.b16 %v2495
    %v3680 = vunpack.c.l.b16 %v2496
    %v3681 = vunpack.c.h.b16 %v2496
    %v3682 = vunpack.c.l.b16 %v2497
    %v3683 = vunpack.c.h.b16 %v2497
    %v3684 = vunpack.c.l.b16 %v2498
    %v3685 = vunpack.c.h.b16 %v2498
    %v3686 = vunpack.c.l.b16 %v2499
    %v3687 = vunpack.c.l.b16 %v2500
    %v3688 = vunpack.c.h.b16 %v2500
    %v3689 = vunpack.c.l.b16 %v2501
    %v3690 = vunpack.c.h.b16 %v2501
    %v3691 = vunpack.c.l.b16 %v2502
    %v3692 = vunpack.c.h.b16 %v2502
    %v3693 = vunpack.c.l.b16 %v2503
    %v3694 = vunpack.c.l.b16 %v2504
    %v3695 = vunpack.c.h.b16 %v2504
    %v3696 = vunpack.c.l.b16 %v2505
    %v3697 = vunpack.c.h.b16 %v2505
    %v3698 = vunpack.c.l.b16 %v2506
    %v3699 = vunpack.c.h.b16 %v2506
    %v3700 = vunpack.c.l.b16 %v2507
    %v3701 = vunpack.c.l.b16 %v2508
    %v3702 = vunpack.c.h.b16 %v2508
    %v3703 = vunpack.c.l.b16 %v2509
    %v3704 = vunpack.c.h.b16 %v2509
    %v3705 = vunpack.c.l.b16 %v2510
    %v3706 = vunpack.c.h.b16 %v2510
    %v3707 = vunpack.c.l.b16 %v2511
    %v3708 = vunpack.c.l.b16 %v2512
    %v3709 = vunpack.c.h.b16 %v2512
    %v3710 = vunpack.c.l.b16 %v2513
    %v3711 = vunpack.c.h.b16 %v2513
    %v3712 = vunpack.c.l.b16 %v2514
    %v3713 = vunpack.c.h.b16 %v2514
    %v3714 = vunpack.c.l.b16 %v2515
    %v3715 = vunpack.c.l.b16 %v2516
    %v3716 = vunpack.c.h.b16 %v2516
    %v3717 = vunpack.c.l.b16 %v2517
    %v3718 = vunpack.c.h.b16 %v2517
    %v3719 = vunpack.c.l.b16 %v2518
    %v3720 = vunpack.c.h.b16 %v2518
    %v3721 = vunpack.c.l.b16 %v2519
    %v3722 = vunpack.c.l.b16 %v2520
    %v3723 = vunpack.c.h.b16 %v2520
    %v3724 = vunpack.c.l.b16 %v2521
    %v3725 = vunpack.c.h.b16 %v2521
    %v3726 = vunpack.c.l.b16 %v2522
    %v3727 = vunpack.c.h.b16 %v2522
    %v3728 = vunpack.c.l.b16 %v2523
    %v3729 = vunpack.c.l.b16 %v2524
    %v3730 = vunpack.c.h.b16 %v2524
    %v3731 = vunpack.c.l.b16 %v2525
    %v3732 = vunpack.c.h.b16 %v2525
    %v3733 = vunpack.c.l.b16 %v2526
    %v3734 = vunpack.c.h.b16 %v2526
    %v3735 = vunpack.c.l.b16 %v2527
    %v3736 = vunpack.c.l.b16 %v2528
    %v3737 = vunpack.c.h.b16 %v2528
    %v3738 = vunpack.c.l.b16 %v2529
    %v3739 = vunpack.c.h.b16 %v2529
    %v3740 = vunpack.c.l.b16 %v2530
    %v3741 = vunpack.c.h.b16 %v2530
    %v3742 = vunpack.c.l.b16 %v2531
    %v3743 = vunpack.c.l.b16 %v2532
    %v3744 = vunpack.c.h.b16 %v2532
    %v3745 = vunpack.c.l.b16 %v2533
    %v3746 = vunpack.c.h.b16 %v2533
    %v3747 = vunpack.c.l.b16 %v2534
    %v3748 = vunpack.c.h.b16 %v2534
    %v3749 = vunpack.c.l.b16 %v2535
    %v3750 = vunpack.c.l.b16 %v2536
    %v3751 = vunpack.c.h.b16 %v2536
    %v3752 = vunpack.c.l.b16 %v2537
    %v3753 = vunpack.c.h.b16 %v2537
    %v3754 = vunpack.c.l.b16 %v2538
    %v3755 = vunpack.c.h.b16 %v2538
    %v3756 = vunpack.c.l.b16 %v2539
    %v3757 = vunpack.c.l.b16 %v2540
    %v3758 = vunpack.c.h.b16 %v2540
    %v3759 = vunpack.c.l.b16 %v2541
    %v3760 = vunpack.c.h.b16 %v2541
    %v3761 = vunpack.c.l.b16 %v2542
    %v3762 = vunpack.c.h.b16 %v2542
    %v3763 = vunpack.c.l.b16 %v2543
    %v3764 = vunpack.c.l.b16 %v2544
    %v3765 = vunpack.c.h.b16 %v2544
    %v3766 = vunpack.c.l.b16 %v2545
    %v3767 = vunpack.c.h.b16 %v2545
    %v3768 = vunpack.c.l.b16 %v2546
    %v3769 = vunpack.c.h.b16 %v2546
    %v3770 = vunpack.c.l.b16 %v2547
    %v3771 = vunpack.c.l.b16 %v2548
    %v3772 = vunpack.c.h.b16 %v2548
    %v3773 = vunpack.c.l.b16 %v2549
    %v3774 = vunpack.c.h.b16 %v2549
    %v3775 = vunpack.c.l.b16 %v2550
    %v3776 = vunpack.c.h.b16 %v2550
    %v3777 = vunpack.c.l.b16 %v2551
    %v3778 = vunpack.c.l.b16 %v2552
    %v3779 = vunpack.c.h.b16 %v2552
    %v3780 = vunpack.c.l.b16 %v2553
    %v3781 = vunpack.c.h.b16 %v2553
    %v3782 = vunpack.c.l.b16 %v2554
    %v3783 = vunpack.c.h.b16 %v2554
    %v3784 = vunpack.c.l.b16 %v2555
    %v3785 = vunpack.c.l.b16 %v2556
    %v3786 = vunpack.c.h.b16 %v2556
    %v3787 = vunpack.c.l.b16 %v2557
    %v3788 = vunpack.c.h.b16 %v2557
    %v3789 = vunpack.c.l.b16 %v2558
    %v3790 = vunpack.c.h.b16 %v2558
    %v3791 = vunpack.c.l.b16 %v2559
    %v3792 = vunpack.c.l.b16 %v2560
    %v3793 = vunpack.c.h.b16 %v2560
    %v3794 = vunpack.c.l.b16 %v2561
    %v3795 = vunpack.c.h.b16 %v2561
    %v3796 = vunpack.c.l.b16 %v2562
    %v3797 = vunpack.c.h.b16 %v2562
    %v3798 = vunpack.c.l.b16 %v2563
    %v3799 = vunpack.c.l.b16 %v2564
    %v3800 = vunpack.c.h.b16 %v2564
    %v3801 = vunpack.c.l.b16 %v2565
    %v3802 = vunpack.c.h.b16 %v2565
    %v3803 = vunpack.c.l.b16 %v2566
    %v3804 = vunpack.c.h.b16 %v2566
    %v3805 = vunpack.c.l.b16 %v2567
    %v3806 = vunpack.c.l.b16 %v2568
    %v3807 = vunpack.c.h.b16 %v2568
    %v3808 = vunpack.c.l.b16 %v2569
    %v3809 = vunpack.c.h.b16 %v2569
    %v3810 = vunpack.c.l.b16 %v2570
    %v3811 = vunpack.c.h.b16 %v2570
    %v3812 = vunpack.c.l.b16 %v2571
    %v3813 = vunpack.c.l.b16 %v2572
    %v3814 = vunpack.c.h.b16 %v2572
    %v3815 = vunpack.c.l.b16 %v2573
    %v3816 = vunpack.c.h.b16 %v2573
    %v3817 = vunpack.c.l.b16 %v2574
    %v3818 = vunpack.c.h.b16 %v2574
    %v3819 = vunpack.c.l.b16 %v2575
    %v3820 = vunpack.c.l.b16 %v2576
    %v3821 = vunpack.c.h.b16 %v2576
    %v3822 = vunpack.c.l.b16 %v2577
    %v3823 = vunpack.c.h.b16 %v2577
    %v3824 = vunpack.c.l.b16 %v2578
    %v3825 = vunpack.c.h.b16 %v2578
    %v3826 = vunpack.c.l.b16 %v2579
    %v3827 = vunpack.c.l.b16 %v2580
    %v3828 = vunpack.c.h.b16 %v2580
    %v3829 = vunpack.c.l.b16 %v2581
    %v3830 = vunpack.c.h.b16 %v2581
    %v3831 = vunpack.c.l.b16 %v2582
    %v3832 = vunpack.c.h.b16 %v2582
    %v3833 = vunpack.c.l.b16 %v2583
    %v3834 = vunpack.c.l.b16 %v2584
    %v3835 = vunpack.c.h.b16 %v2584
    %v3836 = vunpack.c.l.b16 %v2585
    %v3837 = vunpack.c.h.b16 %v2585
    %v3838 = vunpack.c.l.b16 %v2586
    %v3839 = vunpack.c.h.b16 %v2586
    %v3840 = vunpack.c.l.b16 %v2587
    %v3841 = vunpack.c.l.b16 %v2588
    %v3842 = vunpack.c.h.b16 %v2588
    %v3843 = vunpack.c.l.b16 %v2589
    %v3844 = vunpack.c.h.b16 %v2589
    %v3845 = vunpack.c.l.b16 %v2590
    %v3846 = vunpack.c.h.b16 %v2590
    %v3847 = vunpack.c.l.b16 %v2591
    %v3848 = vunpack.c.l.b16 %v2592
    %v3849 = vunpack.c.h.b16 %v2592
    %v3850 = vunpack.c.l.b16 %v2593
    %v3851 = vunpack.c.h.b16 %v2593
    %v3852 = vunpack.c.l.b16 %v2594
    %v3853 = vunpack.c.h.b16 %v2594
    %v3854 = vunpack.c.l.b16 %v2595
    %v3855 = vunpack.c.l.b16 %v2596
    %v3856 = vunpack.c.h.b16 %v2596
    %v3857 = vunpack.c.l.b16 %v2597
    %v3858 = vunpack.c.h.b16 %v2597
    %v3859 = vunpack.c.l.b16 %v2598
    %v3860 = vunpack.c.h.b16 %v2598
    %v3861 = vunpack.c.l.b16 %v2599
    %v3862 = vunpack.c.l.b16 %v2600
    %v3863 = vunpack.c.h.b16 %v2600
    %v3864 = vunpack.c.l.b16 %v2601
    %v3865 = vunpack.c.h.b16 %v2601
    %v3866 = vunpack.c.l.b16 %v2602
    %v3867 = vunpack.c.h.b16 %v2602
    %v3868 = vunpack.c.l.b16 %v2603
    %v3869 = vunpack.c.l.b16 %v2604
    %v3870 = vunpack.c.h.b16 %v2604
    %v3871 = vunpack.c.l.b16 %v2605
    %v3872 = vunpack.c.h.b16 %v2605
    %v3873 = vunpack.c.l.b16 %v2606
    %v3874 = vunpack.c.h.b16 %v2606
    %v3875 = vunpack.c.l.b16 %v2607
    %v3876 = vunpack.c.l.b16 %v2608
    %v3877 = vunpack.c.h.b16 %v2608
    %v3878 = vunpack.c.l.b16 %v2609
    %v3879 = vunpack.c.h.b16 %v2609
    %v3880 = vunpack.c.l.b16 %v2610
    %v3881 = vunpack.c.h.b16 %v2610
    %v3882 = vunpack.c.l.b16 %v2611
    %v3883 = vunpack.c.l.b16 %v2612
    %v3884 = vunpack.c.h.b16 %v2612
    %v3885 = vunpack.c.l.b16 %v2613
    %v3886 = vunpack.c.h.b16 %v2613
    %v3887 = vunpack.c.l.b16 %v2614
    %v3888 = vunpack.c.h.b16 %v2614
    %v3889 = vunpack.c.l.b16 %v2615
    %v3890 = vunpack.c.l.b16 %v2616
    %v3891 = vunpack.c.h.b16 %v2616
    %v3892 = vunpack.c.l.b16 %v2617
    %v3893 = vunpack.c.h.b16 %v2617
    %v3894 = vunpack.c.l.b16 %v2618
    %v3895 = vunpack.c.h.b16 %v2618
    %v3896 = vunpack.c.l.b16 %v2619
    %v3897 = vunpack.c.l.b16 %v2620
    %v3898 = vunpack.c.h.b16 %v2620
    %v3899 = vunpack.c.l.b16 %v2621
    %v3900 = vunpack.c.h.b16 %v2621
    %v3901 = vunpack.c.l.b16 %v2622
    %v3902 = vunpack.c.h.b16 %v2622
    %v3903 = vunpack.c.l.b16 %v2623
    %v3904 = vunpack.c.l.b16 %v2624
    %v3905 = vunpack.c.h.b16 %v2624
    %v3906 = vunpack.c.l.b16 %v2625
    %v3907 = vunpack.c.h.b16 %v2625
    %v3908 = vunpack.c.l.b16 %v2626
    %v3909 = vunpack.c.h.b16 %v2626
    %v3910 = vunpack.c.l.b16 %v2627
    %v3911 = vunpack.c.l.b16 %v2628
    %v3912 = vunpack.c.h.b16 %v2628
    %v3913 = vunpack.c.l.b16 %v2629
    %v3914 = vunpack.c.h.b16 %v2629
    %v3915 = vunpack.c.l.b16 %v2630
    %v3916 = vunpack.c.h.b16 %v2630
    %v3917 = vunpack.c.l.b16 %v2631
    %v3918 = vunpack.c.l.b16 %v2632
    %v3919 = vunpack.c.h.b16 %v2632
    %v3920 = vunpack.c.l.b16 %v2633
    %v3921 = vunpack.c.h.b16 %v2633
    %v3922 = vunpack.c.l.b16 %v2634
    %v3923 = vunpack.c.h.b16 %v2634
    %v3924 = vunpack.c.l.b16 %v2635
    %v3925 = vunpack.c.l.b16 %v2636
    %v3926 = vunpack.c.h.b16 %v2636
    %v3927 = vunpack.c.l.b16 %v2637
    %v3928 = vunpack.c.h.b16 %v2637
    %v3929 = vunpack.c.l.b16 %v2638
    %v3930 = vunpack.c.h.b16 %v2638
    %v3931 = vunpack.c.l.b16 %v2639
    %v3932 = vunpack.c.l.b16 %v2640
    %v3933 = vunpack.c.h.b16 %v2640
    %v3934 = vunpack.c.l.b16 %v2641
    %v3935 = vunpack.c.h.b16 %v2641
    %v3936 = vunpack.c.l.b16 %v2642
    %v3937 = vunpack.c.h.b16 %v2642
    %v3938 = vunpack.c.l.b16 %v2643
    %v3939 = vunpack.c.l.b16 %v2644
    %v3940 = vunpack.c.h.b16 %v2644
    %v3941 = vunpack.c.l.b16 %v2645
    %v3942 = vunpack.c.h.b16 %v2645
    %v3943 = vunpack.c.l.b16 %v2646
    %v3944 = vunpack.c.h.b16 %v2646
    %v3945 = vunpack.c.l.b16 %v2647
    %v3946 = vunpack.c.l.b16 %v2648
    %v3947 = vunpack.c.h.b16 %v2648
    %v3948 = vunpack.c.l.b16 %v2649
    %v3949 = vunpack.c.h.b16 %v2649
    %v3950 = vunpack.c.l.b16 %v2650
    %v3951 = vunpack.c.h.b16 %v2650
    %v3952 = vunpack.c.l.b16 %v2651
    %v3953 = vunpack.c.l.b16 %v2652
    %v3954 = vunpack.c.h.b16 %v2652
    %v3955 = vunpack.c.l.b16 %v2653
    %v3956 = vunpack.c.h.b16 %v2653
    %v3957 = vunpack.c.l.b16 %v2654
    %v3958 = vunpack.c.h.b16 %v2654
    %v3959 = vunpack.c.l.b16 %v2655
    %v3960 = vunpack.c.l.b16 %v2656
    %v3961 = vunpack.c.h.b16 %v2656
    %v3962 = vunpack.c.l.b16 %v2657
    %v3963 = vunpack.c.h.b16 %v2657
    %v3964 = vunpack.c.l.b16 %v2658
    %v3965 = vunpack.c.h.b16 %v2658
    %v3966 = vunpack.c.l.b16 %v2659
    %v3967 = vunpack.c.l.b16 %v2660
    %v3968 = vunpack.c.h.b16 %v2660
    %v3969 = vunpack.c.l.b16 %v2661
    %v3970 = vunpack.c.h.b16 %v2661
    %v3971 = vunpack.c.l.b16 %v2662
    %v3972 = vunpack.c.h.b16 %v2662
    %v3973 = vunpack.c.l.b16 %v2663
    %v3974 = vunpack.c.l.b16 %v2664
    %v3975 = vunpack.c.h.b16 %v2664
    %v3976 = vunpack.c.l.b16 %v2665
    %v3977 = vunpack.c.h.b16 %v2665
    %v3978 = vunpack.c.l.b16 %v2666
    %v3979 = vunpack.c.h.b16 %v2666
    %v3980 = vunpack.c.l.b16 %v2667
    %v3981 = vunpack.c.l.b16 %v2668
    %v3982 = vunpack.c.h.b16 %v2668
    %v3983 = vunpack.c.l.b16 %v2669
    %v3984 = vunpack.c.h.b16 %v2669
    %v3985 = vunpack.c.l.b16 %v2670
    %v3986 = vunpack.c.h.b16 %v2670
    %v3987 = vunpack.c.l.b16 %v2671
    %v3988 = vunpack.c.l.b16 %v2672
    %v3989 = vunpack.c.h.b16 %v2672
    %v3990 = vunpack.c.l.b16 %v2673
    %v3991 = vunpack.c.h.b16 %v2673
    %v3992 = vunpack.c.l.b16 %v2674
    %v3993 = vunpack.c.h.b16 %v2674
    %v3994 = vunpack.c.l.b16 %v2675
    %v3995 = vunpack.c.l.b16 %v2676
    %v3996 = vunpack.c.h.b16 %v2676
    %v3997 = vunpack.c.l.b16 %v2677
    %v3998 = vunpack.c.h.b16 %v2677
    %v3999 = vunpack.c.l.b16 %v2678
    %v4000 = vunpack.c.h.b16 %v2678
    %v4001 = vunpack.c.l.b16 %v2679
    %v4002 = vunpack.c.l.b16 %v2680
    %v4003 = vunpack.c.h.b16 %v2680
    %v4004 = vunpack.c.l.b16 %v2681
    %v4005 = vunpack.c.h.b16 %v2681
    %v4006 = vunpack.c.l.b16 %v2682
    %v4007 = vunpack.c.h.b16 %v2682
    %v4008 = vunpack.c.l.b16 %v2683
    %v4009 = vunpack.c.l.b16 %v2684
    %v4010 = vunpack.c.h.b16 %v2684
    %v4011 = vunpack.c.l.b16 %v2685
    %v4012 = vunpack.c.h.b16 %v2685
    %v4013 = vunpack.c.l.b16 %v2686
    %v4014 = vunpack.c.h.b16 %v2686
    %v4015 = vunpack.c.l.b16 %v2687
    %v4016 = vunpack.c.l.b16 %v2688
    %v4017 = vunpack.c.h.b16 %v2688
    %v4018 = vunpack.c.l.b16 %v2689
    %v4019 = vunpack.c.h.b16 %v2689
    %v4020 = vunpack.c.l.b16 %v2690
    %v4021 = vunpack.c.h.b16 %v2690
    %v4022 = vunpack.c.l.b16 %v2691
    %v4023 = vunpack.c.l.b16 %v2692
    %v4024 = vunpack.c.h.b16 %v2692
    %v4025 = vunpack.c.l.b16 %v2693
    %v4026 = vunpack.c.h.b16 %v2693
    %v4027 = vunpack.c.l.b16 %v2694
    %v4028 = vunpack.c.h.b16 %v2694
    %v4029 = vunpack.c.l.b16 %v2695
    %v4030 = vunpack.c.l.b16 %v2696
    %v4031 = vunpack.c.h.b16 %v2696
    %v4032 = vunpack.c.l.b16 %v2697
    %v4033 = vunpack.c.h.b16 %v2697
    %v4034 = vunpack.c.l.b16 %v2698
    %v4035 = vunpack.c.h.b16 %v2698
    %v4036 = vunpack.c.l.b16 %v2699
    %v4037 = vunpack.c.l.b16 %v2700
    %v4038 = vunpack.c.h.b16 %v2700
    %v4039 = vunpack.c.l.b16 %v2701
    %v4040 = vunpack.c.h.b16 %v2701
    %v4041 = vunpack.c.l.b16 %v2702
    %v4042 = vunpack.c.h.b16 %v2702
    %v4043 = vunpack.c.l.b16 %v2703
    %v4044 = vunpack.c.l.b16 %v2704
    %v4045 = vunpack.c.h.b16 %v2704
    %v4046 = vunpack.c.l.b16 %v2705
    %v4047 = vunpack.c.h.b16 %v2705
    %v4048 = vunpack.c.l.b16 %v2706
    %v4049 = vunpack.c.h.b16 %v2706
    %v4050 = vunpack.c.l.b16 %v2707
    %v4051 = vunpack.c.l.b16 %v2708
    %v4052 = vunpack.c.h.b16 %v2708
    %v4053 = vunpack.c.l.b16 %v2709
    %v4054 = vunpack.c.h.b16 %v2709
    %v4055 = vunpack.c.l.b16 %v2710
    %v4056 = vunpack.c.h.b16 %v2710
    %v4057 = vunpack.c.l.b16 %v2711
    %v4058 = vunpack.c.l.b16 %v2712
    %v4059 = vunpack.c.h.b16 %v2712
    %v4060 = vunpack.c.l.b16 %v2713
    %v4061 = vunpack.c.h.b16 %v2713
    %v4062 = vunpack.c.l.b16 %v2714
    %v4063 = vunpack.c.h.b16 %v2714
    %v4064 = vunpack.c.l.b16 %v2715
    %v4065 = vunpack.c.l.b16 %v2716
    %v4066 = vunpack.c.h.b16 %v2716
    %v4067 = vunpack.c.l.b16 %v2717
    %v4068 = vunpack.c.h.b16 %v2717
    %v4069 = vunpack.c.l.b16 %v2718
    %v4070 = vunpack.c.h.b16 %v2718
    %v4071 = vunpack.c.l.b16 %v2719
    %v4072 = vunpack.c.l.b16 %v2720
    %v4073 = vunpack.c.h.b16 %v2720
    %v4074 = vunpack.c.l.b16 %v2721
    %v4075 = vunpack.c.h.b16 %v2721
    %v4076 = vunpack.c.l.b16 %v2722
    %v4077 = vunpack.c.h.b16 %v2722
    %v4078 = vunpack.c.l.b16 %v2723
    %v4079 = vunpack.c.l.b16 %v2724
    %v4080 = vunpack.c.h.b16 %v2724
    %v4081 = vunpack.c.l.b16 %v2725
    %v4082 = vunpack.c.h.b16 %v2725
    %v4083 = vunpack.c.l.b16 %v2726
    %v4084 = vunpack.c.h.b16 %v2726
    %v4085 = vunpack.c.l.b16 %v2727
    %v4086 = vunpack.c.l.b16 %v2728
    %v4087 = vunpack.c.h.b16 %v2728
    %v4088 = vunpack.c.l.b16 %v2729
    %v4089 = vunpack.c.h.b16 %v2729
    %v4090 = vunpack.c.l.b16 %v2730
    %v4091 = vunpack.c.h.b16 %v2730
    %v4092 = vunpack.c.l.b16 %v2731
    %v4093 = vunpack.c.l.b16 %v2732
    %v4094 = vunpack.c.h.b16 %v2732
    %v4095 = vunpack.c.l.b16 %v2733
    %v4096 = vunpack.c.h.b16 %v2733
    %v4097 = vunpack.c.l.b16 %v2734
    %v4098 = vunpack.c.h.b16 %v2734
    %v4099 = vunpack.c.l.b16 %v2735
    %v4100 = vunpack.c.l.b16 %v2736
    %v4101 = vunpack.c.h.b16 %v2736
    %v4102 = vunpack.c.l.b16 %v2737
    %v4103 = vunpack.c.h.b16 %v2737
    %v4104 = vunpack.c.l.b16 %v2738
    %v4105 = vunpack.c.h.b16 %v2738
    %v4106 = vunpack.c.l.b16 %v2739
    %v4107 = vunpack.c.l.b16 %v2740
    %v4108 = vunpack.c.h.b16 %v2740
    %v4109 = vunpack.c.l.b16 %v2741
    %v4110 = vunpack.c.h.b16 %v2741
    %v4111 = vunpack.c.l.b16 %v2742
    %v4112 = vunpack.c.h.b16 %v2742
    %v4113 = vunpack.c.l.b16 %v2743
    %v4114 = vunpack.c.l.b16 %v2744
    %v4115 = vunpack.c.h.b16 %v2744
    %v4116 = vunpack.c.l.b16 %v2745
    %v4117 = vunpack.c.h.b16 %v2745
    %v4118 = vunpack.c.l.b16 %v2746
    %v4119 = vunpack.c.h.b16 %v2746
    %v4120 = vunpack.c.l.b16 %v2747
    %v4121 = vunpack.c.l.b16 %v2748
    %v4122 = vunpack.c.h.b16 %v2748
    %v4123 = vunpack.c.l.b16 %v2749
    %v4124 = vunpack.c.h.b16 %v2749
    %v4125 = vunpack.c.l.b16 %v2750
    %v4126 = vunpack.c.h.b16 %v2750
    %v4127 = vunpack.c.l.b16 %v2751
    %v4128 = vunpack.c.l.b16 %v2752
    %v4129 = vunpack.c.h.b16 %v2752
    %v4130 = vunpack.c.l.b16 %v2753
    %v4131 = vunpack.c.h.b16 %v2753
    %v4132 = vunpack.c.l.b16 %v2754
    %v4133 = vunpack.c.h.b16 %v2754
    %v4134 = vunpack.c.l.b16 %v2755
    %v4135 = vunpack.c.l.b16 %v2756
    %v4136 = vunpack.c.h.b16 %v2756
    %v4137 = vunpack.c.l.b16 %v2757
    %v4138 = vunpack.c.h.b16 %v2757
    %v4139 = vunpack.c.l.b16 %v2758
    %v4140 = vunpack.c.h.b16 %v2758
    %v4141 = vunpack.c.l.b16 %v2759
    %v4142 = vunpack.c.l.b16 %v2760
    %v4143 = vunpack.c.h.b16 %v2760
    %v4144 = vunpack.c.l.b16 %v2761
    %v4145 = vunpack.c.h.b16 %v2761
    %v4146 = vunpack.c.l.b16 %v2762
    %v4147 = vunpack.c.h.b16 %v2762
    %v4148 = vunpack.c.l.b16 %v2763
    %v4149 = vunpack.c.l.b16 %v2764
    %v4150 = vunpack.c.h.b16 %v2764
    %v4151 = vunpack.c.l.b16 %v2765
    %v4152 = vunpack.c.h.b16 %v2765
    %v4153 = vunpack.c.l.b16 %v2766
    %v4154 = vunpack.c.h.b16 %v2766
    %v4155 = vunpack.c.l.b16 %v2767
    %v4156 = vunpack.c.l.b16 %v2768
    %v4157 = vunpack.c.h.b16 %v2768
    %v4158 = vunpack.c.l.b16 %v2769
    %v4159 = vunpack.c.h.b16 %v2769
    %v4160 = vunpack.c.l.b16 %v2770
    %v4161 = vunpack.c.h.b16 %v2770
    %v4162 = vunpack.c.l.b16 %v2771
    %v4163 = vunpack.c.l.b16 %v2772
    %v4164 = vunpack.c.h.b16 %v2772
    %v4165 = vunpack.c.l.b16 %v2773
    %v4166 = vunpack.c.h.b16 %v2773
    %v4167 = vunpack.c.l.b16 %v2774
    %v4168 = vunpack.c.h.b16 %v2774
    %v4169 = vunpack.c.l.b16 %v2775
    %v4170 = vunpack.c.l.b16 %v2776
    %v4171 = vunpack.c.h.b16 %v2776
    %v4172 = vunpack.c.l.b16 %v2777
    %v4173 = vunpack.c.h.b16 %v2777
    %v4174 = vunpack.c.l.b16 %v2778
    %v4175 = vunpack.c.h.b16 %v2778
    %v4176 = vunpack.c.l.b16 %v2779
    %v4177 = vunpack.c.l.b16 %v2780
    %v4178 = vunpack.c.h.b16 %v2780
    %v4179 = vunpack.c.l.b16 %v2781
    %v4180 = vunpack.c.h.b16 %v2781
    %v4181 = vunpack.c.l.b16 %v2782
    %v4182 = vunpack.c.h.b16 %v2782
    %v4183 = vunpack.c.l.b16 %v2783
    %v4184 = vunpack.c.l.b16 %v2784
    %v4185 = vunpack.c.h.b16 %v2784
    %v4186 = vunpack.c.l.b16 %v2785
    %v4187 = vunpack.c.h.b16 %v2785
    %v4188 = vunpack.c.l.b16 %v2786
    %v4189 = vunpack.c.h.b16 %v2786
    %v4190 = vunpack.c.l.b16 %v2787
    %v4191 = vunpack.c.l.b16 %v2788
    %v4192 = vunpack.c.h.b16 %v2788
    %v4193 = vunpack.c.l.b16 %v2789
    %v4194 = vunpack.c.h.b16 %v2789
    %v4195 = vunpack.c.l.b16 %v2790
    %v4196 = vunpack.c.h.b16 %v2790
    %v4197 = vunpack.c.l.b16 %v2791
    %v4198 = vunpack.c.l.b16 %v2792
    %v4199 = vunpack.c.h.b16 %v2792
    %v4200 = vunpack.c.l.b16 %v2793
    %v4201 = vunpack.c.h.b16 %v2793
    %v4202 = vunpack.c.l.b16 %v2794
    %v4203 = vunpack.c.h.b16 %v2794
    %v4204 = vunpack.c.l.b16 %v2795
    %v4205 = vunpack.c.l.b16 %v2796
    %v4206 = vunpack.c.h.b16 %v2796
    %v4207 = vunpack.c.l.b16 %v2797
    %v4208 = vunpack.c.h.b16 %v2797
    %v4209 = vunpack.c.l.b16 %v2798
    %v4210 = vunpack.c.h.b16 %v2798
    %v4211 = vunpack.c.l.b16 %v2799
    %v4212 = vunpack.c.l.b16 %v2800
    %v4213 = vunpack.c.h.b16 %v2800
    %v4214 = vunpack.c.l.b16 %v2801
    %v4215 = vunpack.c.h.b16 %v2801
    %v4216 = vunpack.c.l.b16 %v2802
    %v4217 = vunpack.c.h.b16 %v2802
    %v4218 = vunpack.c.l.b16 %v2803
    %v4219 = vunpack.c.l.b16 %v2804
    %v4220 = vunpack.c.h.b16 %v2804
    %v4221 = vunpack.c.l.b16 %v2805
    %v4222 = vunpack.c.h.b16 %v2805
    %v4223 = vunpack.c.l.b16 %v2806
    %v4224 = vunpack.c.h.b16 %v2806
    %v4225 = vunpack.c.l.b16 %v2807
    %v4226 = vunpack.c.l.b16 %v2808
    %v4227 = vunpack.c.h.b16 %v2808
    %v4228 = vunpack.c.l.b16 %v2809
    %v4229 = vunpack.c.h.b16 %v2809
    %v4230 = vunpack.c.l.b16 %v2810
    %v4231 = vunpack.c.h.b16 %v2810
    %v4232 = vunpack.c.l.b16 %v2811
    %v4233 = vunpack.c.l.b16 %v2812
    %v4234 = vunpack.c.h.b16 %v2812
    %v4235 = vunpack.c.l.b16 %v2813
    %v4236 = vunpack.c.h.b16 %v2813
    %v4237 = vunpack.c.l.b16 %v2814
    %v4238 = vunpack.c.h.b16 %v2814
    %v4239 = vunpack.c.l.b16 %v2815
    %v4240 = vunpack.c.l.b16 %v2816
    %v4241 = vunpack.c.h.b16 %v2816
    %v4242 = vunpack.c.l.b16 %v2817
    %v4243 = vunpack.c.h.b16 %v2817
    %v4244 = vunpack.c.l.b16 %v2818
    %v4245 = vunpack.c.h.b16 %v2818
    %v4246 = vunpack.c.l.b16 %v2819
    %v4247 = vunpack.c.l.b16 %v2820
    %v4248 = vunpack.c.h.b16 %v2820
    %v4249 = vunpack.c.l.b16 %v2821
    %v4250 = vunpack.c.h.b16 %v2821
    %v4251 = vunpack.c.l.b16 %v2822
    %v4252 = vunpack.c.h.b16 %v2822
    %v4253 = vunpack.c.l.b16 %v2823
    %v4254 = vunpack.c.l.b16 %v2824
    %v4255 = vunpack.c.h.b16 %v2824
    %v4256 = vunpack.c.l.b16 %v2825
    %v4257 = vunpack.c.h.b16 %v2825
    %v4258 = vunpack.c.l.b16 %v2826
    %v4259 = vunpack.c.h.b16 %v2826
    %v4260 = vunpack.c.l.b16 %v2827
    %v4261 = vunpack.c.l.b16 %v2828
    %v4262 = vunpack.c.h.b16 %v2828
    %v4263 = vunpack.c.l.b16 %v2829
    %v4264 = vunpack.c.h.b16 %v2829
    %v4265 = vunpack.c.l.b16 %v2830
    %v4266 = vunpack.c.h.b16 %v2830
    %v4267 = vunpack.c.l.b16 %v2831
    %v4268 = vunpack.c.l.b16 %v2832
    %v4269 = vunpack.c.h.b16 %v2832
    %v4270 = vunpack.c.l.b16 %v2833
    %v4271 = vunpack.c.h.b16 %v2833
    %v4272 = vunpack.c.l.b16 %v2834
    %v4273 = vunpack.c.h.b16 %v2834
    %v4274 = vunpack.c.l.b16 %v2835
    %v4275 = vunpack.c.l.b16 %v2836
    %v4276 = vunpack.c.h.b16 %v2836
    %v4277 = vunpack.c.l.b16 %v2837
    %v4278 = vunpack.c.h.b16 %v2837
    %v4279 = vunpack.c.l.b16 %v2838
    %v4280 = vunpack.c.h.b16 %v2838
    %v4281 = vunpack.c.l.b16 %v2839
    %v4282 = vunpack.c.l.b16 %v2840
    %v4283 = vunpack.c.h.b16 %v2840
    %v4284 = vunpack.c.l.b16 %v2841
    %v4285 = vunpack.c.h.b16 %v2841
    %v4286 = vunpack.c.l.b16 %v2842
    %v4287 = vunpack.c.h.b16 %v2842
    %v4288 = vunpack.c.l.b16 %v2843
    %v4289 = vpack.c.b16 %v3400, %v3393
    %v4290 = vpack.c.b16 %v3401, %v3394
    %v4291 = vpack.c.b16 %v3402, %v3395
    %v4292 = vpack.c.b16 %v3403, %v3396
    %v4293 = vpack.c.b16 %v3404, %v3397
    %v4294 = vpack.c.b16 %v3405, %v3398
    %v4295 = vpack.c.b16 %v3406, %v3399
    %v4296 = vpack.c.b16 %v3414, %v3407
    %v4297 = vpack.c.b16 %v3415, %v3408
    %v4298 = vpack.c.b16 %v3416, %v3409
    %v4299 = vpack.c.b16 %v3417, %v3410
    %v4300 = vpack.c.b16 %v3418, %v3411
    %v4301 = vpack.c.b16 %v3419, %v3412
    %v4302 = vpack.c.b16 %v3420, %v3413
    %v4303 = vpack.c.b16 %v3428, %v3421
    %v4304 = vpack.c.b16 %v3429, %v3422
    %v4305 = vpack.c.b16 %v3430, %v3423
    %v4306 = vpack.c.b16 %v3431, %v3424
    %v4307 = vpack.c.b16 %v3432, %v3425
    %v4308 = vpack.c.b16 %v3433, %v3426
    %v4309 = vpack.c.b16 %v3434, %v3427
    %v4310 = vpack.c.b16 %v3442, %v3435
    %v4311 = vpack.c.b16 %v3443, %v3436
    %v4312 = vpack.c.b16 %v3444, %v3437
    %v4313 = vpack.c.b16 %v3445, %v3438
    %v4314 = vpack.c.b16 %v3446, %v3439
    %v4315 = vpack.c.b16 %v3447, %v3440
    %v4316 = vpack.c.b16 %v3448, %v3441
    %v4317 = vpack.c.b16 %v3456, %v3449
    %v4318 = vpack.c.b16 %v3457, %v3450
    %v4319 = vpack.c.b16 %v3458, %v3451
    %v4320 = vpack.c.b16 %v3459, %v3452
    %v4321 = vpack.c.b16 %v3460, %v3453
    %v4322 = vpack.c.b16 %v3461, %v3454
    %v4323 = vpack.c.b16 %v3462, %v3455
    %v4324 = vpack.c.b16 %v3470, %v3463
    %v4325 = vpack.c.b16 %v3471, %v3464
    %v4326 = vpack.c.b16 %v3472, %v3465
    %v4327 = vpack.c.b16 %v3473, %v3466
    %v4328 = vpack.c.b16 %v3474, %v3467
    %v4329 = vpack.c.b16 %v3475, %v3468
    %v4330 = vpack.c.b16 %v3476, %v3469
    %v4331 = vpack.c.b16 %v3484, %v3477
    %v4332 = vpack.c.b16 %v3485, %v3478
    %v4333 = vpack.c.b16 %v3486, %v3479
    %v4334 = vpack.c.b16 %v3487, %v3480
    %v4335 = vpack.c.b16 %v3488, %v3481
    %v4336 = vpack.c.b16 %v3489, %v3482
    %v4337 = vpack.c.b16 %v3490, %v3483
    %v4338 = vpack.c.b16 %v3498, %v3491
    %v4339 = vpack.c.b16 %v3499, %v3492
    %v4340 = vpack.c.b16 %v3500, %v3493
    %v4341 = vpack.c.b16 %v3501, %v3494
    %v4342 = vpack.c.b16 %v3502, %v3495
    %v4343 = vpack.c.b16 %v3503, %v3496
    %v4344 = vpack.c.b16 %v3504, %v3497
    %v4345 = vpack.c.b16 %v3512, %v3505
    %v4346 = vpack.c.b16 %v3513, %v3506
    %v4347 = vpack.c.b16 %v3514, %v3507
    %v4348 = vpack.c.b16 %v3515, %v3508
    %v4349 = vpack.c.b16 %v3516, %v3509
    %v4350 = vpack.c.b16 %v3517, %v3510
    %v4351 = vpack.c.b16 %v3518, %v3511
    %v4352 = vpack.c.b16 %v3526, %v3519
    %v4353 = vpack.c.b16 %v3527, %v3520
    %v4354 = vpack.c.b16 %v3528, %v3521
    %v4355 = vpack.c.b16 %v3529, %v3522
    %v4356 = vpack.c.b16 %v3530, %v3523
    %v4357 = vpack.c.b16 %v3531, %v3524
    %v4358 = vpack.c.b16 %v3532, %v3525
    %v4359 = vpack.c.b16 %v3540, %v3533
    %v4360 = vpack.c.b16 %v3541, %v3534
    %v4361 = vpack.c.b16 %v3542, %v3535
    %v4362 = vpack.c.b16 %v3543, %v3536
    %v4363 = vpack.c.b16 %v3544, %v3537
    %v4364 = vpack.c.b16 %v3545, %v3538
    %v4365 = vpack.c.b16 %v3546, %v3539
    %v4366 = vpack.c.b16 %v3554, %v3547
    %v4367 = vpack.c.b16 %v3555, %v3548
    %v4368 = vpack.c.b16 %v3556, %v3549
    %v4369 = vpack.c.b16 %v3557, %v3550
    %v4370 = vpack.c.b16 %v3558, %v3551
    %v4371 = vpack.c.b16 %v3559, %v3552
    %v4372 = vpack.c.b16 %v3560, %v3553
    %v4373 = vpack.c.b16 %v3568, %v3561
    %v4374 = vpack.c.b16 %v3569, %v3562
    %v4375 = vpack.c.b16 %v3570, %v3563
    %v4376 = vpack.c.b16 %v3571, %v3564
    %v4377 = vpack.c.b16 %v3572, %v3565
    %v4378 = vpack.c.b16 %v3573, %v3566
    %v4379 = vpack.c.b16 %v3574, %v3567
    %v4380 = vpack.c.b16 %v3582, %v3575
    %v4381 = vpack.c.b16 %v3583, %v3576
    %v4382 = vpack.c.b16 %v3584, %v3577
    %v4383 = vpack.c.b16 %v3585, %v3578
    %v4384 = vpack.c.b16 %v3586, %v3579
    %v4385 = vpack.c.b16 %v3587, %v3580
    %v4386 = vpack.c.b16 %v3588, %v3581
    %v4387 = vpack.c.b16 %v3596, %v3589
    %v4388 = vpack.c.b16 %v3597, %v3590
    %v4389 = vpack.c.b16 %v3598, %v3591
    %v4390 = vpack.c.b16 %v3599, %v3592
    %v4391 = vpack.c.b16 %v3600, %v3593
    %v4392 = vpack.c.b16 %v3601, %v3594
    %v4393 = vpack.c.b16 %v3602, %v3595
    %v4394 = vpack.c.b16 %v3610, %v3603
    %v4395 = vpack.c.b16 %v3611, %v3604
    %v4396 = vpack.c.b16 %v3612, %v3605
    %v4397 = vpack.c.b16 %v3613, %v3606
    %v4398 = vpack.c.b16 %v3614, %v3607
    %v4399 = vpack.c.b16 %v3615, %v3608
    %v4400 = vpack.c.b16 %v3616, %v3609
    %v4401 = vpack.c.b16 %v3624, %v3617
    %v4402 = vpack.c.b16 %v3625, %v3618
    %v4403 = vpack.c.b16 %v3626, %v3619
    %v4404 = vpack.c.b16 %v3627, %v3620
    %v4405 = vpack.c.b16 %v3628, %v3621
    %v4406 = vpack.c.b16 %v3629, %v3622
    %v4407 = vpack.c.b16 %v3630, %v3623
    %v4408 = vpack.c.b16 %v3638, %v3631
    %v4409 = vpack.c.b16 %v3639, %v3632
    %v4410 = vpack.c.b16 %v3640, %v3633
    %v4411 = vpack.c.b16 %v3641, %v3634
    %v4412 = vpack.c.b16 %v3642, %v3635
    %v4413 = vpack.c.b16 %v3643, %v3636
    %v4414 = vpack.c.b16 %v3644, %v3637
    %v4415 = vpack.c.b16 %v3652, %v3645
    %v4416 = vpack.c.b16 %v3653, %v3646
    %v4417 = vpack.c.b16 %v3654, %v3647
    %v4418 = vpack.c.b16 %v3655, %v3648
    %v4419 = vpack.c.b16 %v3656, %v3649
    %v4420 = vpack.c.b16 %v3657, %v3650
    %v4421 = vpack.c.b16 %v3658, %v3651
    %v4422 = vpack.c.b16 %v3666, %v3659
    %v4423 = vpack.c.b16 %v3667, %v3660
    %v4424 = vpack.c.b16 %v3668, %v3661
    %v4425 = vpack.c.b16 %v3669, %v3662
    %v4426 = vpack.c.b16 %v3670, %v3663
    %v4427 = vpack.c.b16 %v3671, %v3664
    %v4428 = vpack.c.b16 %v3672, %v3665
    %v4429 = vpack.c.b16 %v3680, %v3673
    %v4430 = vpack.c.b16 %v3681, %v3674
    %v4431 = vpack.c.b16 %v3682, %v3675
    %v4432 = vpack.c.b16 %v3683, %v3676
    %v4433 = vpack.c.b16 %v3684, %v3677
    %v4434 = vpack.c.b16 %v3685, %v3678
    %v4435 = vpack.c.b16 %v3686, %v3679
    %v4436 = vpack.c.b16 %v3694, %v3687
    %v4437 = vpack.c.b16 %v3695, %v3688
    %v4438 = vpack.c.b16 %v3696, %v3689
    %v4439 = vpack.c.b16 %v3697, %v3690
    %v4440 = vpack.c.b16 %v3698, %v3691
    %v4441 = vpack.c.b16 %v3699, %v3692
    %v4442 = vpack.c.b16 %v3700, %v3693
    %v4443 = vpack.c.b16 %v3708, %v3701
    %v4444 = vpack.c.b16 %v3709, %v3702
    %v4445 = vpack.c.b16 %v3710, %v3703
    %v4446 = vpack.c.b16 %v3711, %v3704
    %v4447 = vpack.c.b16 %v3712, %v3705
    %v4448 = vpack.c.b16 %v3713, %v3706
    %v4449 = vpack.c.b16 %v3714, %v3707
    %v4450 = vpack.c.b16 %v3722, %v3715
    %v4451 = vpack.c.b16 %v3723, %v3716
    %v4452 = vpack.c.b16 %v3724, %v3717
    %v4453 = vpack.c.b16 %v3725, %v3718
    %v4454 = vpack.c.b16 %v3726, %v3719
    %v4455 = vpack.c.b16 %v3727, %v3720
    %v4456 = vpack.c.b16 %v3728, %v3721
    %v4457 = vpack.c.b16 %v3736, %v3729
    %v4458 = vpack.c.b16 %v3737, %v3730
    %v4459 = vpack.c.b16 %v3738, %v3731
    %v4460 = vpack.c.b16 %v3739, %v3732
    %v4461 = vpack.c.b16 %v3740, %v3733
    %v4462 = vpack.c.b16 %v3741, %v3734
    %v4463 = vpack.c.b16 %v3742, %v3735
    %v4464 = vpack.c.b16 %v3750, %v3743
    %v4465 = vpack.c.b16 %v3751, %v3744
    %v4466 = vpack.c.b16 %v3752, %v3745
    %v4467 = vpack.c.b16 %v3753, %v3746
    %v4468 = vpack.c.b16 %v3754, %v3747
    %v4469 = vpack.c.b16 %v3755, %v3748
    %v4470 = vpack.c.b16 %v3756, %v3749
    %v4471 = vpack.c.b16 %v3764, %v3757
    %v4472 = vpack.c.b16 %v3765, %v3758
    %v4473 = vpack.c.b16 %v3766, %v3759
    %v4474 = vpack.c.b16 %v3767, %v3760
    %v4475 = vpack.c.b16 %v3768, %v3761
    %v4476 = vpack.c.b16 %v3769, %v3762
    %v4477 = vpack.c.b16 %v3770, %v3763
    %v4478 = vpack.c.b16 %v3778, %v3771
    %v4479 = vpack.c.b16 %v3779, %v3772
    %v4480 = vpack.c.b16 %v3780, %v3773
    %v4481 = vpack.c.b16 %v3781, %v3774
    %v4482 = vpack.c.b16 %v3782, %v3775
    %v4483 = vpack.c.b16 %v3783, %v3776
    %v4484 = vpack.c.b16 %v3784, %v3777
    %v4485 = vpack.c.b16 %v3792, %v3785
    %v4486 = vpack.c.b16 %v3793, %v3786
    %v4487 = vpack.c.b16 %v3794, %v3787
    %v4488 = vpack.c.b16 %v3795, %v3788
    %v4489 = vpack.c.b16 %v3796, %v3789
    %v4490 = vpack.c.b16 %v3797, %v3790
    %v4491 = vpack.c.b16 %v3798, %v3791
    %v4492 = vpack.c.b16 %v3806, %v3799
    %v4493 = vpack.c.b16 %v3807, %v3800
    %v4494 = vpack.c.b16 %v3808, %v3801
    %v4495 = vpack.c.b16 %v3809, %v3802
    %v4496 = vpack.c.b16 %v3810, %v3803
    %v4497 = vpack.c.b16 %v3811, %v3804
    %v4498 = vpack.c.b16 %v3812, %v3805
    %v4499 = vpack.c.b16 %v3820, %v3813
    %v4500 = vpack.c.b16 %v3821, %v3814
    %v4501 = vpack.c.b16 %v3822, %v3815
    %v4502 = vpack.c.b16 %v3823, %v3816
    %v4503 = vpack.c.b16 %v3824, %v3817
    %v4504 = vpack.c.b16 %v3825, %v3818
    %v4505 = vpack.c.b16 %v3826, %v3819
    %v4506 = vpack.c.b16 %v3834, %v3827
    %v4507 = vpack.c.b16 %v3835, %v3828
    %v4508 = vpack.c.b16 %v3836, %v3829
    %v4509 = vpack.c.b16 %v3837, %v3830
    %v4510 = vpack.c.b16 %v3838, %v3831
    %v4511 = vpack.c.b16 %v3839, %v3832
    %v4512 = vpack.c.b16 %v3840, %v3833
    %v4513 = vpack.c.b16 %v3848, %v3841
    %v4514 = vpack.c.b16 %v3849, %v3842
    %v4515 = vpack.c.b16 %v3850, %v3843
    %v4516 = vpack.c.b16 %v3851, %v3844
    %v4517 = vpack.c.b16 %v3852, %v3845
    %v4518 = vpack.c.b16 %v3853, %v3846
    %v4519 = vpack.c.b16 %v3854, %v3847
    %v4520 = vpack.c.b16 %v3862, %v3855
    %v4521 = vpack.c.b16 %v3863, %v3856
    %v4522 = vpack.c.b16 %v3864, %v3857
    %v4523 = vpack.c.b16 %v3865, %v3858
    %v4524 = vpack.c.b16 %v3866, %v3859
    %v4525 = vpack.c.b16 %v3867, %v3860
    %v4526 = vpack.c.b16 %v3868, %v3861
    %v4527 = vpack.c.b16 %v3876, %v3869
    %v4528 = vpack.c.b16 %v3877, %v3870
    %v4529 = vpack.c.b16 %v3878, %v3871
    %v4530 = vpack.c.b16 %v3879, %v3872
    %v4531 = vpack.c.b16 %v3880, %v3873
    %v4532 = vpack.c.b16 %v3881, %v3874
    %v4533 = vpack.c.b16 %v3882, %v3875
    %v4534 = vpack.c.b16 %v3890, %v3883
    %v4535 = vpack.c.b16 %v3891, %v3884
    %v4536 = vpack.c.b16 %v3892, %v3885
    %v4537 = vpack.c.b16 %v3893, %v3886
    %v4538 = vpack.c.b16 %v3894, %v3887
    %v4539 = vpack.c.b16 %v3895, %v3888
    %v4540 = vpack.c.b16 %v3896, %v3889
    %v4541 = vpack.c.b16 %v3904, %v3897
    %v4542 = vpack.c.b16 %v3905, %v3898
    %v4543 = vpack.c.b16 %v3906, %v3899
    %v4544 = vpack.c.b16 %v3907, %v3900
    %v4545 = vpack.c.b16 %v3908, %v3901
    %v4546 = vpack.c.b16 %v3909, %v3902
    %v4547 = vpack.c.b16 %v3910, %v3903
    %v4548 = vpack.c.b16 %v3918, %v3911
    %v4549 = vpack.c.b16 %v3919, %v3912
    %v4550 = vpack.c.b16 %v3920, %v3913
    %v4551 = vpack.c.b16 %v3921, %v3914
    %v4552 = vpack.c.b16 %v3922, %v3915
    %v4553 = vpack.c.b16 %v3923, %v3916
    %v4554 = vpack.c.b16 %v3924, %v3917
    %v4555 = vpack.c.b16 %v3932, %v3925
    %v4556 = vpack.c.b16 %v3933, %v3926
    %v4557 = vpack.c.b16 %v3934, %v3927
    %v4558 = vpack.c.b16 %v3935, %v3928
    %v4559 = vpack.c.b16 %v3936, %v3929
    %v4560 = vpack.c.b16 %v3937, %v3930
    %v4561 = vpack.c.b16 %v3938, %v3931
    %v4562 = vpack.c.b16 %v3946, %v3939
    %v4563 = vpack.c.b16 %v3947, %v3940
    %v4564 = vpack.c.b16 %v3948, %v3941
    %v4565 = vpack.c.b16 %v3949, %v3942
    %v4566 = vpack.c.b16 %v3950, %v3943
    %v4567 = vpack.c.b16 %v3951, %v3944
    %v4568 = vpack.c.b16 %v3952, %v3945
    %v4569 = vpack.c.b16 %v3960, %v3953
    %v4570 = vpack.c.b16 %v3961, %v3954
    %v4571 = vpack.c.b16 %v3962, %v3955
    %v4572 = vpack.c.b16 %v3963, %v3956
    %v4573 = vpack.c.b16 %v3964, %v3957
    %v4574 = vpack.c.b16 %v3965, %v3958
    %v4575 = vpack.c.b16 %v3966, %v3959
    %v4576 = vpack.c.b16 %v3974, %v3967
    %v4577 = vpack.c.b16 %v3975, %v3968
    %v4578 = vpack.c.b16 %v3976, %v3969
    %v4579 = vpack.c.b16 %v3977, %v3970
    %v4580 = vpack.c.b16 %v3978, %v3971
    %v4581 = vpack.c.b16 %v3979, %v3972
    %v4582 = vpack.c.b16 %v3980, %v3973
    %v4583 = vpack.c.b16 %v3988, %v3981
    %v4584 = vpack.c.b16 %v3989, %v3982
    %v4585 = vpack.c.b16 %v3990, %v3983
    %v4586 = vpack.c.b16 %v3991, %v3984
    %v4587 = vpack.c.b16 %v3992, %v3985
    %v4588 = vpack.c.b16 %v3993, %v3986
    %v4589 = vpack.c.b16 %v3994, %v3987
    %v4590 = vpack.c.b16 %v4002, %v3995
    %v4591 = vpack.c.b16 %v4003, %v3996
    %v4592 = vpack.c.b16 %v4004, %v3997
    %v4593 = vpack.c.b16 %v4005, %v3998
    %v4594 = vpack.c.b16 %v4006, %v3999
    %v4595 = vpack.c.b16 %v4007, %v4000
    %v4596 = vpack.c.b16 %v4008, %v4001
    %v4597 = vpack.c.b16 %v4016, %v4009
    %v4598 = vpack.c.b16 %v4017, %v4010
    %v4599 = vpack.c.b16 %v4018, %v4011
    %v4600 = vpack.c.b16 %v4019, %v4012
    %v4601 = vpack.c.b16 %v4020, %v4013
    %v4602 = vpack.c.b16 %v4021, %v4014
    %v4603 = vpack.c.b16 %v4022, %v4015
    %v4604 = vpack.c.b16 %v4030, %v4023
    %v4605 = vpack.c.b16 %v4031, %v4024
    %v4606 = vpack.c.b16 %v4032, %v4025
    %v4607 = vpack.c.b16 %v4033, %v4026
    %v4608 = vpack.c.b16 %v4034, %v4027
    %v4609 = vpack.c.b16 %v4035, %v4028
    %v4610 = vpack.c.b16 %v4036, %v4029
    %v4611 = vpack.c.b16 %v4044, %v4037
    %v4612 = vpack.c.b16 %v4045, %v4038
    %v4613 = vpack.c.b16 %v4046, %v4039
    %v4614 = vpack.c.b16 %v4047, %v4040
    %v4615 = vpack.c.b16 %v4048, %v4041
    %v4616 = vpack.c.b16 %v4049, %v4042
    %v4617 = vpack.c.b16 %v4050, %v4043
    %v4618 = vpack.c.b16 %v4058, %v4051
    %v4619 = vpack.c.b16 %v4059, %v4052
    %v4620 = vpack.c.b16 %v4060, %v4053
    %v4621 = vpack.c.b16 %v4061, %v4054
    %v4622 = vpack.c.b16 %v4062, %v4055
    %v4623 = vpack.c.b16 %v4063, %v4056
    %v4624 = vpack.c.b16 %v4064, %v4057
    %v4625 = vpack.c.b16 %v4072, %v4065
    %v4626 = vpack.c.b16 %v4073, %v4066
    %v4627 = vpack.c.b16 %v4074, %v4067
    %v4628 = vpack.c.b16 %v4075, %v4068
    %v4629 = vpack.c.b16 %v4076, %v4069
    %v4630 = vpack.c.b16 %v4077, %v4070
    %v4631 = vpack.c.b16 %v4078, %v4071
    %v4632 = vpack.c.b16 %v4086, %v4079
    %v4633 = vpack.c.b16 %v4087, %v4080
    %v4634 = vpack.c.b16 %v4088, %v4081
    %v4635 = vpack.c.b16 %v4089, %v4082
    %v4636 = vpack.c.b16 %v4090, %v4083
    %v4637 = vpack.c.b16 %v4091, %v4084
    %v4638 = vpack.c.b16 %v4092, %v4085
    %v4639 = vpack.c.b16 %v4100, %v4093
    %v4640 = vpack.c.b16 %v4101, %v4094
    %v4641 = vpack.c.b16 %v4102, %v4095
    %v4642 = vpack.c.b16 %v4103, %v4096
    %v4643 = vpack.c.b16 %v4104, %v4097
    %v4644 = vpack.c.b16 %v4105, %v4098
    %v4645 = vpack.c.b16 %v4106, %v4099
    %v4646 = vpack.c.b16 %v4114, %v4107
    %v4647 = vpack.c.b16 %v4115, %v4108
    %v4648 = vpack.c.b16 %v4116, %v4109
    %v4649 = vpack.c.b16 %v4117, %v4110
    %v4650 = vpack.c.b16 %v4118, %v4111
    %v4651 = vpack.c.b16 %v4119, %v4112
    %v4652 = vpack.c.b16 %v4120, %v4113
    %v4653 = vpack.c.b16 %v4128, %v4121
    %v4654 = vpack.c.b16 %v4129, %v4122
    %v4655 = vpack.c.b16 %v4130, %v4123
    %v4656 = vpack.c.b16 %v4131, %v4124
    %v4657 = vpack.c.b16 %v4132, %v4125
    %v4658 = vpack.c.b16 %v4133, %v4126
    %v4659 = vpack.c.b16 %v4134, %v4127
    %v4660 = vpack.c.b16 %v4142, %v4135
    %v4661 = vpack.c.b16 %v4143, %v4136
    %v4662 = vpack.c.b16 %v4144, %v4137
    %v4663 = vpack.c.b16 %v4145, %v4138
    %v4664 = vpack.c.b16 %v4146, %v4139
    %v4665 = vpack.c.b16 %v4147, %v4140
    %v4666 = vpack.c.b16 %v4148, %v4141
    %v4667 = vpack.c.b16 %v4156, %v4149
    %v4668 = vpack.c.b16 %v4157, %v4150
    %v4669 = vpack.c.b16 %v4158, %v4151
    %v4670 = vpack.c.b16 %v4159, %v4152
    %v4671 = vpack.c.b16 %v4160, %v4153
    %v4672 = vpack.c.b16 %v4161, %v4154
    %v4673 = vpack.c.b16 %v4162, %v4155
    %v4674 = vpack.c.b16 %v4170, %v4163
    %v4675 = vpack.c.b16 %v4171, %v4164
    %v4676 = vpack.c.b16 %v4172, %v4165
    %v4677 = vpack.c.b16 %v4173, %v4166
    %v4678 = vpack.c.b16 %v4174, %v4167
    %v4679 = vpack.c.b16 %v4175, %v4168
    %v4680 = vpack.c.b16 %v4176, %v4169
    %v4681 = vpack.c.b16 %v4184, %v4177
    %v4682 = vpack.c.b16 %v4185, %v4178
    %v4683 = vpack.c.b16 %v4186, %v4179
    %v4684 = vpack.c.b16 %v4187, %v4180
    %v4685 = vpack.c.b16 %v4188, %v4181
    %v4686 = vpack.c.b16 %v4189, %v4182
    %v4687 = vpack.c.b16 %v4190, %v4183
    %v4688 = vpack.c.b16 %v4198, %v4191
    %v4689 = vpack.c.b16 %v4199, %v4192
    %v4690 = vpack.c.b16 %v4200, %v4193
    %v4691 = vpack.c.b16 %v4201, %v4194
    %v4692 = vpack.c.b16 %v4202, %v4195
    %v4693 = vpack.c.b16 %v4203, %v4196
    %v4694 = vpack.c.b16 %v4204, %v4197
    %v4695 = vpack.c.b16 %v4212, %v4205
    %v4696 = vpack.c.b16 %v4213, %v4206
    %v4697 = vpack.c.b16 %v4214, %v4207
    %v4698 = vpack.c.b16 %v4215, %v4208
    %v4699 = vpack.c.b16 %v4216, %v4209
    %v4700 = vpack.c.b16 %v4217, %v4210
    %v4701 = vpack.c.b16 %v4218, %v4211
    %v4702 = vpack.c.b16 %v4226, %v4219
    %v4703 = vpack.c.b16 %v4227, %v4220
    %v4704 = vpack.c.b16 %v4228, %v4221
    %v4705 = vpack.c.b16 %v4229, %v4222
    %v4706 = vpack.c.b16 %v4230, %v4223
    %v4707 = vpack.c.b16 %v4231, %v4224
    %v4708 = vpack.c.b16 %v4232, %v4225
    %v4709 = vpack.c.b16 %v4240, %v4233
    %v4710 = vpack.c.b16 %v4241, %v4234
    %v4711 = vpack.c.b16 %v4242, %v4235
    %v4712 = vpack.c.b16 %v4243, %v4236
    %v4713 = vpack.c.b16 %v4244, %v4237
    %v4714 = vpack.c.b16 %v4245, %v4238
    %v4715 = vpack.c.b16 %v4246, %v4239
    %v4716 = vpack.c.b16 %v4254, %v4247
    %v4717 = vpack.c.b16 %v4255, %v4248
    %v4718 = vpack.c.b16 %v4256, %v4249
    %v4719 = vpack.c.b16 %v4257, %v4250
    %v4720 = vpack.c.b16 %v4258, %v4251
    %v4721 = vpack.c.b16 %v4259, %v4252
    %v4722 = vpack.c.b16 %v4260, %v4253
    %v4723 = vpack.c.b16 %v4268, %v4261
    %v4724 = vpack.c.b16 %v4269, %v4262
    %v4725 = vpack.c.b16 %v4270, %v4263
    %v4726 = vpack.c.b16 %v4271, %v4264
    %v4727 = vpack.c.b16 %v4272, %v4265
    %v4728 = vpack.c.b16 %v4273, %v4266
    %v4729 = vpack.c.b16 %v4274, %v4267
    %v4730 = vpack.c.b16 %v4282, %v4275
    %v4731 = vpack.c.b16 %v4283, %v4276
    %v4732 = vpack.c.b16 %v4284, %v4277
    %v4733 = vpack.c.b16 %v4285, %v4278
    %v4734 = vpack.c.b16 %v4286, %v4279
    %v4735 = vpack.c.b16 %v4287, %v4280
    %v4736 = vpack.c.b16 %v4288, %v4281
    %5185 = vmatprep.subr.bf16.mxu0 %v4339
    %5186 = vmatpush1.bf16.msra.mxu0 %v4338
    %5187 = vmatprep.subr.bf16.mxu0 %v4332
    %5188 = vmatpush1.bf16.msra.mxu0 %v4331
    %5189 = vmatprep.subr.bf16.mxu0 %v4325
    %5190 = vmatpush1.bf16.msra.mxu0 %v4324
    %5191 = vmatprep.subr.bf16.mxu0 %v4318
    %5192 = vmatpush1.bf16.msra.mxu0 %v4317
    %5193 = vmatprep.subr.bf16.mxu0 %v4311
    %5194 = vmatpush1.bf16.msra.mxu0 %v4310
    %5195 = vmatprep.subr.bf16.mxu0 %v4304
    %5196 = vmatpush1.bf16.msra.mxu0 %v4303
    %5197 = vmatprep.subr.bf16.mxu0 %v4297
    %5198 = vmatpush1.bf16.msra.mxu0 %v4296
    %5199 = vmatprep.subr.bf16.mxu0 %v4290
    %5200 = vmatpush1.bf16.msra.mxu0 %v4289
    %5201 = vmatprep.subr.bf16.mxu0 %v4395
    %5202 = vmatpush2.bf16.msra.mxu0 %v4394
    %5203 = vmatprep.subr.bf16.mxu0 %v4388
    %5204 = vmatpush2.bf16.msra.mxu0 %v4387
    %5205 = vmatprep.subr.bf16.mxu0 %v4381
    %5206 = vmatpush2.bf16.msra.mxu0 %v4380
    %5207 = vmatprep.subr.bf16.mxu0 %v4374
    %5208 = vmatpush2.bf16.msra.mxu0 %v4373
    %5209 = vmatprep.subr.bf16.mxu0 %v4367
    %5210 = vmatpush2.bf16.msra.mxu0 %v4366
    %5211 = vmatprep.subr.bf16.mxu0 %v4360
    %5212 = vmatpush2.bf16.msra.mxu0 %v4359
    %5213 = vmatprep.subr.bf16.mxu0 %v4353
    %5214 = vmatpush2.bf16.msra.mxu0 %v4352
    %5215 = vmatprep.subr.bf16.mxu0 %v4346
    %5216 = vmatpush2.bf16.msra.mxu0 %v4345
    %5217 = vmatprep.mubr.bf16.mxu0 %v2325
    %5218 = vmatmul.mubr.bf16.gmra.mxu0 %v2324
    %v5219 = vpop.f32.mrf.mxu0
    %v5220 = vadd.f32 %v2849, %v5219
    %v5221 = vpop.f32.mrf.mxu0
    %v5222 = vadd.f32 %v2853, %v5221
    %v5223 = vpop.f32.mrf.mxu0
    %v5224 = vpop.f32.mrf.mxu0
    %5225 = vdwg.mxu0
    %5226 = vmatprep.subr.bf16.mxu0 %v4451
    %5227 = vmatpush1.bf16.msra.mxu0 %v4450
    %5228 = vmatprep.subr.bf16.mxu0 %v4444
    %5229 = vmatpush1.bf16.msra.mxu0 %v4443
    %5230 = vmatprep.subr.bf16.mxu0 %v4437
    %5231 = vmatpush1.bf16.msra.mxu0 %v4436
    %5232 = vmatprep.subr.bf16.mxu0 %v4430
    %5233 = vmatpush1.bf16.msra.mxu0 %v4429
    %5234 = vmatprep.subr.bf16.mxu0 %v4423
    %5235 = vmatpush1.bf16.msra.mxu0 %v4422
    %5236 = vmatprep.subr.bf16.mxu0 %v4416
    %5237 = vmatpush1.bf16.msra.mxu0 %v4415
    %5238 = vmatprep.subr.bf16.mxu0 %v4409
    %5239 = vmatpush1.bf16.msra.mxu0 %v4408
    %5240 = vmatprep.subr.bf16.mxu0 %v4402
    %5241 = vmatpush1.bf16.msra.mxu0 %v4401
    %5242 = vmatprep.subr.bf16.mxu0 %v4507
    %5243 = vmatpush2.bf16.msra.mxu0 %v4506
    %5244 = vmatprep.subr.bf16.mxu0 %v4500
    %5245 = vmatpush2.bf16.msra.mxu0 %v4499
    %5246 = vmatprep.subr.bf16.mxu0 %v4493
    %5247 = vmatpush2.bf16.msra.mxu0 %v4492
    %5248 = vmatprep.subr.bf16.mxu0 %v4486
    %5249 = vmatpush2.bf16.msra.mxu0 %v4485
    %5250 = vmatprep.subr.bf16.mxu0 %v4479
    %5251 = vmatpush2.bf16.msra.mxu0 %v4478
    %5252 = vmatprep.subr.bf16.mxu0 %v4472
    %5253 = vmatpush2.bf16.msra.mxu0 %v4471
    %5254 = vmatprep.subr.bf16.mxu0 %v4465
    %5255 = vmatpush2.bf16.msra.mxu0 %v4464
    %5256 = vmatprep.subr.bf16.mxu0 %v4458
    %5257 = vmatpush2.bf16.msra.mxu0 %v4457
    %5258 = vmatprep.mubr.bf16.mxu0 %v2327
    %5259 = vmatmul.mubr.bf16.gmra.mxu0 %v2326
    %v5260 = vpop.f32.mrf.mxu0
    %v5261 = vadd.f32 %v5220, %v5260
    %v5262 = vpop.f32.mrf.mxu0
    %v5263 = vadd.f32 %v5222, %v5262
    %v5264 = vpop.f32.mrf.mxu0
    %v5265 = vpop.f32.mrf.mxu0
    %5266 = vdwg.mxu0
    %5267 = vmatprep.subr.bf16.mxu0 %v4563
    %5268 = vmatpush1.bf16.msra.mxu0 %v4562
    %5269 = vmatprep.subr.bf16.mxu0 %v4556
    %5270 = vmatpush1.bf16.msra.mxu0 %v4555
    %5271 = vmatprep.subr.bf16.mxu0 %v4549
    %5272 = vmatpush1.bf16.msra.mxu0 %v4548
    %5273 = vmatprep.subr.bf16.mxu0 %v4542
    %5274 = vmatpush1.bf16.msra.mxu0 %v4541
    %5275 = vmatprep.subr.bf16.mxu0 %v4535
    %5276 = vmatpush1.bf16.msra.mxu0 %v4534
    %5277 = vmatprep.subr.bf16.mxu0 %v4528
    %5278 = vmatpush1.bf16.msra.mxu0 %v4527
    %5279 = vmatprep.subr.bf16.mxu0 %v4521
    %5280 = vmatpush1.bf16.msra.mxu0 %v4520
    %5281 = vmatprep.subr.bf16.mxu0 %v4514
    %5282 = vmatpush1.bf16.msra.mxu0 %v4513
    %5283 = vmatprep.subr.bf16.mxu0 %v4619
    %5284 = vmatpush2.bf16.msra.mxu0 %v4618
    %5285 = vmatprep.subr.bf16.mxu0 %v4612
    %5286 = vmatpush2.bf16.msra.mxu0 %v4611
    %5287 = vmatprep.subr.bf16.mxu0 %v4605
    %5288 = vmatpush2.bf16.msra.mxu0 %v4604
    %5289 = vmatprep.subr.bf16.mxu0 %v4598
    %5290 = vmatpush2.bf16.msra.mxu0 %v4597
    %5291 = vmatprep.subr.bf16.mxu0 %v4591
    %5292 = vmatpush2.bf16.msra.mxu0 %v4590
    %5293 = vmatprep.subr.bf16.mxu0 %v4584
    %5294 = vmatpush2.bf16.msra.mxu0 %v4583
    %5295 = vmatprep.subr.bf16.mxu0 %v4577
    %5296 = vmatpush2.bf16.msra.mxu0 %v4576
    %5297 = vmatprep.subr.bf16.mxu0 %v4570
    %5298 = vmatpush2.bf16.msra.mxu0 %v4569
    %5299 = vmatprep.mubr.bf16.mxu0 %v2329
    %5300 = vmatmul.mubr.bf16.gmra.mxu0 %v2328
    %v5301 = vpop.f32.mrf.mxu0
    %v5302 = vadd.f32 %v5261, %v5301
    %v5303 = vpop.f32.mrf.mxu0
    %v5304 = vadd.f32 %v5263, %v5303
    %v5305 = vpop.f32.mrf.mxu0
    %v5306 = vpop.f32.mrf.mxu0
    %5307 = vdwg.mxu0
    %5308 = vmatprep.subr.bf16.mxu0 %v4675
    %5309 = vmatpush1.bf16.msra.mxu0 %v4674
    %5310 = vmatprep.subr.bf16.mxu0 %v4668
    %5311 = vmatpush1.bf16.msra.mxu0 %v4667
    %5312 = vmatprep.subr.bf16.mxu0 %v4661
    %5313 = vmatpush1.bf16.msra.mxu0 %v4660
    %5314 = vmatprep.subr.bf16.mxu0 %v4654
    %5315 = vmatpush1.bf16.msra.mxu0 %v4653
    %5316 = vmatprep.subr.bf16.mxu0 %v4647
    %5317 = vmatpush1.bf16.msra.mxu0 %v4646
    %5318 = vmatprep.subr.bf16.mxu0 %v4640
    %5319 = vmatpush1.bf16.msra.mxu0 %v4639
    %5320 = vmatprep.subr.bf16.mxu0 %v4633
    %5321 = vmatpush1.bf16.msra.mxu0 %v4632
    %5322 = vmatprep.subr.bf16.mxu0 %v4626
    %5323 = vmatpush1.bf16.msra.mxu0 %v4625
    %5324 = vmatprep.subr.bf16.mxu0 %v4731
    %5325 = vmatpush2.bf16.msra.mxu0 %v4730
    %5326 = vmatprep.subr.bf16.mxu0 %v4724
    %5327 = vmatpush2.bf16.msra.mxu0 %v4723
    %5328 = vmatprep.subr.bf16.mxu0 %v4717
    %5329 = vmatpush2.bf16.msra.mxu0 %v4716
    %5330 = vmatprep.subr.bf16.mxu0 %v4710
    %5331 = vmatpush2.bf16.msra.mxu0 %v4709
    %5332 = vmatprep.subr.bf16.mxu0 %v4703
    %5333 = vmatpush2.bf16.msra.mxu0 %v4702
    %5334 = vmatprep.subr.bf16.mxu0 %v4696
    %5335 = vmatpush2.bf16.msra.mxu0 %v4695
    %5336 = vmatprep.subr.bf16.mxu0 %v4689
    %5337 = vmatpush2.bf16.msra.mxu0 %v4688
    %5338 = vmatprep.subr.bf16.mxu0 %v4682
    %5339 = vmatpush2.bf16.msra.mxu0 %v4681
    %5340 = vmatprep.mubr.bf16.mxu0 %v2331
    %5341 = vmatmul.mubr.bf16.gmra.mxu0 %v2330
    %v5342 = vpop.f32.mrf.mxu0
    %v5343 = vadd.f32 %v5302, %v5342
    %v5344 = vpop.f32.mrf.mxu0
    %v5345 = vadd.f32 %v5304, %v5344
    %v5346 = vpop.f32.mrf.mxu0
    %v5347 = vpop.f32.mrf.mxu0
    %5348 = vdwg.mxu0
    %5349 = vmatprep.subr.bf16.mxu0 %v4341
    %5350 = vmatpush1.bf16.msra.mxu0 %v4340
    %5351 = vmatprep.subr.bf16.mxu0 %v4334
    %5352 = vmatpush1.bf16.msra.mxu0 %v4333
    %5353 = vmatprep.subr.bf16.mxu0 %v4327
    %5354 = vmatpush1.bf16.msra.mxu0 %v4326
    %5355 = vmatprep.subr.bf16.mxu0 %v4320
    %5356 = vmatpush1.bf16.msra.mxu0 %v4319
    %5357 = vmatprep.subr.bf16.mxu0 %v4313
    %5358 = vmatpush1.bf16.msra.mxu0 %v4312
    %5359 = vmatprep.subr.bf16.mxu0 %v4306
    %5360 = vmatpush1.bf16.msra.mxu0 %v4305
    %5361 = vmatprep.subr.bf16.mxu0 %v4299
    %5362 = vmatpush1.bf16.msra.mxu0 %v4298
    %5363 = vmatprep.subr.bf16.mxu0 %v4292
    %5364 = vmatpush1.bf16.msra.mxu0 %v4291
    %5365 = vmatprep.subr.bf16.mxu0 %v4397
    %5366 = vmatpush2.bf16.msra.mxu0 %v4396
    %5367 = vmatprep.subr.bf16.mxu0 %v4390
    %5368 = vmatpush2.bf16.msra.mxu0 %v4389
    %5369 = vmatprep.subr.bf16.mxu0 %v4383
    %5370 = vmatpush2.bf16.msra.mxu0 %v4382
    %5371 = vmatprep.subr.bf16.mxu0 %v4376
    %5372 = vmatpush2.bf16.msra.mxu0 %v4375
    %5373 = vmatprep.subr.bf16.mxu0 %v4369
    %5374 = vmatpush2.bf16.msra.mxu0 %v4368
    %5375 = vmatprep.subr.bf16.mxu0 %v4362
    %5376 = vmatpush2.bf16.msra.mxu0 %v4361
    %5377 = vmatprep.subr.bf16.mxu0 %v4355
    %5378 = vmatpush2.bf16.msra.mxu0 %v4354
    %5379 = vmatprep.subr.bf16.mxu0 %v4348
    %5380 = vmatpush2.bf16.msra.mxu0 %v4347
    %5381 = vmatprep.mubr.bf16.mxu0 %v2325
    %5382 = vmatmul.mubr.bf16.gmra.mxu0 %v2324
    %v5383 = vpop.f32.mrf.mxu0
    %v5384 = vadd.f32 %v2857, %v5383
    %v5385 = vpop.f32.mrf.mxu0
    %v5386 = vadd.f32 %v2861, %v5385
    %v5387 = vpop.f32.mrf.mxu0
    %v5388 = vpop.f32.mrf.mxu0
    %5389 = vdwg.mxu0
    %5390 = vmatprep.subr.bf16.mxu0 %v4453
    %5391 = vmatpush1.bf16.msra.mxu0 %v4452
    %5392 = vmatprep.subr.bf16.mxu0 %v4446
    %5393 = vmatpush1.bf16.msra.mxu0 %v4445
    %5394 = vmatprep.subr.bf16.mxu0 %v4439
    %5395 = vmatpush1.bf16.msra.mxu0 %v4438
    %5396 = vmatprep.subr.bf16.mxu0 %v4432
    %5397 = vmatpush1.bf16.msra.mxu0 %v4431
    %5398 = vmatprep.subr.bf16.mxu0 %v4425
    %5399 = vmatpush1.bf16.msra.mxu0 %v4424
    %5400 = vmatprep.subr.bf16.mxu0 %v4418
    %5401 = vmatpush1.bf16.msra.mxu0 %v4417
    %5402 = vmatprep.subr.bf16.mxu0 %v4411
    %5403 = vmatpush1.bf16.msra.mxu0 %v4410
    %5404 = vmatprep.subr.bf16.mxu0 %v4404
    %5405 = vmatpush1.bf16.msra.mxu0 %v4403
    %5406 = vmatprep.subr.bf16.mxu0 %v4509
    %5407 = vmatpush2.bf16.msra.mxu0 %v4508
    %5408 = vmatprep.subr.bf16.mxu0 %v4502
    %5409 = vmatpush2.bf16.msra.mxu0 %v4501
    %5410 = vmatprep.subr.bf16.mxu0 %v4495
    %5411 = vmatpush2.bf16.msra.mxu0 %v4494
    %5412 = vmatprep.subr.bf16.mxu0 %v4488
    %5413 = vmatpush2.bf16.msra.mxu0 %v4487
    %5414 = vmatprep.subr.bf16.mxu0 %v4481
    %5415 = vmatpush2.bf16.msra.mxu0 %v4480
    %5416 = vmatprep.subr.bf16.mxu0 %v4474
    %5417 = vmatpush2.bf16.msra.mxu0 %v4473
    %5418 = vmatprep.subr.bf16.mxu0 %v4467
    %5419 = vmatpush2.bf16.msra.mxu0 %v4466
    %5420 = vmatprep.subr.bf16.mxu0 %v4460
    %5421 = vmatpush2.bf16.msra.mxu0 %v4459
    %5422 = vmatprep.mubr.bf16.mxu0 %v2327
    %5423 = vmatmul.mubr.bf16.gmra.mxu0 %v2326
    %v5424 = vpop.f32.mrf.mxu0
    %v5425 = vadd.f32 %v5384, %v5424
    %v5426 = vpop.f32.mrf.mxu0
    %v5427 = vadd.f32 %v5386, %v5426
    %v5428 = vpop.f32.mrf.mxu0
    %v5429 = vpop.f32.mrf.mxu0
    %5430 = vdwg.mxu0
    %5431 = vmatprep.subr.bf16.mxu0 %v4565
    %5432 = vmatpush1.bf16.msra.mxu0 %v4564
    %5433 = vmatprep.subr.bf16.mxu0 %v4558
    %5434 = vmatpush1.bf16.msra.mxu0 %v4557
    %5435 = vmatprep.subr.bf16.mxu0 %v4551
    %5436 = vmatpush1.bf16.msra.mxu0 %v4550
    %5437 = vmatprep.subr.bf16.mxu0 %v4544
    %5438 = vmatpush1.bf16.msra.mxu0 %v4543
    %5439 = vmatprep.subr.bf16.mxu0 %v4537
    %5440 = vmatpush1.bf16.msra.mxu0 %v4536
    %5441 = vmatprep.subr.bf16.mxu0 %v4530
    %5442 = vmatpush1.bf16.msra.mxu0 %v4529
    %5443 = vmatprep.subr.bf16.mxu0 %v4523
    %5444 = vmatpush1.bf16.msra.mxu0 %v4522
    %5445 = vmatprep.subr.bf16.mxu0 %v4516
    %5446 = vmatpush1.bf16.msra.mxu0 %v4515
    %5447 = vmatprep.subr.bf16.mxu0 %v4621
    %5448 = vmatpush2.bf16.msra.mxu0 %v4620
    %5449 = vmatprep.subr.bf16.mxu0 %v4614
    %5450 = vmatpush2.bf16.msra.mxu0 %v4613
    %5451 = vmatprep.subr.bf16.mxu0 %v4607
    %5452 = vmatpush2.bf16.msra.mxu0 %v4606
    %5453 = vmatprep.subr.bf16.mxu0 %v4600
    %5454 = vmatpush2.bf16.msra.mxu0 %v4599
    %5455 = vmatprep.subr.bf16.mxu0 %v4593
    %5456 = vmatpush2.bf16.msra.mxu0 %v4592
    %5457 = vmatprep.subr.bf16.mxu0 %v4586
    %5458 = vmatpush2.bf16.msra.mxu0 %v4585
    %5459 = vmatprep.subr.bf16.mxu0 %v4579
    %5460 = vmatpush2.bf16.msra.mxu0 %v4578
    %5461 = vmatprep.subr.bf16.mxu0 %v4572
    %5462 = vmatpush2.bf16.msra.mxu0 %v4571
    %5463 = vmatprep.mubr.bf16.mxu0 %v2329
    %5464 = vmatmul.mubr.bf16.gmra.mxu0 %v2328
    %v5465 = vpop.f32.mrf.mxu0
    %v5466 = vadd.f32 %v5425, %v5465
    %v5467 = vpop.f32.mrf.mxu0
    %v5468 = vadd.f32 %v5427, %v5467
    %v5469 = vpop.f32.mrf.mxu0
    %v5470 = vpop.f32.mrf.mxu0
    %5471 = vdwg.mxu0
    %5472 = vmatprep.subr.bf16.mxu0 %v4677
    %5473 = vmatpush1.bf16.msra.mxu0 %v4676
    %5474 = vmatprep.subr.bf16.mxu0 %v4670
    %5475 = vmatpush1.bf16.msra.mxu0 %v4669
    %5476 = vmatprep.subr.bf16.mxu0 %v4663
    %5477 = vmatpush1.bf16.msra.mxu0 %v4662
    %5478 = vmatprep.subr.bf16.mxu0 %v4656
    %5479 = vmatpush1.bf16.msra.mxu0 %v4655
    %5480 = vmatprep.subr.bf16.mxu0 %v4649
    %5481 = vmatpush1.bf16.msra.mxu0 %v4648
    %5482 = vmatprep.subr.bf16.mxu0 %v4642
    %5483 = vmatpush1.bf16.msra.mxu0 %v4641
    %5484 = vmatprep.subr.bf16.mxu0 %v4635
    %5485 = vmatpush1.bf16.msra.mxu0 %v4634
    %5486 = vmatprep.subr.bf16.mxu0 %v4628
    %5487 = vmatpush1.bf16.msra.mxu0 %v4627
    %5488 = vmatprep.subr.bf16.mxu0 %v4733
    %5489 = vmatpush2.bf16.msra.mxu0 %v4732
    %5490 = vmatprep.subr.bf16.mxu0 %v4726
    %5491 = vmatpush2.bf16.msra.mxu0 %v4725
    %5492 = vmatprep.subr.bf16.mxu0 %v4719
    %5493 = vmatpush2.bf16.msra.mxu0 %v4718
    %5494 = vmatprep.subr.bf16.mxu0 %v4712
    %5495 = vmatpush2.bf16.msra.mxu0 %v4711
    %5496 = vmatprep.subr.bf16.mxu0 %v4705
    %5497 = vmatpush2.bf16.msra.mxu0 %v4704
    %5498 = vmatprep.subr.bf16.mxu0 %v4698
    %5499 = vmatpush2.bf16.msra.mxu0 %v4697
    %5500 = vmatprep.subr.bf16.mxu0 %v4691
    %5501 = vmatpush2.bf16.msra.mxu0 %v4690
    %5502 = vmatprep.subr.bf16.mxu0 %v4684
    %5503 = vmatpush2.bf16.msra.mxu0 %v4683
    %5504 = vmatprep.mubr.bf16.mxu0 %v2331
    %5505 = vmatmul.mubr.bf16.gmra.mxu0 %v2330
    %v5506 = vpop.f32.mrf.mxu0
    %v5507 = vadd.f32 %v5466, %v5506
    %v5508 = vpop.f32.mrf.mxu0
    %v5509 = vadd.f32 %v5468, %v5508
    %v5510 = vpop.f32.mrf.mxu0
    %v5511 = vpop.f32.mrf.mxu0
    %5512 = vdwg.mxu0
    %5513 = vmatprep.subr.bf16.mxu0 %v4343
    %5514 = vmatpush1.bf16.msra.mxu0 %v4342
    %5515 = vmatprep.subr.bf16.mxu0 %v4336
    %5516 = vmatpush1.bf16.msra.mxu0 %v4335
    %5517 = vmatprep.subr.bf16.mxu0 %v4329
    %5518 = vmatpush1.bf16.msra.mxu0 %v4328
    %5519 = vmatprep.subr.bf16.mxu0 %v4322
    %5520 = vmatpush1.bf16.msra.mxu0 %v4321
    %5521 = vmatprep.subr.bf16.mxu0 %v4315
    %5522 = vmatpush1.bf16.msra.mxu0 %v4314
    %5523 = vmatprep.subr.bf16.mxu0 %v4308
    %5524 = vmatpush1.bf16.msra.mxu0 %v4307
    %5525 = vmatprep.subr.bf16.mxu0 %v4301
    %5526 = vmatpush1.bf16.msra.mxu0 %v4300
    %5527 = vmatprep.subr.bf16.mxu0 %v4294
    %5528 = vmatpush1.bf16.msra.mxu0 %v4293
    %5529 = vmatprep.subr.bf16.mxu0 %v4399
    %5530 = vmatpush2.bf16.msra.mxu0 %v4398
    %5531 = vmatprep.subr.bf16.mxu0 %v4392
    %5532 = vmatpush2.bf16.msra.mxu0 %v4391
    %5533 = vmatprep.subr.bf16.mxu0 %v4385
    %5534 = vmatpush2.bf16.msra.mxu0 %v4384
    %5535 = vmatprep.subr.bf16.mxu0 %v4378
    %5536 = vmatpush2.bf16.msra.mxu0 %v4377
    %5537 = vmatprep.subr.bf16.mxu0 %v4371
    %5538 = vmatpush2.bf16.msra.mxu0 %v4370
    %5539 = vmatprep.subr.bf16.mxu0 %v4364
    %5540 = vmatpush2.bf16.msra.mxu0 %v4363
    %5541 = vmatprep.subr.bf16.mxu0 %v4357
    %5542 = vmatpush2.bf16.msra.mxu0 %v4356
    %5543 = vmatprep.subr.bf16.mxu0 %v4350
    %5544 = vmatpush2.bf16.msra.mxu0 %v4349
    %5545 = vmatprep.mubr.bf16.mxu0 %v2325
    %5546 = vmatmul.mubr.bf16.gmra.mxu0 %v2324
    %v5547 = vpop.f32.mrf.mxu0
    %v5548 = vadd.f32 %v2865, %v5547
    %v5549 = vpop.f32.mrf.mxu0
    %v5550 = vadd.f32 %v2869, %v5549
    %v5551 = vpop.f32.mrf.mxu0
    %v5552 = vpop.f32.mrf.mxu0
    %5553 = vdwg.mxu0
    %5554 = vmatprep.subr.bf16.mxu0 %v4455
    %5555 = vmatpush1.bf16.msra.mxu0 %v4454
    %5556 = vmatprep.subr.bf16.mxu0 %v4448
    %5557 = vmatpush1.bf16.msra.mxu0 %v4447
    %5558 = vmatprep.subr.bf16.mxu0 %v4441
    %5559 = vmatpush1.bf16.msra.mxu0 %v4440
    %5560 = vmatprep.subr.bf16.mxu0 %v4434
    %5561 = vmatpush1.bf16.msra.mxu0 %v4433
    %5562 = vmatprep.subr.bf16.mxu0 %v4427
    %5563 = vmatpush1.bf16.msra.mxu0 %v4426
    %5564 = vmatprep.subr.bf16.mxu0 %v4420
    %5565 = vmatpush1.bf16.msra.mxu0 %v4419
    %5566 = vmatprep.subr.bf16.mxu0 %v4413
    %5567 = vmatpush1.bf16.msra.mxu0 %v4412
    %5568 = vmatprep.subr.bf16.mxu0 %v4406
    %5569 = vmatpush1.bf16.msra.mxu0 %v4405
    %5570 = vmatprep.subr.bf16.mxu0 %v4511
    %5571 = vmatpush2.bf16.msra.mxu0 %v4510
    %5572 = vmatprep.subr.bf16.mxu0 %v4504
    %5573 = vmatpush2.bf16.msra.mxu0 %v4503
    %5574 = vmatprep.subr.bf16.mxu0 %v4497
    %5575 = vmatpush2.bf16.msra.mxu0 %v4496
    %5576 = vmatprep.subr.bf16.mxu0 %v4490
    %5577 = vmatpush2.bf16.msra.mxu0 %v4489
    %5578 = vmatprep.subr.bf16.mxu0 %v4483
    %5579 = vmatpush2.bf16.msra.mxu0 %v4482
    %5580 = vmatprep.subr.bf16.mxu0 %v4476
    %5581 = vmatpush2.bf16.msra.mxu0 %v4475
    %5582 = vmatprep.subr.bf16.mxu0 %v4469
    %5583 = vmatpush2.bf16.msra.mxu0 %v4468
    %5584 = vmatprep.subr.bf16.mxu0 %v4462
    %5585 = vmatpush2.bf16.msra.mxu0 %v4461
    %5586 = vmatprep.mubr.bf16.mxu0 %v2327
    %5587 = vmatmul.mubr.bf16.gmra.mxu0 %v2326
    %v5588 = vpop.f32.mrf.mxu0
    %v5589 = vadd.f32 %v5548, %v5588
    %v5590 = vpop.f32.mrf.mxu0
    %v5591 = vadd.f32 %v5550, %v5590
    %v5592 = vpop.f32.mrf.mxu0
    %v5593 = vpop.f32.mrf.mxu0
    %5594 = vdwg.mxu0
    %5595 = vmatprep.subr.bf16.mxu0 %v4567
    %5596 = vmatpush1.bf16.msra.mxu0 %v4566
    %5597 = vmatprep.subr.bf16.mxu0 %v4560
    %5598 = vmatpush1.bf16.msra.mxu0 %v4559
    %5599 = vmatprep.subr.bf16.mxu0 %v4553
    %5600 = vmatpush1.bf16.msra.mxu0 %v4552
    %5601 = vmatprep.subr.bf16.mxu0 %v4546
    %5602 = vmatpush1.bf16.msra.mxu0 %v4545
    %5603 = vmatprep.subr.bf16.mxu0 %v4539
    %5604 = vmatpush1.bf16.msra.mxu0 %v4538
    %5605 = vmatprep.subr.bf16.mxu0 %v4532
    %5606 = vmatpush1.bf16.msra.mxu0 %v4531
    %5607 = vmatprep.subr.bf16.mxu0 %v4525
    %5608 = vmatpush1.bf16.msra.mxu0 %v4524
    %5609 = vmatprep.subr.bf16.mxu0 %v4518
    %5610 = vmatpush1.bf16.msra.mxu0 %v4517
    %5611 = vmatprep.subr.bf16.mxu0 %v4623
    %5612 = vmatpush2.bf16.msra.mxu0 %v4622
    %5613 = vmatprep.subr.bf16.mxu0 %v4616
    %5614 = vmatpush2.bf16.msra.mxu0 %v4615
    %5615 = vmatprep.subr.bf16.mxu0 %v4609
    %5616 = vmatpush2.bf16.msra.mxu0 %v4608
    %5617 = vmatprep.subr.bf16.mxu0 %v4602
    %5618 = vmatpush2.bf16.msra.mxu0 %v4601
    %5619 = vmatprep.subr.bf16.mxu0 %v4595
    %5620 = vmatpush2.bf16.msra.mxu0 %v4594
    %5621 = vmatprep.subr.bf16.mxu0 %v4588
    %5622 = vmatpush2.bf16.msra.mxu0 %v4587
    %5623 = vmatprep.subr.bf16.mxu0 %v4581
    %5624 = vmatpush2.bf16.msra.mxu0 %v4580
    %5625 = vmatprep.subr.bf16.mxu0 %v4574
    %5626 = vmatpush2.bf16.msra.mxu0 %v4573
    %5627 = vmatprep.mubr.bf16.mxu0 %v2329
    %5628 = vmatmul.mubr.bf16.gmra.mxu0 %v2328
    %v5629 = vpop.f32.mrf.mxu0
    %v5630 = vadd.f32 %v5589, %v5629
    %v5631 = vpop.f32.mrf.mxu0
    %v5632 = vadd.f32 %v5591, %v5631
    %v5633 = vpop.f32.mrf.mxu0
    %v5634 = vpop.f32.mrf.mxu0
    %5635 = vdwg.mxu0
    %5636 = vmatprep.subr.bf16.mxu0 %v4679
    %5637 = vmatpush1.bf16.msra.mxu0 %v4678
    %5638 = vmatprep.subr.bf16.mxu0 %v4672
    %5639 = vmatpush1.bf16.msra.mxu0 %v4671
    %5640 = vmatprep.subr.bf16.mxu0 %v4665
    %5641 = vmatpush1.bf16.msra.mxu0 %v4664
    %5642 = vmatprep.subr.bf16.mxu0 %v4658
    %5643 = vmatpush1.bf16.msra.mxu0 %v4657
    %5644 = vmatprep.subr.bf16.mxu0 %v4651
    %5645 = vmatpush1.bf16.msra.mxu0 %v4650
    %5646 = vmatprep.subr.bf16.mxu0 %v4644
    %5647 = vmatpush1.bf16.msra.mxu0 %v4643
    %5648 = vmatprep.subr.bf16.mxu0 %v4637
    %5649 = vmatpush1.bf16.msra.mxu0 %v4636
    %5650 = vmatprep.subr.bf16.mxu0 %v4630
    %5651 = vmatpush1.bf16.msra.mxu0 %v4629
    %5652 = vmatprep.subr.bf16.mxu0 %v4735
    %5653 = vmatpush2.bf16.msra.mxu0 %v4734
    %5654 = vmatprep.subr.bf16.mxu0 %v4728
    %5655 = vmatpush2.bf16.msra.mxu0 %v4727
    %5656 = vmatprep.subr.bf16.mxu0 %v4721
    %5657 = vmatpush2.bf16.msra.mxu0 %v4720
    %5658 = vmatprep.subr.bf16.mxu0 %v4714
    %5659 = vmatpush2.bf16.msra.mxu0 %v4713
    %5660 = vmatprep.subr.bf16.mxu0 %v4707
    %5661 = vmatpush2.bf16.msra.mxu0 %v4706
    %5662 = vmatprep.subr.bf16.mxu0 %v4700
    %5663 = vmatpush2.bf16.msra.mxu0 %v4699
    %5664 = vmatprep.subr.bf16.mxu0 %v4693
    %5665 = vmatpush2.bf16.msra.mxu0 %v4692
    %5666 = vmatprep.subr.bf16.mxu0 %v4686
    %5667 = vmatpush2.bf16.msra.mxu0 %v4685
    %5668 = vmatprep.mubr.bf16.mxu0 %v2331
    %5669 = vmatmul.mubr.bf16.gmra.mxu0 %v2330
    %v5670 = vpop.f32.mrf.mxu0
    %v5671 = vadd.f32 %v5630, %v5670
    %v5672 = vpop.f32.mrf.mxu0
    %v5673 = vadd.f32 %v5632, %v5672
    %v5674 = vpop.f32.mrf.mxu0
    %v5675 = vpop.f32.mrf.mxu0
    %5676 = vdwg.mxu0
    %5677 = vmatprep.subr.bf16.mxu0 0
    %5678 = vmatpush1.bf16.msra.mxu0 %v4344
    %5679 = vmatprep.subr.bf16.mxu0 0
    %5680 = vmatpush1.bf16.msra.mxu0 %v4337
    %5681 = vmatprep.subr.bf16.mxu0 0
    %5682 = vmatpush1.bf16.msra.mxu0 %v4330
    %5683 = vmatprep.subr.bf16.mxu0 0
    %5684 = vmatpush1.bf16.msra.mxu0 %v4323
    %5685 = vmatprep.subr.bf16.mxu0 0
    %5686 = vmatpush1.bf16.msra.mxu0 %v4316
    %5687 = vmatprep.subr.bf16.mxu0 0
    %5688 = vmatpush1.bf16.msra.mxu0 %v4309
    %5689 = vmatprep.subr.bf16.mxu0 0
    %5690 = vmatpush1.bf16.msra.mxu0 %v4302
    %5691 = vmatprep.subr.bf16.mxu0 0
    %5692 = vmatpush1.bf16.msra.mxu0 %v4295
    %5693 = vmatprep.subr.bf16.mxu0 0
    %5694 = vmatpush2.bf16.msra.mxu0 %v4400
    %5695 = vmatprep.subr.bf16.mxu0 0
    %5696 = vmatpush2.bf16.msra.mxu0 %v4393
    %5697 = vmatprep.subr.bf16.mxu0 0
    %5698 = vmatpush2.bf16.msra.mxu0 %v4386
    %5699 = vmatprep.subr.bf16.mxu0 0
    %5700 = vmatpush2.bf16.msra.mxu0 %v4379
    %5701 = vmatprep.subr.bf16.mxu0 0
    %5702 = vmatpush2.bf16.msra.mxu0 %v4372
    %5703 = vmatprep.subr.bf16.mxu0 0
    %5704 = vmatpush2.bf16.msra.mxu0 %v4365
    %5705 = vmatprep.subr.bf16.mxu0 0
    %5706 = vmatpush2.bf16.msra.mxu0 %v4358
    %5707 = vmatprep.subr.bf16.mxu0 0
    %5708 = vmatpush2.bf16.msra.mxu0 %v4351
    %5709 = vmatprep.mubr.bf16.mxu0 %v2325
    %5710 = vmatmul.mubr.bf16.gmra.mxu0 %v2324
    %v5711 = vpop.f32.mrf.mxu0
    %v5712 = vadd.f32 %v2873, %v5711
    %v5713 = vpop.f32.mrf.mxu0
    %v5714 = vpop.f32.mrf.mxu0
    %v5715 = vpop.f32.mrf.mxu0
    %5716 = vdwg.mxu0
    %5717 = vmatprep.subr.bf16.mxu0 0
    %5718 = vmatpush1.bf16.msra.mxu0 %v4456
    %5719 = vmatprep.subr.bf16.mxu0 0
    %5720 = vmatpush1.bf16.msra.mxu0 %v4449
    %5721 = vmatprep.subr.bf16.mxu0 0
    %5722 = vmatpush1.bf16.msra.mxu0 %v4442
    %5723 = vmatprep.subr.bf16.mxu0 0
    %5724 = vmatpush1.bf16.msra.mxu0 %v4435
    %5725 = vmatprep.subr.bf16.mxu0 0
    %5726 = vmatpush1.bf16.msra.mxu0 %v4428
    %5727 = vmatprep.subr.bf16.mxu0 0
    %5728 = vmatpush1.bf16.msra.mxu0 %v4421
    %5729 = vmatprep.subr.bf16.mxu0 0
    %5730 = vmatpush1.bf16.msra.mxu0 %v4414
    %5731 = vmatprep.subr.bf16.mxu0 0
    %5732 = vmatpush1.bf16.msra.mxu0 %v4407
    %5733 = vmatprep.subr.bf16.mxu0 0
    %5734 = vmatpush2.bf16.msra.mxu0 %v4512
    %5735 = vmatprep.subr.bf16.mxu0 0
    %5736 = vmatpush2.bf16.msra.mxu0 %v4505
    %5737 = vmatprep.subr.bf16.mxu0 0
    %5738 = vmatpush2.bf16.msra.mxu0 %v4498
    %5739 = vmatprep.subr.bf16.mxu0 0
    %5740 = vmatpush2.bf16.msra.mxu0 %v4491
    %5741 = vmatprep.subr.bf16.mxu0 0
    %5742 = vmatpush2.bf16.msra.mxu0 %v4484
    %5743 = vmatprep.subr.bf16.mxu0 0
    %5744 = vmatpush2.bf16.msra.mxu0 %v4477
    %5745 = vmatprep.subr.bf16.mxu0 0
    %5746 = vmatpush2.bf16.msra.mxu0 %v4470
    %5747 = vmatprep.subr.bf16.mxu0 0
    %5748 = vmatpush2.bf16.msra.mxu0 %v4463
    %5749 = vmatprep.mubr.bf16.mxu0 %v2327
    %5750 = vmatmul.mubr.bf16.gmra.mxu0 %v2326
    %v5751 = vpop.f32.mrf.mxu0
    %v5752 = vadd.f32 %v5712, %v5751
    %v5753 = vpop.f32.mrf.mxu0
    %v5754 = vpop.f32.mrf.mxu0
    %v5755 = vpop.f32.mrf.mxu0
    %5756 = vdwg.mxu0
    %5757 = vmatprep.subr.bf16.mxu0 0
    %5758 = vmatpush1.bf16.msra.mxu0 %v4568
    %5759 = vmatprep.subr.bf16.mxu0 0
    %5760 = vmatpush1.bf16.msra.mxu0 %v4561
    %5761 = vmatprep.subr.bf16.mxu0 0
    %5762 = vmatpush1.bf16.msra.mxu0 %v4554
    %5763 = vmatprep.subr.bf16.mxu0 0
    %5764 = vmatpush1.bf16.msra.mxu0 %v4547
    %5765 = vmatprep.subr.bf16.mxu0 0
    %5766 = vmatpush1.bf16.msra.mxu0 %v4540
    %5767 = vmatprep.subr.bf16.mxu0 0
    %5768 = vmatpush1.bf16.msra.mxu0 %v4533
    %5769 = vmatprep.subr.bf16.mxu0 0
    %5770 = vmatpush1.bf16.msra.mxu0 %v4526
    %5771 = vmatprep.subr.bf16.mxu0 0
    %5772 = vmatpush1.bf16.msra.mxu0 %v4519
    %5773 = vmatprep.subr.bf16.mxu0 0
    %5774 = vmatpush2.bf16.msra.mxu0 %v4624
    %5775 = vmatprep.subr.bf16.mxu0 0
    %5776 = vmatpush2.bf16.msra.mxu0 %v4617
    %5777 = vmatprep.subr.bf16.mxu0 0
    %5778 = vmatpush2.bf16.msra.mxu0 %v4610
    %5779 = vmatprep.subr.bf16.mxu0 0
    %5780 = vmatpush2.bf16.msra.mxu0 %v4603
    %5781 = vmatprep.subr.bf16.mxu0 0
    %5782 = vmatpush2.bf16.msra.mxu0 %v4596
    %5783 = vmatprep.subr.bf16.mxu0 0
    %5784 = vmatpush2.bf16.msra.mxu0 %v4589
    %5785 = vmatprep.subr.bf16.mxu0 0
    %5786 = vmatpush2.bf16.msra.mxu0 %v4582
    %5787 = vmatprep.subr.bf16.mxu0 0
    %5788 = vmatpush2.bf16.msra.mxu0 %v4575
    %5789 = vmatprep.mubr.bf16.mxu0 %v2329
    %5790 = vmatmul.mubr.bf16.gmra.mxu0 %v2328
    %v5791 = vpop.f32.mrf.mxu0
    %v5792 = vadd.f32 %v5752, %v5791
    %v5793 = vpop.f32.mrf.mxu0
    %v5794 = vpop.f32.mrf.mxu0
    %v5795 = vpop.f32.mrf.mxu0
    %5796 = vdwg.mxu0
    %5797 = vmatprep.subr.bf16.mxu0 0
    %5798 = vmatpush1.bf16.msra.mxu0 %v4680
    %5799 = vmatprep.subr.bf16.mxu0 0
    %5800 = vmatpush1.bf16.msra.mxu0 %v4673
    %5801 = vmatprep.subr.bf16.mxu0 0
    %5802 = vmatpush1.bf16.msra.mxu0 %v4666
    %5803 = vmatprep.subr.bf16.mxu0 0
    %5804 = vmatpush1.bf16.msra.mxu0 %v4659
    %5805 = vmatprep.subr.bf16.mxu0 0
    %5806 = vmatpush1.bf16.msra.mxu0 %v4652
    %5807 = vmatprep.subr.bf16.mxu0 0
    %5808 = vmatpush1.bf16.msra.mxu0 %v4645
    %5809 = vmatprep.subr.bf16.mxu0 0
    %5810 = vmatpush1.bf16.msra.mxu0 %v4638
    %5811 = vmatprep.subr.bf16.mxu0 0
    %5812 = vmatpush1.bf16.msra.mxu0 %v4631
    %5813 = vmatprep.subr.bf16.mxu0 0
    %5814 = vmatpush2.bf16.msra.mxu0 %v4736
    %5815 = vmatprep.subr.bf16.mxu0 0
    %5816 = vmatpush2.bf16.msra.mxu0 %v4729
    %5817 = vmatprep.subr.bf16.mxu0 0
    %5818 = vmatpush2.bf16.msra.mxu0 %v4722
    %5819 = vmatprep.subr.bf16.mxu0 0
    %5820 = vmatpush2.bf16.msra.mxu0 %v4715
    %5821 = vmatprep.subr.bf16.mxu0 0
    %5822 = vmatpush2.bf16.msra.mxu0 %v4708
    %5823 = vmatprep.subr.bf16.mxu0 0
    %5824 = vmatpush2.bf16.msra.mxu0 %v4701
    %5825 = vmatprep.subr.bf16.mxu0 0
    %5826 = vmatpush2.bf16.msra.mxu0 %v4694
    %5827 = vmatprep.subr.bf16.mxu0 0
    %5828 = vmatpush2.bf16.msra.mxu0 %v4687
    %5829 = vmatprep.mubr.bf16.mxu0 %v2331
    %5830 = vmatmul.mubr.bf16.gmra.mxu0 %v2330
    %v5831 = vpop.f32.mrf.mxu0
    %v5832 = vadd.f32 %v5792, %v5831
    %v5833 = vpop.f32.mrf.mxu0
    %v5834 = vpop.f32.mrf.mxu0
    %v5835 = vpop.f32.mrf.mxu0
    %5836 = vdwg.mxu0
    %v5837 = vxor.u32 %v5343, 2147483648
    %v5838 = vxor.u32 %v5345, 2147483648
    %v5839 = vxor.u32 %v5507, 2147483648
    %v5840 = vxor.u32 %v5509, 2147483648
    %v5841 = vxor.u32 %v5671, 2147483648
    %v5842 = vxor.u32 %v5673, 2147483648
    %v5843 = vxor.u32 %v5832, 2147483648
    %v5844 = vmul.f32 %v5837, 1.442695
    %v5845 = vpow.pop %v5844
    %v5846 = vmul.f32 %v5838, 1.442695
    %v5847 = vpow.pop %v5846
    %v5848 = vmul.f32 %v5839, 1.442695
    %v5849 = vpow.pop %v5848
    %v5850 = vmul.f32 %v5840, 1.442695
    %v5851 = vpow.pop %v5850
    %v5852 = vmul.f32 %v5841, 1.442695
    %v5853 = vpow.pop %v5852
    %v5854 = vmul.f32 %v5842, 1.442695
    %v5855 = vpow.pop %v5854
    %v5856 = vmul.f32 %v5843, 1.442695
    %v5857 = vpow.pop %v5856
    %v5858 = vadd.f32 %v5845, 1.0
    %v5859 = vadd.f32 %v5847, 1.0
    %v5860 = vadd.f32 %v5849, 1.0
    %v5861 = vadd.f32 %v5851, 1.0
    %v5862 = vadd.f32 %v5853, 1.0
    %v5863 = vadd.f32 %v5855, 1.0
    %v5864 = vadd.f32 %v5857, 1.0
    %v5865 = vrcp.pop %v5858
    %v5866 = vmul.f32 1.0, %v5865
    %v5867 = vrcp.pop %v5859
    %v5868 = vmul.f32 1.0, %v5867
    %v5869 = vrcp.pop %v5860
    %v5870 = vmul.f32 1.0, %v5869
    %v5871 = vrcp.pop %v5861
    %v5872 = vmul.f32 1.0, %v5871
    %v5873 = vrcp.pop %v5862
    %v5874 = vmul.f32 1.0, %v5873
    %v5875 = vrcp.pop %v5863
    %v5876 = vmul.f32 1.0, %v5875
    %v5877 = vrcp.pop %v5864
    %v5878 = vmul.f32 1.0, %v5877
    %5879 = vst [vmem:[#allocation2] sm:$0xff] %v5866
    %5880 = vst [vmem:[#allocation2 + $0x8] sm:$0xff] %v5868
    %5881 = vst [vmem:[#allocation2 + $0x10] sm:$0xff] %v5870
    %5882 = vst [vmem:[#allocation2 + $0x18] sm:$0xff] %v5872
    %5883 = vst [vmem:[#allocation2 + $0x20] sm:$0xff] %v5874
    %5884 = vst [vmem:[#allocation2 + $0x28] sm:$0xff] %v5876
    %vm5885 = vcmask 130048
    %5886 = vst.msk [vmem:[#allocation2 + $0x30] sm:$0xff] %vm5885, %v5878
    // Predicated region
    $region34: #{tpu_custom_call.1} parent=1 // pred_check
      _
    $region35: #{tpu_custom_call.1} parent=1 // pred_check_branch
      %5888 = sbr.rel (0) target = $region37
    $region36: #{tpu_custom_call.1} parent=1 // pred_region
      %s5890 = ssub.s32 896, 896
      %5891 = vsyncadd [#allocation3], %s5890
      %s5893 = sshll.u32 [#allocation2], 4
      %s5894 = int_to_ptr.vmem [resolvable:$true] %s5893
      %5896 = dma.vmem_to_hbm [thread:$0]  %s5894, 896, %s8, [#allocation3]
    $region37: #{tpu_custom_call.1} parent=1 // pred_fallthru
      _
    // Predicated region
    $region38: #{tpu_custom_call.1} parent=1 // pred_check
      _
    $region39: #{tpu_custom_call.1} parent=1 // pred_check_branch
      %5898 = sbr.rel (0) target = $region41
    $region40: #{tpu_custom_call.1} parent=1 // pred_region
      %5899 = dma.done [#allocation3], 896
    $region41: #{tpu_custom_call.1} parent=1 // pred_fallthru
      _
    %5900 = vsyncpa [#allocation3], 1

</llo_original>
